<compile_context>
chip_gen: v7x
topology: tpu7x:2x2x1
jax: 0.10.0
libtpu: 0.0.40
codegen_flags: <defaults>
</compile_context>

<pallas_src>
import jax
import jax.numpy as jnp
from jax.experimental import pallas as pl
from jax.experimental.pallas import tpu as pltpu


def _vae_kernel(x_ref,
                we1_ref, be1_ref,
                we2_ref, be2_ref,
                wd1_ref, bd1_ref,
                wd2_ref, bd2_ref,
                o_ref):
    """Fused VAE eval forward for one batch tile (weights VMEM-resident)."""
    x = x_ref[...].astype(jnp.float32)

    # F.normalize(x, dim=-1): x * rsqrt(max(||x||^2, eps)).  Elementwise in f32
    # (v5e has no bf16 VPU/EUP); cast to bf16 only right before each matmul.
    sq = jnp.sum(x * x, axis=-1, keepdims=True)
    h = (x * jax.lax.rsqrt(jnp.maximum(sq, 1e-24))).astype(jnp.bfloat16)

    # Encoder layer 0: Linear + ReLU (bf16 operands, f32 MXU accumulation).
    h = jnp.dot(h, we1_ref[...], preferred_element_type=jnp.float32) + be1_ref[...]
    h = jnp.maximum(h, 0.0).astype(jnp.bfloat16)

    # Encoder layer 1 (mu half only; logvar half dropped host-side).  Eval: z = mu.
    z = jnp.dot(h, we2_ref[...], preferred_element_type=jnp.float32) + be2_ref[...]
    z = z.astype(jnp.bfloat16)

    # Decoder layer 0: Linear + ReLU.
    d = jnp.dot(z, wd1_ref[...], preferred_element_type=jnp.float32) + bd1_ref[...]
    d = jnp.maximum(d, 0.0).astype(jnp.bfloat16)

    # Decoder layer 1: Linear -> logits (f32).
    logits = jnp.dot(d, wd2_ref[...], preferred_element_type=jnp.float32) + bd2_ref[...]

    # Softmax over items (dim=1).  Stage the un-normalized exps through o_ref so
    # the full (block_b, N) f32 `e` is dead before the reduce/scale pass: o_ref
    # is bf16, halving live softmax state and avoiding vreg spills at
    # block_b = 256.  exp stays in f32 (no bf16 EUP on v5e); sums accumulate f32.
    m = jnp.max(logits, axis=1, keepdims=True)
    e = jnp.exp(logits - m)
    o_ref[...] = e.astype(o_ref.dtype)
    staged = o_ref[...]
    denom = jnp.sum(staged.astype(jnp.float32), axis=1, keepdims=True)
    o_ref[...] = (staged.astype(jnp.float32) *
                  pl.reciprocal(denom, approx=True)).astype(o_ref.dtype)


def _auto_block_b(batch):
    """Pick the batch tile per chip generation.

    v5e / v6e have a single TensorCore: one grid step (block_b = B) removes the
    ~0.35us-per-step overhead.  v7x has 2 TCs per chip: keep grid >= 2 so the
    "parallel" dimension feeds both cores.
    """
    kind = ""
    try:
        kind = jax.devices()[0].device_kind.lower()
    except Exception:
        pass
    if "v7" in kind and batch % 2 == 0 and (batch // 2) % 8 == 0:
        return batch // 2
    return batch


def enhanced_vae_forward(x, params, *, latent_dim, block_b=None,
                         out_dtype=jnp.bfloat16):
    """x: (B, num_items), any float dtype (normalized in f32 inside the kernel).

    params: dict with bf16 weights in (in, out) layout and f32 biases (1, out).
    we2/be2 are the full encoder-L1 params; the mu half is sliced host-side so
    the kernel never touches the unused logvar half (eval mode only).
    """
    B, N = x.shape
    if block_b is None:
        block_b = _auto_block_b(B)
    assert B % block_b == 0 and block_b % 8 == 0, "bad batch tiling"

    we1, be1 = params["we1"], params["be1"]
    we2_mu = params["we2"][:, :latent_dim]     # host-side slice: mu half only
    be2_mu = params["be2"][:, :latent_dim]
    wd1, bd1 = params["wd1"], params["bd1"]
    wd2, bd2 = params["wd2"], params["bd2"]

    H = we1.shape[1]
    L = latent_dim

    # Whole-array, VMEM-resident spec (no grid blocking -> no double-buffering).
    resident = pl.BlockSpec(memory_space=pltpu.MemorySpace.VMEM)

    weight_bytes = sum(int(w.size) * w.dtype.itemsize
                       for w in (we1, be1, we2_mu, be2_mu, wd1, bd1, wd2, bd2))
    out_itemsize = jnp.dtype(out_dtype).itemsize
    x_tile_bytes = block_b * N * x.dtype.itemsize
    o_tile_bytes = block_b * N * out_itemsize

    cost = pl.CostEstimate(
        flops=2 * B * (N * H + H * L + L * H + H * N),
        transcendentals=B * N + 2 * B,              # exp + rsqrt + reciprocal
        bytes_accessed=weight_bytes + B * N * (x.dtype.itemsize + out_itemsize),
    )

    # Explicit VMEM budget: resident weights + double-buffered x/out tiles +
    # scratch slack.  v5e's scoped default is only 16 MiB; cap at v7x's 64 MiB.
    vmem_limit = min(weight_bytes + 2 * (x_tile_bytes + o_tile_bytes) + (8 << 20),
                     64 << 20)

    return pl.pallas_call(
        _vae_kernel,
        out_shape=jax.ShapeDtypeStruct((B, N), out_dtype),
        grid_spec=pltpu.PrefetchScalarGridSpec(
            num_scalar_prefetch=0,
            grid=(B // block_b,),
            in_specs=[
                pl.BlockSpec((block_b, N), lambda i: (i, 0)),   # x tile
                resident, resident,                              # enc L0 (W, b)
                resident, resident,                              # enc L1 mu-half
                resident, resident,                              # dec L0
                resident, resident,                              # dec L1
            ],
            out_specs=pl.BlockSpec((block_b, N), lambda i: (i, 0)),
        ),
        compiler_params=pltpu.CompilerParams(
            dimension_semantics=("parallel",),
            vmem_limit_bytes=int(vmem_limit)),
        cost_estimate=cost,
    )(x, we1, be1, we2_mu, be2_mu, wd1, bd1, wd2, bd2)


def init_params(key, num_items, hidden_dim, latent_dim):
    """Deterministic synthetic parameters.

    Weights stored transposed to (in, out) in bf16 (MXU-native); biases f32.
    """
    ks = jax.random.split(key, 8)
    scale = 0.05
    w = lambda k, shp: (scale * jax.random.normal(k, shp, jnp.float32)).astype(jnp.bfloat16)
    b = lambda k, shp: scale * jax.random.normal(k, shp, jnp.float32)
    return {
        # encoder: Linear(num_items, hidden), Linear(hidden, 2*latent)
        "we1": w(ks[0], (num_items, hidden_dim)),
        "be1": b(ks[1], (1, hidden_dim)),
        "we2": w(ks[2], (hidden_dim, 2 * latent_dim)),
        "be2": b(ks[3], (1, 2 * latent_dim)),
        # decoder: Linear(latent, hidden), Linear(hidden, num_items)
        "wd1": w(ks[4], (latent_dim, hidden_dim)),
        "bd1": b(ks[5], (1, hidden_dim)),
        "wd2": w(ks[6], (hidden_dim, num_items)),
        "bd2": b(ks[7], (1, num_items)),
    }


def reference_forward(x, p, latent_dim):
    """Pure-JAX reference: same bf16-matmul / f32-accumulate precision for the
    linear layers, but a full f32 softmax tail (ground truth for the kernel's
    bf16-staged, approx-reciprocal softmax)."""
    mm = lambda a, w: jnp.dot(a.astype(jnp.bfloat16), w,
                              preferred_element_type=jnp.float32)
    xf = x.astype(jnp.float32)
    sq = jnp.sum(xf * xf, axis=-1, keepdims=True)
    h = xf * jax.lax.rsqrt(jnp.maximum(sq, 1e-24))
    h = jnp.maximum(mm(h, p["we1"]) + p["be1"], 0.0)
    mu = mm(h, p["we2"][:, :latent_dim]) + p["be2"][:, :latent_dim]
    out = jnp.maximum(mm(mu, p["wd1"]) + p["bd1"], 0.0)
    out = mm(out, p["wd2"]) + p["bd2"]
    return jax.nn.softmax(out, axis=1)


# TODO(synk): training-mode branch (input dropout, reparameterization noise,
# KL loss) and the demographic=True output slicing are not exercised here;
# this kernel implements the eval, demographic=False forward.

if __name__ == "__main__":
    # enc_dims = [num_items, hidden, latent] ; dec is the mirror.
    NUM_ITEMS = 512
    HIDDEN = 256
    LATENT = 128
    BATCH = 256

    key = jax.random.PRNGKey(0)
    k_param, k_data = jax.random.split(key)

    params = init_params(k_param, NUM_ITEMS, HIDDEN, LATENT)

    # Synthetic non-negative "rating matrix".
    x = jax.random.uniform(k_data, (BATCH, NUM_ITEMS), jnp.float32)

    out = enhanced_vae_forward(x, params, latent_dim=LATENT)
    out = jax.block_until_ready(out)

    ref = reference_forward(x, params, LATENT)
    out_f32 = out.astype(jnp.float32)

    assert out.shape == (BATCH, NUM_ITEMS)
    assert out.dtype == jnp.bfloat16
    # bf16 output + approx reciprocal -> rows sum to 1 to ~1e-3.
    assert jnp.allclose(jnp.sum(out_f32, axis=1), 1.0, atol=4e-3)
    # bf16-staged softmax vs f32 reference softmax -> relaxed relative tolerance.
    assert jnp.allclose(out_f32, ref, rtol=2e-2, atol=2e-5)

    print("KERNEL_OK")
</pallas_src>

<mosaic_0001>
module attributes {stable_mosaic.version = 11 : i64} {
  func.func @_vae_kernel(%arg0: i32, %arg1: memref<256x512xf32, #tpu.memory_space<vmem>>, %arg2: memref<512x256xbf16, #tpu.memory_space<vmem>>, %arg3: memref<1x256xf32, #tpu.memory_space<vmem>>, %arg4: memref<256x128xbf16, #tpu.memory_space<vmem>>, %arg5: memref<1x128xf32, #tpu.memory_space<vmem>>, %arg6: memref<128x256xbf16, #tpu.memory_space<vmem>>, %arg7: memref<1x256xf32, #tpu.memory_space<vmem>>, %arg8: memref<256x512xbf16, #tpu.memory_space<vmem>>, %arg9: memref<1x512xf32, #tpu.memory_space<vmem>>, %arg10: memref<256x512xbf16, #tpu.memory_space<vmem>>) attributes {dimension_semantics = [#tpu.dimension_semantics<parallel>], iteration_bounds = array<i64: 1>, scalar_prefetch = 0 : i64, scratch_operands = 0 : i64, tpu.core_type = #tpu.core_type<tc>, window_params = [{transform_indices = @transform_0, window_bounds = array<i64: 256, 512>}, {pipeline_mode = #tpu.pipeline_mode<synchronous>, transform_indices = @transform_1, window_bounds = array<i64: 512, 256>}, {pipeline_mode = #tpu.pipeline_mode<synchronous>, transform_indices = @transform_2, window_bounds = array<i64: 1, 256>}, {pipeline_mode = #tpu.pipeline_mode<synchronous>, transform_indices = @transform_3, window_bounds = array<i64: 256, 128>}, {pipeline_mode = #tpu.pipeline_mode<synchronous>, transform_indices = @transform_4, window_bounds = array<i64: 1, 128>}, {pipeline_mode = #tpu.pipeline_mode<synchronous>, transform_indices = @transform_5, window_bounds = array<i64: 128, 256>}, {pipeline_mode = #tpu.pipeline_mode<synchronous>, transform_indices = @transform_6, window_bounds = array<i64: 1, 256>}, {pipeline_mode = #tpu.pipeline_mode<synchronous>, transform_indices = @transform_7, window_bounds = array<i64: 256, 512>}, {pipeline_mode = #tpu.pipeline_mode<synchronous>, transform_indices = @transform_8, window_bounds = array<i64: 1, 512>}, {transform_indices = @transform_9, window_bounds = array<i64: 256, 512>}]} {
    %c0 = arith.constant 0 : index
    %c0_0 = arith.constant 0 : index
    %0 = vector.load %arg1[%c0, %c0_0] : memref<256x512xf32, #tpu.memory_space<vmem>>, vector<256x512xf32>
    %1 = arith.mulf %0, %0 : vector<256x512xf32>
    %cst = arith.constant dense<0.000000e+00> : vector<256xf32>
    %2 = vector.multi_reduction <add>, %1, %cst [1] : vector<256x512xf32> to vector<256xf32>
    %3 = vector.shape_cast %2 : vector<256xf32> to vector<256x1xf32>
    %cst_1 = arith.constant 1.000000e-24 : f32
    %4 = vector.broadcast %cst_1 : f32 to vector<256x1xf32>
    %5 = arith.maximumf %3, %4 : vector<256x1xf32>
    %6 = math.rsqrt %5 : vector<256x1xf32>
    %7 = vector.broadcast %6 : vector<256x1xf32> to vector<256x512xf32>
    %8 = arith.mulf %0, %7 : vector<256x512xf32>
    %9 = arith.truncf %8 : vector<256x512xf32> to vector<256x512xbf16>
    %c0_2 = arith.constant 0 : index
    %c0_3 = arith.constant 0 : index
    %10 = vector.load %arg2[%c0_2, %c0_3] : memref<512x256xbf16, #tpu.memory_space<vmem>>, vector<512x256xbf16>
    %cst_4 = arith.constant dense<0.000000e+00> : vector<256x256xf32>
    %11 = tpu.matmul %9, %10, %cst_4 {dimension_numbers = #tpu.dot_dimension_numbers<[1], [0], [0], [1], [0, 0, 1, 1], [], []>} : vector<256x512xbf16>, vector<512x256xbf16>, vector<256x256xf32> -> vector<256x256xf32>
    %c0_5 = arith.constant 0 : index
    %c0_6 = arith.constant 0 : index
    %12 = vector.load %arg3[%c0_5, %c0_6] : memref<1x256xf32, #tpu.memory_space<vmem>>, vector<1x256xf32>
    %13 = vector.broadcast %12 : vector<1x256xf32> to vector<256x256xf32>
    %14 = arith.addf %11, %13 : vector<256x256xf32>
    %cst_7 = arith.constant 0.000000e+00 : f32
    %15 = vector.broadcast %cst_7 : f32 to vector<256x256xf32>
    %16 = arith.maximumf %14, %15 : vector<256x256xf32>
    %17 = arith.truncf %16 : vector<256x256xf32> to vector<256x256xbf16>
    %c0_8 = arith.constant 0 : index
    %c0_9 = arith.constant 0 : index
    %18 = vector.load %arg4[%c0_8, %c0_9] : memref<256x128xbf16, #tpu.memory_space<vmem>>, vector<256x128xbf16>
    %cst_10 = arith.constant dense<0.000000e+00> : vector<256x128xf32>
    %19 = tpu.matmul %17, %18, %cst_10 {dimension_numbers = #tpu.dot_dimension_numbers<[1], [0], [0], [1], [0, 0, 1, 1], [], []>} : vector<256x256xbf16>, vector<256x128xbf16>, vector<256x128xf32> -> vector<256x128xf32>
    %c0_11 = arith.constant 0 : index
    %c0_12 = arith.constant 0 : index
    %20 = vector.load %arg5[%c0_11, %c0_12] : memref<1x128xf32, #tpu.memory_space<vmem>>, vector<1x128xf32>
    %21 = vector.broadcast %20 : vector<1x128xf32> to vector<256x128xf32>
    %22 = arith.addf %19, %21 : vector<256x128xf32>
    %23 = arith.truncf %22 : vector<256x128xf32> to vector<256x128xbf16>
    %c0_13 = arith.constant 0 : index
    %c0_14 = arith.constant 0 : index
    %24 = vector.load %arg6[%c0_13, %c0_14] : memref<128x256xbf16, #tpu.memory_space<vmem>>, vector<128x256xbf16>
    %cst_15 = arith.constant dense<0.000000e+00> : vector<256x256xf32>
    %25 = tpu.matmul %23, %24, %cst_15 {dimension_numbers = #tpu.dot_dimension_numbers<[1], [0], [0], [1], [0, 0, 1, 1], [], []>} : vector<256x128xbf16>, vector<128x256xbf16>, vector<256x256xf32> -> vector<256x256xf32>
    %c0_16 = arith.constant 0 : index
    %c0_17 = arith.constant 0 : index
    %26 = vector.load %arg7[%c0_16, %c0_17] : memref<1x256xf32, #tpu.memory_space<vmem>>, vector<1x256xf32>
    %27 = vector.broadcast %26 : vector<1x256xf32> to vector<256x256xf32>
    %28 = arith.addf %25, %27 : vector<256x256xf32>
    %cst_18 = arith.constant 0.000000e+00 : f32
    %29 = vector.broadcast %cst_18 : f32 to vector<256x256xf32>
    %30 = arith.maximumf %28, %29 : vector<256x256xf32>
    %31 = arith.truncf %30 : vector<256x256xf32> to vector<256x256xbf16>
    %c0_19 = arith.constant 0 : index
    %c0_20 = arith.constant 0 : index
    %32 = vector.load %arg8[%c0_19, %c0_20] : memref<256x512xbf16, #tpu.memory_space<vmem>>, vector<256x512xbf16>
    %cst_21 = arith.constant dense<0.000000e+00> : vector<256x512xf32>
    %33 = tpu.matmul %31, %32, %cst_21 {dimension_numbers = #tpu.dot_dimension_numbers<[1], [0], [0], [1], [0, 0, 1, 1], [], []>} : vector<256x256xbf16>, vector<256x512xbf16>, vector<256x512xf32> -> vector<256x512xf32>
    %c0_22 = arith.constant 0 : index
    %c0_23 = arith.constant 0 : index
    %34 = vector.load %arg9[%c0_22, %c0_23] : memref<1x512xf32, #tpu.memory_space<vmem>>, vector<1x512xf32>
    %35 = vector.broadcast %34 : vector<1x512xf32> to vector<256x512xf32>
    %36 = arith.addf %33, %35 : vector<256x512xf32>
    %cst_24 = arith.constant dense<0xFF800000> : vector<256xf32>
    %37 = vector.multi_reduction <maximumf>, %36, %cst_24 [1] : vector<256x512xf32> to vector<256xf32>
    %38 = vector.shape_cast %37 : vector<256xf32> to vector<256x1xf32>
    %39 = vector.broadcast %38 : vector<256x1xf32> to vector<256x512xf32>
    %40 = arith.subf %36, %39 : vector<256x512xf32>
    %41 = math.exp %40 : vector<256x512xf32>
    %42 = arith.truncf %41 : vector<256x512xf32> to vector<256x512xbf16>
    %c0_25 = arith.constant 0 : index
    %c0_26 = arith.constant 0 : index
    %43 = vector.load %arg10[%c0_25, %c0_26] : memref<256x512xbf16, #tpu.memory_space<vmem>>, vector<256x512xbf16>
    tpu.vector_store %arg10[%c0_25, %c0_26], %42 {strides = array<i32>} : memref<256x512xbf16, #tpu.memory_space<vmem>>, vector<256x512xbf16>,
    %c0_27 = arith.constant 0 : index
    %c0_28 = arith.constant 0 : index
    %44 = vector.load %arg10[%c0_27, %c0_28] : memref<256x512xbf16, #tpu.memory_space<vmem>>, vector<256x512xbf16>
    %45 = arith.extf %44 : vector<256x512xbf16> to vector<256x512xf32>
    %cst_29 = arith.constant dense<0.000000e+00> : vector<256xf32>
    %46 = vector.multi_reduction <add>, %45, %cst_29 [1] : vector<256x512xf32> to vector<256xf32>
    %47 = vector.shape_cast %46 : vector<256xf32> to vector<256x1xf32>
    %48 = arith.extf %44 : vector<256x512xbf16> to vector<256x512xf32>
    %49 = tpu.reciprocal %47 {approx = true} : vector<256x1xf32> -> vector<256x1xf32>
    %50 = vector.broadcast %49 : vector<256x1xf32> to vector<256x512xf32>
    %51 = arith.mulf %48, %50 : vector<256x512xf32>
    %52 = arith.truncf %51 : vector<256x512xf32> to vector<256x512xbf16>
    %c0_30 = arith.constant 0 : index
    %c0_31 = arith.constant 0 : index
    %53 = vector.load %arg10[%c0_30, %c0_31] : memref<256x512xbf16, #tpu.memory_space<vmem>>, vector<256x512xbf16>
    tpu.vector_store %arg10[%c0_30, %c0_31], %52 {strides = array<i32>} : memref<256x512xbf16, #tpu.memory_space<vmem>>, vector<256x512xbf16>,
    return
  }
  func.func @transform_0(%arg0: i32) -> (i32, i32) {
    %c0_i32 = arith.constant 0 : i32
    %c0_i32_0 = arith.constant 0 : i32
    return %arg0, %c0_i32 : i32, i32
  }
  func.func @transform_1(%arg0: i32) -> (i32, i32) {
    %c0_i32 = arith.constant 0 : i32
    %c0_i32_0 = arith.constant 0 : i32
    %c0_i32_1 = arith.constant 0 : i32
    return %c0_i32, %c0_i32_0 : i32, i32
  }
  func.func @transform_2(%arg0: i32) -> (i32, i32) {
    %c0_i32 = arith.constant 0 : i32
    %c0_i32_0 = arith.constant 0 : i32
    %c0_i32_1 = arith.constant 0 : i32
    return %c0_i32, %c0_i32_0 : i32, i32
  }
  func.func @transform_3(%arg0: i32) -> (i32, i32) {
    %c0_i32 = arith.constant 0 : i32
    %c0_i32_0 = arith.constant 0 : i32
    %c0_i32_1 = arith.constant 0 : i32
    return %c0_i32, %c0_i32_0 : i32, i32
  }
  func.func @transform_4(%arg0: i32) -> (i32, i32) {
    %c0_i32 = arith.constant 0 : i32
    %c0_i32_0 = arith.constant 0 : i32
    %c0_i32_1 = arith.constant 0 : i32
    return %c0_i32, %c0_i32_0 : i32, i32
  }
  func.func @transform_5(%arg0: i32) -> (i32, i32) {
    %c0_i32 = arith.constant 0 : i32
    %c0_i32_0 = arith.constant 0 : i32
    %c0_i32_1 = arith.constant 0 : i32
    return %c0_i32, %c0_i32_0 : i32, i32
  }
  func.func @transform_6(%arg0: i32) -> (i32, i32) {
    %c0_i32 = arith.constant 0 : i32
    %c0_i32_0 = arith.constant 0 : i32
    %c0_i32_1 = arith.constant 0 : i32
    return %c0_i32, %c0_i32_0 : i32, i32
  }
  func.func @transform_7(%arg0: i32) -> (i32, i32) {
    %c0_i32 = arith.constant 0 : i32
    %c0_i32_0 = arith.constant 0 : i32
    %c0_i32_1 = arith.constant 0 : i32
    return %c0_i32, %c0_i32_0 : i32, i32
  }
  func.func @transform_8(%arg0: i32) -> (i32, i32) {
    %c0_i32 = arith.constant 0 : i32
    %c0_i32_0 = arith.constant 0 : i32
    %c0_i32_1 = arith.constant 0 : i32
    return %c0_i32, %c0_i32_0 : i32, i32
  }
  func.func @transform_9(%arg0: i32) -> (i32, i32) {
    %c0_i32 = arith.constant 0 : i32
    %c0_i32_0 = arith.constant 0 : i32
    return %arg0, %c0_i32 : i32, i32
  }
}

</mosaic_0001>

<llo_original>
// kernel: tpu_custom_call.1
$region0: #{tpu_custom_call.1}
  #allocation0 [shape = 'u32[]', space=smem, size = 0x4, offset = 0x4, fixed_abs, tag = 'smem constant byte address 0x4 - core index']
  #allocation1 [shape = 'u32[144,128]{1,0:T(1,128)}', space=vmem, size = 0x12000, scoped, tag = 'internal scratch']
  %s0 = inlined_call_operand.hbm [shape: f32[256,512], index: 0, kind: input, shape index: {}]
  %s1 = inlined_call_operand.hbm [shape: bf16[512,256], index: 1, kind: input, shape index: {}]
  %s2 = inlined_call_operand.vmem [shape: f32[1,256], index: 2, kind: input, shape index: {}]
  %s3 = inlined_call_operand.hbm [shape: bf16[256,128], index: 3, kind: input, shape index: {}]
  %s4 = inlined_call_operand.vmem [shape: f32[1,128], index: 4, kind: input, shape index: {}]
  %s5 = inlined_call_operand.hbm [shape: bf16[128,256], index: 5, kind: input, shape index: {}]
  %s6 = inlined_call_operand.vmem [shape: f32[1,256], index: 6, kind: input, shape index: {}]
  %s7 = inlined_call_operand.hbm [shape: bf16[256,512], index: 7, kind: input, shape index: {}]
  %s8 = inlined_call_operand.vmem [shape: f32[1,512], index: 8, kind: input, shape index: {}]
  %s9 = inlined_call_operand.hbm [shape: bf16[256,512], index: 9, kind: output, shape index: {}]
  %s10 = sld [smem:[#allocation0]]
  $region66: #{tpu_custom_call.1} parent=0
    _
  %s12 = ssub.s32 1, %s10
  %s13 = scalar_select 0, %s12, %s10
  $region1: #{tpu_custom_call.1} parent=0
    #allocation2 [shape = 'u8[524288]{0}', space=vmem, size = 0x80000, scoped, tag = 'input window, operand 0, single buffered']
    #allocation3 [shape = 's32[1]{0}', space=sflag, size = 0x4, scoped, tag = 'scoped memory for tpu_custom_call.1']
    #allocation4 [shape = 's32[1]{0}', space=sflag, size = 0x4, scoped, tag = 'scoped memory for tpu_custom_call.1']
    #allocation5 [shape = 'u8[262144]{0}', space=vmem, size = 0x40000, scoped, tag = 'input window, operand 1, single buffered']
    #allocation6 [shape = 's32[1]{0}', space=sflag, size = 0x4, scoped, tag = 'scoped memory for tpu_custom_call.1']
    #allocation7 [shape = 'u8[65536]{0}', space=vmem, size = 0x10000, scoped, tag = 'input window, operand 3, single buffered']
    #allocation8 [shape = 'u8[65536]{0}', space=vmem, size = 0x10000, scoped, tag = 'input window, operand 5, single buffered']
    #allocation9 [shape = 's32[1]{0}', space=sflag, size = 0x4, scoped, tag = 'scoped memory for tpu_custom_call.1']
    #allocation10 [shape = 'u8[262144]{0}', space=vmem, size = 0x40000, scoped, tag = 'input window, operand 7, single buffered']
    #allocation11 [shape = 'u8[262144]{0}', space=vmem, size = 0x40000, scoped, tag = 'output window, operand 0, single buffered']
    %14 = vsyncpa [#allocation3], 0
    %15 = vsyncpa [#allocation6], 0
    %16 = vsyncpa [#allocation9], 0
    %17 = vsyncpa [#allocation4], 0
    // Predicated region
    $region2: #{tpu_custom_call.1} parent=1 // pred_check
      _
    $region3: #{tpu_custom_call.1} parent=1 // pred_check_branch
      %19 = sbr.rel (0) target = $region5
    $region4: #{tpu_custom_call.1} parent=1 // pred_region
      %s21 = ssub.s32 16384, 16384
      %22 = vsyncadd [#allocation3], %s21
      %s23 = sshll.u32 [#allocation2], 4
      %s24 = int_to_ptr.vmem [resolvable:$true] %s23
      %29 = dma.hbm_to_vmem [thread:$0]  %s0, 16384, %s24, [#allocation3], 512, 512, 32
    $region5: #{tpu_custom_call.1} parent=1 // pred_fallthru
      _
    // Predicated region
    $region6: #{tpu_custom_call.1} parent=1 // pred_check
      _
    $region7: #{tpu_custom_call.1} parent=1 // pred_check_branch
      %31 = sbr.rel (0) target = $region9
    $region8: #{tpu_custom_call.1} parent=1 // pred_region
      %s33 = ssub.s32 8192, 8192
      %34 = vsyncadd [#allocation6], %s33
      %s35 = sshll.u32 [#allocation5], 4
      %s36 = int_to_ptr.vmem [resolvable:$true] %s35
      %41 = dma.hbm_to_vmem [thread:$0]  %s1, 8192, %s36, [#allocation6], 128, 128, 8
    $region9: #{tpu_custom_call.1} parent=1 // pred_fallthru
      _
    // Predicated region
    $region10: #{tpu_custom_call.1} parent=1 // pred_check
      _
    $region11: #{tpu_custom_call.1} parent=1 // pred_check_branch
      %43 = sbr.rel (0) target = $region13
    $region12: #{tpu_custom_call.1} parent=1 // pred_region
      _
    $region13: #{tpu_custom_call.1} parent=1 // pred_fallthru
      _
    // Predicated region
    $region14: #{tpu_custom_call.1} parent=1 // pred_check
      _
    $region15: #{tpu_custom_call.1} parent=1 // pred_check_branch
      %45 = sbr.rel (0) target = $region17
    $region16: #{tpu_custom_call.1} parent=1 // pred_region
      %s47 = ssub.s32 2048, 2048
      %48 = vsyncadd [#allocation6], %s47
      %s49 = sshll.u32 [#allocation7], 4
      %s50 = int_to_ptr.vmem [resolvable:$true] %s49
      %55 = dma.hbm_to_vmem [thread:$0]  %s3, 2048, %s50, [#allocation6], 64, 64, 4
    $region17: #{tpu_custom_call.1} parent=1 // pred_fallthru
      _
    // Predicated region
    $region18: #{tpu_custom_call.1} parent=1 // pred_check
      _
    $region19: #{tpu_custom_call.1} parent=1 // pred_check_branch
      %57 = sbr.rel (0) target = $region21
    $region20: #{tpu_custom_call.1} parent=1 // pred_region
      _
    $region21: #{tpu_custom_call.1} parent=1 // pred_fallthru
      _
    // Predicated region
    $region22: #{tpu_custom_call.1} parent=1 // pred_check
      _
    $region23: #{tpu_custom_call.1} parent=1 // pred_check_branch
      %59 = sbr.rel (0) target = $region25
    $region24: #{tpu_custom_call.1} parent=1 // pred_region
      %s61 = ssub.s32 2048, 2048
      %62 = vsyncadd [#allocation9], %s61
      %s63 = sshll.u32 [#allocation8], 4
      %s64 = int_to_ptr.vmem [resolvable:$true] %s63
      %69 = dma.hbm_to_vmem [thread:$0]  %s5, 2048, %s64, [#allocation9], 128, 128, 8
    $region25: #{tpu_custom_call.1} parent=1 // pred_fallthru
      _
    // Predicated region
    $region26: #{tpu_custom_call.1} parent=1 // pred_check
      _
    $region27: #{tpu_custom_call.1} parent=1 // pred_check_branch
      %71 = sbr.rel (0) target = $region29
    $region28: #{tpu_custom_call.1} parent=1 // pred_region
      _
    $region29: #{tpu_custom_call.1} parent=1 // pred_fallthru
      _
    // Predicated region
    $region30: #{tpu_custom_call.1} parent=1 // pred_check
      _
    $region31: #{tpu_custom_call.1} parent=1 // pred_check_branch
      %73 = sbr.rel (0) target = $region33
    $region32: #{tpu_custom_call.1} parent=1 // pred_region
      %s75 = ssub.s32 8192, 8192
      %76 = vsyncadd [#allocation9], %s75
      %s77 = sshll.u32 [#allocation10], 4
      %s78 = int_to_ptr.vmem [resolvable:$true] %s77
      %83 = dma.hbm_to_vmem [thread:$0]  %s7, 8192, %s78, [#allocation9], 256, 256, 16
    $region33: #{tpu_custom_call.1} parent=1 // pred_fallthru
      _
    // Predicated region
    $region34: #{tpu_custom_call.1} parent=1 // pred_check
      _
    $region35: #{tpu_custom_call.1} parent=1 // pred_check_branch
      %85 = sbr.rel (0) target = $region37
    $region36: #{tpu_custom_call.1} parent=1 // pred_region
      _
    $region37: #{tpu_custom_call.1} parent=1 // pred_fallthru
      _
    // Predicated region
    $region38: #{tpu_custom_call.1} parent=1 // pred_check
      _
    $region39: #{tpu_custom_call.1} parent=1 // pred_check_branch
      %87 = sbr.rel (0) target = $region41
    $region40: #{tpu_custom_call.1} parent=1 // pred_region
      %88 = dma.done [#allocation3], 16384
    $region41: #{tpu_custom_call.1} parent=1 // pred_fallthru
      _
    // Predicated region
    $region42: #{tpu_custom_call.1} parent=1 // pred_check
      _
    $region43: #{tpu_custom_call.1} parent=1 // pred_check_branch
      %90 = sbr.rel (0) target = $region45
    $region44: #{tpu_custom_call.1} parent=1 // pred_region
      %91 = dma.done [#allocation6], 8192
    $region45: #{tpu_custom_call.1} parent=1 // pred_fallthru
      _
    // Predicated region
    $region46: #{tpu_custom_call.1} parent=1 // pred_check
      _
    $region47: #{tpu_custom_call.1} parent=1 // pred_check_branch
      %93 = sbr.rel (0) target = $region49
    $region48: #{tpu_custom_call.1} parent=1 // pred_region
      %94 = dma.done [#allocation6], 2048
    $region49: #{tpu_custom_call.1} parent=1 // pred_fallthru
      _
    // Predicated region
    $region50: #{tpu_custom_call.1} parent=1 // pred_check
      _
    $region51: #{tpu_custom_call.1} parent=1 // pred_check_branch
      %96 = sbr.rel (0) target = $region53
    $region52: #{tpu_custom_call.1} parent=1 // pred_region
      %97 = dma.done [#allocation9], 2048
    $region53: #{tpu_custom_call.1} parent=1 // pred_fallthru
      _
    // Predicated region
    $region54: #{tpu_custom_call.1} parent=1 // pred_check
      _
    $region55: #{tpu_custom_call.1} parent=1 // pred_check_branch
      %99 = sbr.rel (0) target = $region57
    $region56: #{tpu_custom_call.1} parent=1 // pred_region
      %100 = dma.done [#allocation9], 8192
    $region57: #{tpu_custom_call.1} parent=1 // pred_fallthru
      _
    %v102 = vld [vmem:[#allocation2] sm:$0xff]
    %v103 = vld [vmem:[#allocation2 + $0x8] sm:$0xff]
    %v104 = vld [vmem:[#allocation2 + $0x10] sm:$0xff]
    %v105 = vld [vmem:[#allocation2 + $0x18] sm:$0xff]
    %v106 = vld [vmem:[#allocation2 + $0x20] sm:$0xff]
    %v107 = vld [vmem:[#allocation2 + $0x28] sm:$0xff]
    %v108 = vld [vmem:[#allocation2 + $0x30] sm:$0xff]
    %v109 = vld [vmem:[#allocation2 + $0x38] sm:$0xff]
    %v110 = vld [vmem:[#allocation2 + $0x40] sm:$0xff]
    %v111 = vld [vmem:[#allocation2 + $0x48] sm:$0xff]
    %v112 = vld [vmem:[#allocation2 + $0x50] sm:$0xff]
    %v113 = vld [vmem:[#allocation2 + $0x58] sm:$0xff]
    %v114 = vld [vmem:[#allocation2 + $0x60] sm:$0xff]
    %v115 = vld [vmem:[#allocation2 + $0x68] sm:$0xff]
    %v116 = vld [vmem:[#allocation2 + $0x70] sm:$0xff]
    %v117 = vld [vmem:[#allocation2 + $0x78] sm:$0xff]
    %v118 = vld [vmem:[#allocation2 + $0x80] sm:$0xff]
    %v119 = vld [vmem:[#allocation2 + $0x88] sm:$0xff]
    %v120 = vld [vmem:[#allocation2 + $0x90] sm:$0xff]
    %v121 = vld [vmem:[#allocation2 + $0x98] sm:$0xff]
    %v122 = vld [vmem:[#allocation2 + $0xa0] sm:$0xff]
    %v123 = vld [vmem:[#allocation2 + $0xa8] sm:$0xff]
    %v124 = vld [vmem:[#allocation2 + $0xb0] sm:$0xff]
    %v125 = vld [vmem:[#allocation2 + $0xb8] sm:$0xff]
    %v126 = vld [vmem:[#allocation2 + $0xc0] sm:$0xff]
    %v127 = vld [vmem:[#allocation2 + $0xc8] sm:$0xff]
    %v128 = vld [vmem:[#allocation2 + $0xd0] sm:$0xff]
    %v129 = vld [vmem:[#allocation2 + $0xd8] sm:$0xff]
    %v130 = vld [vmem:[#allocation2 + $0xe0] sm:$0xff]
    %v131 = vld [vmem:[#allocation2 + $0xe8] sm:$0xff]
    %v132 = vld [vmem:[#allocation2 + $0xf0] sm:$0xff]
    %v133 = vld [vmem:[#allocation2 + $0xf8] sm:$0xff]
    %v134 = vld [vmem:[#allocation2 + $0x100] sm:$0xff]
    %v135 = vld [vmem:[#allocation2 + $0x108] sm:$0xff]
    %v136 = vld [vmem:[#allocation2 + $0x110] sm:$0xff]
    %v137 = vld [vmem:[#allocation2 + $0x118] sm:$0xff]
    %v138 = vld [vmem:[#allocation2 + $0x120] sm:$0xff]
    %v139 = vld [vmem:[#allocation2 + $0x128] sm:$0xff]
    %v140 = vld [vmem:[#allocation2 + $0x130] sm:$0xff]
    %v141 = vld [vmem:[#allocation2 + $0x138] sm:$0xff]
    %v142 = vld [vmem:[#allocation2 + $0x140] sm:$0xff]
    %v143 = vld [vmem:[#allocation2 + $0x148] sm:$0xff]
    %v144 = vld [vmem:[#allocation2 + $0x150] sm:$0xff]
    %v145 = vld [vmem:[#allocation2 + $0x158] sm:$0xff]
    %v146 = vld [vmem:[#allocation2 + $0x160] sm:$0xff]
    %v147 = vld [vmem:[#allocation2 + $0x168] sm:$0xff]
    %v148 = vld [vmem:[#allocation2 + $0x170] sm:$0xff]
    %v149 = vld [vmem:[#allocation2 + $0x178] sm:$0xff]
    %v150 = vld [vmem:[#allocation2 + $0x180] sm:$0xff]
    %v151 = vld [vmem:[#allocation2 + $0x188] sm:$0xff]
    %v152 = vld [vmem:[#allocation2 + $0x190] sm:$0xff]
    %v153 = vld [vmem:[#allocation2 + $0x198] sm:$0xff]
    %v154 = vld [vmem:[#allocation2 + $0x1a0] sm:$0xff]
    %v155 = vld [vmem:[#allocation2 + $0x1a8] sm:$0xff]
    %v156 = vld [vmem:[#allocation2 + $0x1b0] sm:$0xff]
    %v157 = vld [vmem:[#allocation2 + $0x1b8] sm:$0xff]
    %v158 = vld [vmem:[#allocation2 + $0x1c0] sm:$0xff]
    %v159 = vld [vmem:[#allocation2 + $0x1c8] sm:$0xff]
    %v160 = vld [vmem:[#allocation2 + $0x1d0] sm:$0xff]
    %v161 = vld [vmem:[#allocation2 + $0x1d8] sm:$0xff]
    %v162 = vld [vmem:[#allocation2 + $0x1e0] sm:$0xff]
    %v163 = vld [vmem:[#allocation2 + $0x1e8] sm:$0xff]
    %v164 = vld [vmem:[#allocation2 + $0x1f0] sm:$0xff]
    %v165 = vld [vmem:[#allocation2 + $0x1f8] sm:$0xff]
    %v166 = vld [vmem:[#allocation2 + $0x200] sm:$0xff]
    %v167 = vld [vmem:[#allocation2 + $0x208] sm:$0xff]
    %v168 = vld [vmem:[#allocation2 + $0x210] sm:$0xff]
    %v169 = vld [vmem:[#allocation2 + $0x218] sm:$0xff]
    %v170 = vld [vmem:[#allocation2 + $0x220] sm:$0xff]
    %v171 = vld [vmem:[#allocation2 + $0x228] sm:$0xff]
    %v172 = vld [vmem:[#allocation2 + $0x230] sm:$0xff]
    %v173 = vld [vmem:[#allocation2 + $0x238] sm:$0xff]
    %v174 = vld [vmem:[#allocation2 + $0x240] sm:$0xff]
    %v175 = vld [vmem:[#allocation2 + $0x248] sm:$0xff]
    %v176 = vld [vmem:[#allocation2 + $0x250] sm:$0xff]
    %v177 = vld [vmem:[#allocation2 + $0x258] sm:$0xff]
    %v178 = vld [vmem:[#allocation2 + $0x260] sm:$0xff]
    %v179 = vld [vmem:[#allocation2 + $0x268] sm:$0xff]
    %v180 = vld [vmem:[#allocation2 + $0x270] sm:$0xff]
    %v181 = vld [vmem:[#allocation2 + $0x278] sm:$0xff]
    %v182 = vld [vmem:[#allocation2 + $0x280] sm:$0xff]
    %v183 = vld [vmem:[#allocation2 + $0x288] sm:$0xff]
    %v184 = vld [vmem:[#allocation2 + $0x290] sm:$0xff]
    %v185 = vld [vmem:[#allocation2 + $0x298] sm:$0xff]
    %v186 = vld [vmem:[#allocation2 + $0x2a0] sm:$0xff]
    %v187 = vld [vmem:[#allocation2 + $0x2a8] sm:$0xff]
    %v188 = vld [vmem:[#allocation2 + $0x2b0] sm:$0xff]
    %v189 = vld [vmem:[#allocation2 + $0x2b8] sm:$0xff]
    %v190 = vld [vmem:[#allocation2 + $0x2c0] sm:$0xff]
    %v191 = vld [vmem:[#allocation2 + $0x2c8] sm:$0xff]
    %v192 = vld [vmem:[#allocation2 + $0x2d0] sm:$0xff]
    %v193 = vld [vmem:[#allocation2 + $0x2d8] sm:$0xff]
    %v194 = vld [vmem:[#allocation2 + $0x2e0] sm:$0xff]
    %v195 = vld [vmem:[#allocation2 + $0x2e8] sm:$0xff]
    %v196 = vld [vmem:[#allocation2 + $0x2f0] sm:$0xff]
    %v197 = vld [vmem:[#allocation2 + $0x2f8] sm:$0xff]
    %v198 = vld [vmem:[#allocation2 + $0x300] sm:$0xff]
    %v199 = vld [vmem:[#allocation2 + $0x308] sm:$0xff]
    %v200 = vld [vmem:[#allocation2 + $0x310] sm:$0xff]
    %v201 = vld [vmem:[#allocation2 + $0x318] sm:$0xff]
    %v202 = vld [vmem:[#allocation2 + $0x320] sm:$0xff]
    %v203 = vld [vmem:[#allocation2 + $0x328] sm:$0xff]
    %v204 = vld [vmem:[#allocation2 + $0x330] sm:$0xff]
    %v205 = vld [vmem:[#allocation2 + $0x338] sm:$0xff]
    %v206 = vld [vmem:[#allocation2 + $0x340] sm:$0xff]
    %v207 = vld [vmem:[#allocation2 + $0x348] sm:$0xff]
    %v208 = vld [vmem:[#allocation2 + $0x350] sm:$0xff]
    %v209 = vld [vmem:[#allocation2 + $0x358] sm:$0xff]
    %v210 = vld [vmem:[#allocation2 + $0x360] sm:$0xff]
    %v211 = vld [vmem:[#allocation2 + $0x368] sm:$0xff]
    %v212 = vld [vmem:[#allocation2 + $0x370] sm:$0xff]
    %v213 = vld [vmem:[#allocation2 + $0x378] sm:$0xff]
    %v214 = vld [vmem:[#allocation2 + $0x380] sm:$0xff]
    %v215 = vld [vmem:[#allocation2 + $0x388] sm:$0xff]
    %v216 = vld [vmem:[#allocation2 + $0x390] sm:$0xff]
    %v217 = vld [vmem:[#allocation2 + $0x398] sm:$0xff]
    %v218 = vld [vmem:[#allocation2 + $0x3a0] sm:$0xff]
    %v219 = vld [vmem:[#allocation2 + $0x3a8] sm:$0xff]
    %v220 = vld [vmem:[#allocation2 + $0x3b0] sm:$0xff]
    %v221 = vld [vmem:[#allocation2 + $0x3b8] sm:$0xff]
    %v222 = vld [vmem:[#allocation2 + $0x3c0] sm:$0xff]
    %v223 = vld [vmem:[#allocation2 + $0x3c8] sm:$0xff]
    %v224 = vld [vmem:[#allocation2 + $0x3d0] sm:$0xff]
    %v225 = vld [vmem:[#allocation2 + $0x3d8] sm:$0xff]
    %v226 = vld [vmem:[#allocation2 + $0x3e0] sm:$0xff]
    %v227 = vld [vmem:[#allocation2 + $0x3e8] sm:$0xff]
    %v228 = vld [vmem:[#allocation2 + $0x3f0] sm:$0xff]
    %v229 = vld [vmem:[#allocation2 + $0x3f8] sm:$0xff]
    %v230 = vmul.f32 %v102, %v102
    %v231 = vmul.f32 %v103, %v103
    %v232 = vmul.f32 %v104, %v104
    %v233 = vmul.f32 %v105, %v105
    %v234 = vmul.f32 %v106, %v106
    %v235 = vmul.f32 %v107, %v107
    %v236 = vmul.f32 %v108, %v108
    %v237 = vmul.f32 %v109, %v109
    %v238 = vmul.f32 %v110, %v110
    %v239 = vmul.f32 %v111, %v111
    %v240 = vmul.f32 %v112, %v112
    %v241 = vmul.f32 %v113, %v113
    %v242 = vmul.f32 %v114, %v114
    %v243 = vmul.f32 %v115, %v115
    %v244 = vmul.f32 %v116, %v116
    %v245 = vmul.f32 %v117, %v117
    %v246 = vmul.f32 %v118, %v118
    %v247 = vmul.f32 %v119, %v119
    %v248 = vmul.f32 %v120, %v120
    %v249 = vmul.f32 %v121, %v121
    %v250 = vmul.f32 %v122, %v122
    %v251 = vmul.f32 %v123, %v123
    %v252 = vmul.f32 %v124, %v124
    %v253 = vmul.f32 %v125, %v125
    %v254 = vmul.f32 %v126, %v126
    %v255 = vmul.f32 %v127, %v127
    %v256 = vmul.f32 %v128, %v128
    %v257 = vmul.f32 %v129, %v129
    %v258 = vmul.f32 %v130, %v130
    %v259 = vmul.f32 %v131, %v131
    %v260 = vmul.f32 %v132, %v132
    %v261 = vmul.f32 %v133, %v133
    %v262 = vmul.f32 %v134, %v134
    %v263 = vmul.f32 %v135, %v135
    %v264 = vmul.f32 %v136, %v136
    %v265 = vmul.f32 %v137, %v137
    %v266 = vmul.f32 %v138, %v138
    %v267 = vmul.f32 %v139, %v139
    %v268 = vmul.f32 %v140, %v140
    %v269 = vmul.f32 %v141, %v141
    %v270 = vmul.f32 %v142, %v142
    %v271 = vmul.f32 %v143, %v143
    %v272 = vmul.f32 %v144, %v144
    %v273 = vmul.f32 %v145, %v145
    %v274 = vmul.f32 %v146, %v146
    %v275 = vmul.f32 %v147, %v147
    %v276 = vmul.f32 %v148, %v148
    %v277 = vmul.f32 %v149, %v149
    %v278 = vmul.f32 %v150, %v150
    %v279 = vmul.f32 %v151, %v151
    %v280 = vmul.f32 %v152, %v152
    %v281 = vmul.f32 %v153, %v153
    %v282 = vmul.f32 %v154, %v154
    %v283 = vmul.f32 %v155, %v155
    %v284 = vmul.f32 %v156, %v156
    %v285 = vmul.f32 %v157, %v157
    %v286 = vmul.f32 %v158, %v158
    %v287 = vmul.f32 %v159, %v159
    %v288 = vmul.f32 %v160, %v160
    %v289 = vmul.f32 %v161, %v161
    %v290 = vmul.f32 %v162, %v162
    %v291 = vmul.f32 %v163, %v163
    %v292 = vmul.f32 %v164, %v164
    %v293 = vmul.f32 %v165, %v165
    %v294 = vmul.f32 %v166, %v166
    %v295 = vmul.f32 %v167, %v167
    %v296 = vmul.f32 %v168, %v168
    %v297 = vmul.f32 %v169, %v169
    %v298 = vmul.f32 %v170, %v170
    %v299 = vmul.f32 %v171, %v171
    %v300 = vmul.f32 %v172, %v172
    %v301 = vmul.f32 %v173, %v173
    %v302 = vmul.f32 %v174, %v174
    %v303 = vmul.f32 %v175, %v175
    %v304 = vmul.f32 %v176, %v176
    %v305 = vmul.f32 %v177, %v177
    %v306 = vmul.f32 %v178, %v178
    %v307 = vmul.f32 %v179, %v179
    %v308 = vmul.f32 %v180, %v180
    %v309 = vmul.f32 %v181, %v181
    %v310 = vmul.f32 %v182, %v182
    %v311 = vmul.f32 %v183, %v183
    %v312 = vmul.f32 %v184, %v184
    %v313 = vmul.f32 %v185, %v185
    %v314 = vmul.f32 %v186, %v186
    %v315 = vmul.f32 %v187, %v187
    %v316 = vmul.f32 %v188, %v188
    %v317 = vmul.f32 %v189, %v189
    %v318 = vmul.f32 %v190, %v190
    %v319 = vmul.f32 %v191, %v191
    %v320 = vmul.f32 %v192, %v192
    %v321 = vmul.f32 %v193, %v193
    %v322 = vmul.f32 %v194, %v194
    %v323 = vmul.f32 %v195, %v195
    %v324 = vmul.f32 %v196, %v196
    %v325 = vmul.f32 %v197, %v197
    %v326 = vmul.f32 %v198, %v198
    %v327 = vmul.f32 %v199, %v199
    %v328 = vmul.f32 %v200, %v200
    %v329 = vmul.f32 %v201, %v201
    %v330 = vmul.f32 %v202, %v202
    %v331 = vmul.f32 %v203, %v203
    %v332 = vmul.f32 %v204, %v204
    %v333 = vmul.f32 %v205, %v205
    %v334 = vmul.f32 %v206, %v206
    %v335 = vmul.f32 %v207, %v207
    %v336 = vmul.f32 %v208, %v208
    %v337 = vmul.f32 %v209, %v209
    %v338 = vmul.f32 %v210, %v210
    %v339 = vmul.f32 %v211, %v211
    %v340 = vmul.f32 %v212, %v212
    %v341 = vmul.f32 %v213, %v213
    %v342 = vmul.f32 %v214, %v214
    %v343 = vmul.f32 %v215, %v215
    %v344 = vmul.f32 %v216, %v216
    %v345 = vmul.f32 %v217, %v217
    %v346 = vmul.f32 %v218, %v218
    %v347 = vmul.f32 %v219, %v219
    %v348 = vmul.f32 %v220, %v220
    %v349 = vmul.f32 %v221, %v221
    %v350 = vmul.f32 %v222, %v222
    %v351 = vmul.f32 %v223, %v223
    %v352 = vmul.f32 %v224, %v224
    %v353 = vmul.f32 %v225, %v225
    %v354 = vmul.f32 %v226, %v226
    %v355 = vmul.f32 %v227, %v227
    %v356 = vmul.f32 %v228, %v228
    %v357 = vmul.f32 %v229, %v229
    %v358 = vadd.f32 %v230, %v231
    %v359 = vadd.f32 %v358, %v232
    %v360 = vadd.f32 %v359, %v233
    %361 = vadd.xlane.f32.xlu0 %v360
    %v362 = vpop.xlane.xlu0 %361
    %v363 = vadd.f32 %v234, %v235
    %v364 = vadd.f32 %v363, %v236
    %v365 = vadd.f32 %v364, %v237
    %366 = vadd.xlane.f32.xlu0 %v365
    %v367 = vpop.xlane.xlu0 %366
    %v368 = vadd.f32 %v238, %v239
    %v369 = vadd.f32 %v368, %v240
    %v370 = vadd.f32 %v369, %v241
    %371 = vadd.xlane.f32.xlu0 %v370
    %v372 = vpop.xlane.xlu0 %371
    %v373 = vadd.f32 %v242, %v243
    %v374 = vadd.f32 %v373, %v244
    %v375 = vadd.f32 %v374, %v245
    %376 = vadd.xlane.f32.xlu0 %v375
    %v377 = vpop.xlane.xlu0 %376
    %v378 = vadd.f32 %v246, %v247
    %v379 = vadd.f32 %v378, %v248
    %v380 = vadd.f32 %v379, %v249
    %381 = vadd.xlane.f32.xlu0 %v380
    %v382 = vpop.xlane.xlu0 %381
    %v383 = vadd.f32 %v250, %v251
    %v384 = vadd.f32 %v383, %v252
    %v385 = vadd.f32 %v384, %v253
    %386 = vadd.xlane.f32.xlu0 %v385
    %v387 = vpop.xlane.xlu0 %386
    %v388 = vadd.f32 %v254, %v255
    %v389 = vadd.f32 %v388, %v256
    %v390 = vadd.f32 %v389, %v257
    %391 = vadd.xlane.f32.xlu0 %v390
    %v392 = vpop.xlane.xlu0 %391
    %v393 = vadd.f32 %v258, %v259
    %v394 = vadd.f32 %v393, %v260
    %v395 = vadd.f32 %v394, %v261
    %396 = vadd.xlane.f32.xlu0 %v395
    %v397 = vpop.xlane.xlu0 %396
    %v398 = vadd.f32 %v262, %v263
    %v399 = vadd.f32 %v398, %v264
    %v400 = vadd.f32 %v399, %v265
    %401 = vadd.xlane.f32.xlu0 %v400
    %v402 = vpop.xlane.xlu0 %401
    %v403 = vadd.f32 %v266, %v267
    %v404 = vadd.f32 %v403, %v268
    %v405 = vadd.f32 %v404, %v269
    %406 = vadd.xlane.f32.xlu0 %v405
    %v407 = vpop.xlane.xlu0 %406
    %v408 = vadd.f32 %v270, %v271
    %v409 = vadd.f32 %v408, %v272
    %v410 = vadd.f32 %v409, %v273
    %411 = vadd.xlane.f32.xlu0 %v410
    %v412 = vpop.xlane.xlu0 %411
    %v413 = vadd.f32 %v274, %v275
    %v414 = vadd.f32 %v413, %v276
    %v415 = vadd.f32 %v414, %v277
    %416 = vadd.xlane.f32.xlu0 %v415
    %v417 = vpop.xlane.xlu0 %416
    %v418 = vadd.f32 %v278, %v279
    %v419 = vadd.f32 %v418, %v280
    %v420 = vadd.f32 %v419, %v281
    %421 = vadd.xlane.f32.xlu0 %v420
    %v422 = vpop.xlane.xlu0 %421
    %v423 = vadd.f32 %v282, %v283
    %v424 = vadd.f32 %v423, %v284
    %v425 = vadd.f32 %v424, %v285
    %426 = vadd.xlane.f32.xlu0 %v425
    %v427 = vpop.xlane.xlu0 %426
    %v428 = vadd.f32 %v286, %v287
    %v429 = vadd.f32 %v428, %v288
    %v430 = vadd.f32 %v429, %v289
    %431 = vadd.xlane.f32.xlu0 %v430
    %v432 = vpop.xlane.xlu0 %431
    %v433 = vadd.f32 %v290, %v291
    %v434 = vadd.f32 %v433, %v292
    %v435 = vadd.f32 %v434, %v293
    %436 = vadd.xlane.f32.xlu0 %v435
    %v437 = vpop.xlane.xlu0 %436
    %v438 = vadd.f32 %v294, %v295
    %v439 = vadd.f32 %v438, %v296
    %v440 = vadd.f32 %v439, %v297
    %441 = vadd.xlane.f32.xlu0 %v440
    %v442 = vpop.xlane.xlu0 %441
    %v443 = vadd.f32 %v298, %v299
    %v444 = vadd.f32 %v443, %v300
    %v445 = vadd.f32 %v444, %v301
    %446 = vadd.xlane.f32.xlu0 %v445
    %v447 = vpop.xlane.xlu0 %446
    %v448 = vadd.f32 %v302, %v303
    %v449 = vadd.f32 %v448, %v304
    %v450 = vadd.f32 %v449, %v305
    %451 = vadd.xlane.f32.xlu0 %v450
    %v452 = vpop.xlane.xlu0 %451
    %v453 = vadd.f32 %v306, %v307
    %v454 = vadd.f32 %v453, %v308
    %v455 = vadd.f32 %v454, %v309
    %456 = vadd.xlane.f32.xlu0 %v455
    %v457 = vpop.xlane.xlu0 %456
    %v458 = vadd.f32 %v310, %v311
    %v459 = vadd.f32 %v458, %v312
    %v460 = vadd.f32 %v459, %v313
    %461 = vadd.xlane.f32.xlu0 %v460
    %v462 = vpop.xlane.xlu0 %461
    %v463 = vadd.f32 %v314, %v315
    %v464 = vadd.f32 %v463, %v316
    %v465 = vadd.f32 %v464, %v317
    %466 = vadd.xlane.f32.xlu0 %v465
    %v467 = vpop.xlane.xlu0 %466
    %v468 = vadd.f32 %v318, %v319
    %v469 = vadd.f32 %v468, %v320
    %v470 = vadd.f32 %v469, %v321
    %471 = vadd.xlane.f32.xlu0 %v470
    %v472 = vpop.xlane.xlu0 %471
    %v473 = vadd.f32 %v322, %v323
    %v474 = vadd.f32 %v473, %v324
    %v475 = vadd.f32 %v474, %v325
    %476 = vadd.xlane.f32.xlu0 %v475
    %v477 = vpop.xlane.xlu0 %476
    %v478 = vadd.f32 %v326, %v327
    %v479 = vadd.f32 %v478, %v328
    %v480 = vadd.f32 %v479, %v329
    %481 = vadd.xlane.f32.xlu0 %v480
    %v482 = vpop.xlane.xlu0 %481
    %v483 = vadd.f32 %v330, %v331
    %v484 = vadd.f32 %v483, %v332
    %v485 = vadd.f32 %v484, %v333
    %486 = vadd.xlane.f32.xlu0 %v485
    %v487 = vpop.xlane.xlu0 %486
    %v488 = vadd.f32 %v334, %v335
    %v489 = vadd.f32 %v488, %v336
    %v490 = vadd.f32 %v489, %v337
    %491 = vadd.xlane.f32.xlu0 %v490
    %v492 = vpop.xlane.xlu0 %491
    %v493 = vadd.f32 %v338, %v339
    %v494 = vadd.f32 %v493, %v340
    %v495 = vadd.f32 %v494, %v341
    %496 = vadd.xlane.f32.xlu0 %v495
    %v497 = vpop.xlane.xlu0 %496
    %v498 = vadd.f32 %v342, %v343
    %v499 = vadd.f32 %v498, %v344
    %v500 = vadd.f32 %v499, %v345
    %501 = vadd.xlane.f32.xlu0 %v500
    %v502 = vpop.xlane.xlu0 %501
    %v503 = vadd.f32 %v346, %v347
    %v504 = vadd.f32 %v503, %v348
    %v505 = vadd.f32 %v504, %v349
    %506 = vadd.xlane.f32.xlu0 %v505
    %v507 = vpop.xlane.xlu0 %506
    %v508 = vadd.f32 %v350, %v351
    %v509 = vadd.f32 %v508, %v352
    %v510 = vadd.f32 %v509, %v353
    %511 = vadd.xlane.f32.xlu0 %v510
    %v512 = vpop.xlane.xlu0 %511
    %v513 = vadd.f32 %v354, %v355
    %v514 = vadd.f32 %v513, %v356
    %v515 = vadd.f32 %v514, %v357
    %516 = vadd.xlane.f32.xlu0 %v515
    %v517 = vpop.xlane.xlu0 %516
    %v518 = vmax.f32 %v362, 1e-24
    %v519 = vmax.f32 %v367, 1e-24
    %v520 = vmax.f32 %v372, 1e-24
    %v521 = vmax.f32 %v377, 1e-24
    %v522 = vmax.f32 %v382, 1e-24
    %v523 = vmax.f32 %v387, 1e-24
    %v524 = vmax.f32 %v392, 1e-24
    %v525 = vmax.f32 %v397, 1e-24
    %v526 = vmax.f32 %v402, 1e-24
    %v527 = vmax.f32 %v407, 1e-24
    %v528 = vmax.f32 %v412, 1e-24
    %v529 = vmax.f32 %v417, 1e-24
    %v530 = vmax.f32 %v422, 1e-24
    %v531 = vmax.f32 %v427, 1e-24
    %v532 = vmax.f32 %v432, 1e-24
    %v533 = vmax.f32 %v437, 1e-24
    %v534 = vmax.f32 %v442, 1e-24
    %v535 = vmax.f32 %v447, 1e-24
    %v536 = vmax.f32 %v452, 1e-24
    %v537 = vmax.f32 %v457, 1e-24
    %v538 = vmax.f32 %v462, 1e-24
    %v539 = vmax.f32 %v467, 1e-24
    %v540 = vmax.f32 %v472, 1e-24
    %v541 = vmax.f32 %v477, 1e-24
    %v542 = vmax.f32 %v482, 1e-24
    %v543 = vmax.f32 %v487, 1e-24
    %v544 = vmax.f32 %v492, 1e-24
    %v545 = vmax.f32 %v497, 1e-24
    %v546 = vmax.f32 %v502, 1e-24
    %v547 = vmax.f32 %v507, 1e-24
    %v548 = vmax.f32 %v512, 1e-24
    %v549 = vmax.f32 %v517, 1e-24
    %v550 = vrsqrt.pop %v518
    %v551 = vrsqrt.pop %v519
    %v552 = vrsqrt.pop %v520
    %v553 = vrsqrt.pop %v521
    %v554 = vrsqrt.pop %v522
    %v555 = vrsqrt.pop %v523
    %v556 = vrsqrt.pop %v524
    %v557 = vrsqrt.pop %v525
    %v558 = vrsqrt.pop %v526
    %v559 = vrsqrt.pop %v527
    %v560 = vrsqrt.pop %v528
    %v561 = vrsqrt.pop %v529
    %v562 = vrsqrt.pop %v530
    %v563 = vrsqrt.pop %v531
    %v564 = vrsqrt.pop %v532
    %v565 = vrsqrt.pop %v533
    %v566 = vrsqrt.pop %v534
    %v567 = vrsqrt.pop %v535
    %v568 = vrsqrt.pop %v536
    %v569 = vrsqrt.pop %v537
    %v570 = vrsqrt.pop %v538
    %v571 = vrsqrt.pop %v539
    %v572 = vrsqrt.pop %v540
    %v573 = vrsqrt.pop %v541
    %v574 = vrsqrt.pop %v542
    %v575 = vrsqrt.pop %v543
    %v576 = vrsqrt.pop %v544
    %v577 = vrsqrt.pop %v545
    %v578 = vrsqrt.pop %v546
    %v579 = vrsqrt.pop %v547
    %v580 = vrsqrt.pop %v548
    %v581 = vrsqrt.pop %v549
    %v582 = vmul.f32 %v102, %v550
    %v583 = vmul.f32 %v103, %v550
    %v584 = vmul.f32 %v104, %v550
    %v585 = vmul.f32 %v105, %v550
    %v586 = vmul.f32 %v106, %v551
    %v587 = vmul.f32 %v107, %v551
    %v588 = vmul.f32 %v108, %v551
    %v589 = vmul.f32 %v109, %v551
    %v590 = vmul.f32 %v110, %v552
    %v591 = vmul.f32 %v111, %v552
    %v592 = vmul.f32 %v112, %v552
    %v593 = vmul.f32 %v113, %v552
    %v594 = vmul.f32 %v114, %v553
    %v595 = vmul.f32 %v115, %v553
    %v596 = vmul.f32 %v116, %v553
    %v597 = vmul.f32 %v117, %v553
    %v598 = vmul.f32 %v118, %v554
    %v599 = vmul.f32 %v119, %v554
    %v600 = vmul.f32 %v120, %v554
    %v601 = vmul.f32 %v121, %v554
    %v602 = vmul.f32 %v122, %v555
    %v603 = vmul.f32 %v123, %v555
    %v604 = vmul.f32 %v124, %v555
    %v605 = vmul.f32 %v125, %v555
    %v606 = vmul.f32 %v126, %v556
    %v607 = vmul.f32 %v127, %v556
    %v608 = vmul.f32 %v128, %v556
    %v609 = vmul.f32 %v129, %v556
    %v610 = vmul.f32 %v130, %v557
    %v611 = vmul.f32 %v131, %v557
    %v612 = vmul.f32 %v132, %v557
    %v613 = vmul.f32 %v133, %v557
    %v614 = vmul.f32 %v134, %v558
    %v615 = vmul.f32 %v135, %v558
    %v616 = vmul.f32 %v136, %v558
    %v617 = vmul.f32 %v137, %v558
    %v618 = vmul.f32 %v138, %v559
    %v619 = vmul.f32 %v139, %v559
    %v620 = vmul.f32 %v140, %v559
    %v621 = vmul.f32 %v141, %v559
    %v622 = vmul.f32 %v142, %v560
    %v623 = vmul.f32 %v143, %v560
    %v624 = vmul.f32 %v144, %v560
    %v625 = vmul.f32 %v145, %v560
    %v626 = vmul.f32 %v146, %v561
    %v627 = vmul.f32 %v147, %v561
    %v628 = vmul.f32 %v148, %v561
    %v629 = vmul.f32 %v149, %v561
    %v630 = vmul.f32 %v150, %v562
    %v631 = vmul.f32 %v151, %v562
    %v632 = vmul.f32 %v152, %v562
    %v633 = vmul.f32 %v153, %v562
    %v634 = vmul.f32 %v154, %v563
    %v635 = vmul.f32 %v155, %v563
    %v636 = vmul.f32 %v156, %v563
    %v637 = vmul.f32 %v157, %v563
    %v638 = vmul.f32 %v158, %v564
    %v639 = vmul.f32 %v159, %v564
    %v640 = vmul.f32 %v160, %v564
    %v641 = vmul.f32 %v161, %v564
    %v642 = vmul.f32 %v162, %v565
    %v643 = vmul.f32 %v163, %v565
    %v644 = vmul.f32 %v164, %v565
    %v645 = vmul.f32 %v165, %v565
    %v646 = vmul.f32 %v166, %v566
    %v647 = vmul.f32 %v167, %v566
    %v648 = vmul.f32 %v168, %v566
    %v649 = vmul.f32 %v169, %v566
    %v650 = vmul.f32 %v170, %v567
    %v651 = vmul.f32 %v171, %v567
    %v652 = vmul.f32 %v172, %v567
    %v653 = vmul.f32 %v173, %v567
    %v654 = vmul.f32 %v174, %v568
    %v655 = vmul.f32 %v175, %v568
    %v656 = vmul.f32 %v176, %v568
    %v657 = vmul.f32 %v177, %v568
    %v658 = vmul.f32 %v178, %v569
    %v659 = vmul.f32 %v179, %v569
    %v660 = vmul.f32 %v180, %v569
    %v661 = vmul.f32 %v181, %v569
    %v662 = vmul.f32 %v182, %v570
    %v663 = vmul.f32 %v183, %v570
    %v664 = vmul.f32 %v184, %v570
    %v665 = vmul.f32 %v185, %v570
    %v666 = vmul.f32 %v186, %v571
    %v667 = vmul.f32 %v187, %v571
    %v668 = vmul.f32 %v188, %v571
    %v669 = vmul.f32 %v189, %v571
    %v670 = vmul.f32 %v190, %v572
    %v671 = vmul.f32 %v191, %v572
    %v672 = vmul.f32 %v192, %v572
    %v673 = vmul.f32 %v193, %v572
    %v674 = vmul.f32 %v194, %v573
    %v675 = vmul.f32 %v195, %v573
    %v676 = vmul.f32 %v196, %v573
    %v677 = vmul.f32 %v197, %v573
    %v678 = vmul.f32 %v198, %v574
    %v679 = vmul.f32 %v199, %v574
    %v680 = vmul.f32 %v200, %v574
    %v681 = vmul.f32 %v201, %v574
    %v682 = vmul.f32 %v202, %v575
    %v683 = vmul.f32 %v203, %v575
    %v684 = vmul.f32 %v204, %v575
    %v685 = vmul.f32 %v205, %v575
    %v686 = vmul.f32 %v206, %v576
    %v687 = vmul.f32 %v207, %v576
    %v688 = vmul.f32 %v208, %v576
    %v689 = vmul.f32 %v209, %v576
    %v690 = vmul.f32 %v210, %v577
    %v691 = vmul.f32 %v211, %v577
    %v692 = vmul.f32 %v212, %v577
    %v693 = vmul.f32 %v213, %v577
    %v694 = vmul.f32 %v214, %v578
    %v695 = vmul.f32 %v215, %v578
    %v696 = vmul.f32 %v216, %v578
    %v697 = vmul.f32 %v217, %v578
    %v698 = vmul.f32 %v218, %v579
    %v699 = vmul.f32 %v219, %v579
    %v700 = vmul.f32 %v220, %v579
    %v701 = vmul.f32 %v221, %v579
    %v702 = vmul.f32 %v222, %v580
    %v703 = vmul.f32 %v223, %v580
    %v704 = vmul.f32 %v224, %v580
    %v705 = vmul.f32 %v225, %v580
    %v706 = vmul.f32 %v226, %v581
    %v707 = vmul.f32 %v227, %v581
    %v708 = vmul.f32 %v228, %v581
    %v709 = vmul.f32 %v229, %v581
    %v710 = vpack.c.bf16 %v586, %v582
    %v711 = vpack.c.bf16 %v587, %v583
    %v712 = vpack.c.bf16 %v588, %v584
    %v713 = vpack.c.bf16 %v589, %v585
    %v714 = vpack.c.bf16 %v594, %v590
    %v715 = vpack.c.bf16 %v595, %v591
    %v716 = vpack.c.bf16 %v596, %v592
    %v717 = vpack.c.bf16 %v597, %v593
    %v718 = vpack.c.bf16 %v602, %v598
    %v719 = vpack.c.bf16 %v603, %v599
    %v720 = vpack.c.bf16 %v604, %v600
    %v721 = vpack.c.bf16 %v605, %v601
    %v722 = vpack.c.bf16 %v610, %v606
    %v723 = vpack.c.bf16 %v611, %v607
    %v724 = vpack.c.bf16 %v612, %v608
    %v725 = vpack.c.bf16 %v613, %v609
    %v726 = vpack.c.bf16 %v618, %v614
    %v727 = vpack.c.bf16 %v619, %v615
    %v728 = vpack.c.bf16 %v620, %v616
    %v729 = vpack.c.bf16 %v621, %v617
    %v730 = vpack.c.bf16 %v626, %v622
    %v731 = vpack.c.bf16 %v627, %v623
    %v732 = vpack.c.bf16 %v628, %v624
    %v733 = vpack.c.bf16 %v629, %v625
    %v734 = vpack.c.bf16 %v634, %v630
    %v735 = vpack.c.bf16 %v635, %v631
    %v736 = vpack.c.bf16 %v636, %v632
    %v737 = vpack.c.bf16 %v637, %v633
    %v738 = vpack.c.bf16 %v642, %v638
    %v739 = vpack.c.bf16 %v643, %v639
    %v740 = vpack.c.bf16 %v644, %v640
    %v741 = vpack.c.bf16 %v645, %v641
    %v742 = vpack.c.bf16 %v650, %v646
    %v743 = vpack.c.bf16 %v651, %v647
    %v744 = vpack.c.bf16 %v652, %v648
    %v745 = vpack.c.bf16 %v653, %v649
    %v746 = vpack.c.bf16 %v658, %v654
    %v747 = vpack.c.bf16 %v659, %v655
    %v748 = vpack.c.bf16 %v660, %v656
    %v749 = vpack.c.bf16 %v661, %v657
    %v750 = vpack.c.bf16 %v666, %v662
    %v751 = vpack.c.bf16 %v667, %v663
    %v752 = vpack.c.bf16 %v668, %v664
    %v753 = vpack.c.bf16 %v669, %v665
    %v754 = vpack.c.bf16 %v674, %v670
    %v755 = vpack.c.bf16 %v675, %v671
    %v756 = vpack.c.bf16 %v676, %v672
    %v757 = vpack.c.bf16 %v677, %v673
    %v758 = vpack.c.bf16 %v682, %v678
    %v759 = vpack.c.bf16 %v683, %v679
    %v760 = vpack.c.bf16 %v684, %v680
    %v761 = vpack.c.bf16 %v685, %v681
    %v762 = vpack.c.bf16 %v690, %v686
    %v763 = vpack.c.bf16 %v691, %v687
    %v764 = vpack.c.bf16 %v692, %v688
    %v765 = vpack.c.bf16 %v693, %v689
    %v766 = vpack.c.bf16 %v698, %v694
    %v767 = vpack.c.bf16 %v699, %v695
    %v768 = vpack.c.bf16 %v700, %v696
    %v769 = vpack.c.bf16 %v701, %v697
    %v770 = vpack.c.bf16 %v706, %v702
    %v771 = vpack.c.bf16 %v707, %v703
    %v772 = vpack.c.bf16 %v708, %v704
    %v773 = vpack.c.bf16 %v709, %v705
    %v774 = vld [vmem:[#allocation5] sm:$0xff]
    %v775 = vld [vmem:[#allocation5 + $0x8] sm:$0xff]
    %v776 = vld [vmem:[#allocation5 + $0x10] sm:$0xff]
    %v777 = vld [vmem:[#allocation5 + $0x18] sm:$0xff]
    %v778 = vld [vmem:[#allocation5 + $0x20] sm:$0xff]
    %v779 = vld [vmem:[#allocation5 + $0x28] sm:$0xff]
    %v780 = vld [vmem:[#allocation5 + $0x30] sm:$0xff]
    %v781 = vld [vmem:[#allocation5 + $0x38] sm:$0xff]
    %v782 = vld [vmem:[#allocation5 + $0x40] sm:$0xff]
    %v783 = vld [vmem:[#allocation5 + $0x48] sm:$0xff]
    %v784 = vld [vmem:[#allocation5 + $0x50] sm:$0xff]
    %v785 = vld [vmem:[#allocation5 + $0x58] sm:$0xff]
    %v786 = vld [vmem:[#allocation5 + $0x60] sm:$0xff]
    %v787 = vld [vmem:[#allocation5 + $0x68] sm:$0xff]
    %v788 = vld [vmem:[#allocation5 + $0x70] sm:$0xff]
    %v789 = vld [vmem:[#allocation5 + $0x78] sm:$0xff]
    %v790 = vld [vmem:[#allocation5 + $0x80] sm:$0xff]
    %v791 = vld [vmem:[#allocation5 + $0x88] sm:$0xff]
    %v792 = vld [vmem:[#allocation5 + $0x90] sm:$0xff]
    %v793 = vld [vmem:[#allocation5 + $0x98] sm:$0xff]
    %v794 = vld [vmem:[#allocation5 + $0xa0] sm:$0xff]
    %v795 = vld [vmem:[#allocation5 + $0xa8] sm:$0xff]
    %v796 = vld [vmem:[#allocation5 + $0xb0] sm:$0xff]
    %v797 = vld [vmem:[#allocation5 + $0xb8] sm:$0xff]
    %v798 = vld [vmem:[#allocation5 + $0xc0] sm:$0xff]
    %v799 = vld [vmem:[#allocation5 + $0xc8] sm:$0xff]
    %v800 = vld [vmem:[#allocation5 + $0xd0] sm:$0xff]
    %v801 = vld [vmem:[#allocation5 + $0xd8] sm:$0xff]
    %v802 = vld [vmem:[#allocation5 + $0xe0] sm:$0xff]
    %v803 = vld [vmem:[#allocation5 + $0xe8] sm:$0xff]
    %v804 = vld [vmem:[#allocation5 + $0xf0] sm:$0xff]
    %v805 = vld [vmem:[#allocation5 + $0xf8] sm:$0xff]
    %v806 = vld [vmem:[#allocation5 + $0x100] sm:$0xff]
    %v807 = vld [vmem:[#allocation5 + $0x108] sm:$0xff]
    %v808 = vld [vmem:[#allocation5 + $0x110] sm:$0xff]
    %v809 = vld [vmem:[#allocation5 + $0x118] sm:$0xff]
    %v810 = vld [vmem:[#allocation5 + $0x120] sm:$0xff]
    %v811 = vld [vmem:[#allocation5 + $0x128] sm:$0xff]
    %v812 = vld [vmem:[#allocation5 + $0x130] sm:$0xff]
    %v813 = vld [vmem:[#allocation5 + $0x138] sm:$0xff]
    %v814 = vld [vmem:[#allocation5 + $0x140] sm:$0xff]
    %v815 = vld [vmem:[#allocation5 + $0x148] sm:$0xff]
    %v816 = vld [vmem:[#allocation5 + $0x150] sm:$0xff]
    %v817 = vld [vmem:[#allocation5 + $0x158] sm:$0xff]
    %v818 = vld [vmem:[#allocation5 + $0x160] sm:$0xff]
    %v819 = vld [vmem:[#allocation5 + $0x168] sm:$0xff]
    %v820 = vld [vmem:[#allocation5 + $0x170] sm:$0xff]
    %v821 = vld [vmem:[#allocation5 + $0x178] sm:$0xff]
    %v822 = vld [vmem:[#allocation5 + $0x180] sm:$0xff]
    %v823 = vld [vmem:[#allocation5 + $0x188] sm:$0xff]
    %v824 = vld [vmem:[#allocation5 + $0x190] sm:$0xff]
    %v825 = vld [vmem:[#allocation5 + $0x198] sm:$0xff]
    %v826 = vld [vmem:[#allocation5 + $0x1a0] sm:$0xff]
    %v827 = vld [vmem:[#allocation5 + $0x1a8] sm:$0xff]
    %v828 = vld [vmem:[#allocation5 + $0x1b0] sm:$0xff]
    %v829 = vld [vmem:[#allocation5 + $0x1b8] sm:$0xff]
    %v830 = vld [vmem:[#allocation5 + $0x1c0] sm:$0xff]
    %v831 = vld [vmem:[#allocation5 + $0x1c8] sm:$0xff]
    %v832 = vld [vmem:[#allocation5 + $0x1d0] sm:$0xff]
    %v833 = vld [vmem:[#allocation5 + $0x1d8] sm:$0xff]
    %v834 = vld [vmem:[#allocation5 + $0x1e0] sm:$0xff]
    %v835 = vld [vmem:[#allocation5 + $0x1e8] sm:$0xff]
    %v836 = vld [vmem:[#allocation5 + $0x1f0] sm:$0xff]
    %v837 = vld [vmem:[#allocation5 + $0x1f8] sm:$0xff]
    %v838 = vld [vmem:[%s2] sm:$0x3]
    %v840 = vlaneseq
    %v841 = vshrl.u32 %v840, 7
    %v842 = vsub.s32 0, %v841
    %v843 = vrot.slane %v838, %v842
    %v844 = vlaneseq
    %v845 = vshrl.u32 %v844, 7
    %v846 = vsub.s32 1, %v845
    %v847 = vrot.slane %v838, %v846
    %v914 = vunpack.c.l.b16 %v774
    %v915 = vunpack.c.h.b16 %v774
    %v916 = vunpack.c.l.b16 %v775
    %v917 = vunpack.c.h.b16 %v775
    %v918 = vunpack.c.l.b16 %v776
    %v919 = vunpack.c.h.b16 %v776
    %v920 = vunpack.c.l.b16 %v777
    %v921 = vunpack.c.h.b16 %v777
    %v922 = vunpack.c.l.b16 %v778
    %v923 = vunpack.c.h.b16 %v778
    %v924 = vunpack.c.l.b16 %v779
    %v925 = vunpack.c.h.b16 %v779
    %v926 = vunpack.c.l.b16 %v780
    %v927 = vunpack.c.h.b16 %v780
    %v928 = vunpack.c.l.b16 %v781
    %v929 = vunpack.c.h.b16 %v781
    %v930 = vunpack.c.l.b16 %v782
    %v931 = vunpack.c.h.b16 %v782
    %v932 = vunpack.c.l.b16 %v783
    %v933 = vunpack.c.h.b16 %v783
    %v934 = vunpack.c.l.b16 %v784
    %v935 = vunpack.c.h.b16 %v784
    %v936 = vunpack.c.l.b16 %v785
    %v937 = vunpack.c.h.b16 %v785
    %v938 = vunpack.c.l.b16 %v786
    %v939 = vunpack.c.h.b16 %v786
    %v940 = vunpack.c.l.b16 %v787
    %v941 = vunpack.c.h.b16 %v787
    %v942 = vunpack.c.l.b16 %v788
    %v943 = vunpack.c.h.b16 %v788
    %v944 = vunpack.c.l.b16 %v789
    %v945 = vunpack.c.h.b16 %v789
    %v946 = vunpack.c.l.b16 %v790
    %v947 = vunpack.c.h.b16 %v790
    %v948 = vunpack.c.l.b16 %v791
    %v949 = vunpack.c.h.b16 %v791
    %v950 = vunpack.c.l.b16 %v792
    %v951 = vunpack.c.h.b16 %v792
    %v952 = vunpack.c.l.b16 %v793
    %v953 = vunpack.c.h.b16 %v793
    %v954 = vunpack.c.l.b16 %v794
    %v955 = vunpack.c.h.b16 %v794
    %v956 = vunpack.c.l.b16 %v795
    %v957 = vunpack.c.h.b16 %v795
    %v958 = vunpack.c.l.b16 %v796
    %v959 = vunpack.c.h.b16 %v796
    %v960 = vunpack.c.l.b16 %v797
    %v961 = vunpack.c.h.b16 %v797
    %v962 = vunpack.c.l.b16 %v798
    %v963 = vunpack.c.h.b16 %v798
    %v964 = vunpack.c.l.b16 %v799
    %v965 = vunpack.c.h.b16 %v799
    %v966 = vunpack.c.l.b16 %v800
    %v967 = vunpack.c.h.b16 %v800
    %v968 = vunpack.c.l.b16 %v801
    %v969 = vunpack.c.h.b16 %v801
    %v970 = vunpack.c.l.b16 %v802
    %v971 = vunpack.c.h.b16 %v802
    %v972 = vunpack.c.l.b16 %v803
    %v973 = vunpack.c.h.b16 %v803
    %v974 = vunpack.c.l.b16 %v804
    %v975 = vunpack.c.h.b16 %v804
    %v976 = vunpack.c.l.b16 %v805
    %v977 = vunpack.c.h.b16 %v805
    %v978 = vunpack.c.l.b16 %v806
    %v979 = vunpack.c.h.b16 %v806
    %v980 = vunpack.c.l.b16 %v807
    %v981 = vunpack.c.h.b16 %v807
    %v982 = vunpack.c.l.b16 %v808
    %v983 = vunpack.c.h.b16 %v808
    %v984 = vunpack.c.l.b16 %v809
    %v985 = vunpack.c.h.b16 %v809
    %v986 = vunpack.c.l.b16 %v810
    %v987 = vunpack.c.h.b16 %v810
    %v988 = vunpack.c.l.b16 %v811
    %v989 = vunpack.c.h.b16 %v811
    %v990 = vunpack.c.l.b16 %v812
    %v991 = vunpack.c.h.b16 %v812
    %v992 = vunpack.c.l.b16 %v813
    %v993 = vunpack.c.h.b16 %v813
    %v994 = vunpack.c.l.b16 %v814
    %v995 = vunpack.c.h.b16 %v814
    %v996 = vunpack.c.l.b16 %v815
    %v997 = vunpack.c.h.b16 %v815
    %v998 = vunpack.c.l.b16 %v816
    %v999 = vunpack.c.h.b16 %v816
    %v1000 = vunpack.c.l.b16 %v817
    %v1001 = vunpack.c.h.b16 %v817
    %v1002 = vunpack.c.l.b16 %v818
    %v1003 = vunpack.c.h.b16 %v818
    %v1004 = vunpack.c.l.b16 %v819
    %v1005 = vunpack.c.h.b16 %v819
    %v1006 = vunpack.c.l.b16 %v820
    %v1007 = vunpack.c.h.b16 %v820
    %v1008 = vunpack.c.l.b16 %v821
    %v1009 = vunpack.c.h.b16 %v821
    %v1010 = vunpack.c.l.b16 %v822
    %v1011 = vunpack.c.h.b16 %v822
    %v1012 = vunpack.c.l.b16 %v823
    %v1013 = vunpack.c.h.b16 %v823
    %v1014 = vunpack.c.l.b16 %v824
    %v1015 = vunpack.c.h.b16 %v824
    %v1016 = vunpack.c.l.b16 %v825
    %v1017 = vunpack.c.h.b16 %v825
    %v1018 = vunpack.c.l.b16 %v826
    %v1019 = vunpack.c.h.b16 %v826
    %v1020 = vunpack.c.l.b16 %v827
    %v1021 = vunpack.c.h.b16 %v827
    %v1022 = vunpack.c.l.b16 %v828
    %v1023 = vunpack.c.h.b16 %v828
    %v1024 = vunpack.c.l.b16 %v829
    %v1025 = vunpack.c.h.b16 %v829
    %v1026 = vunpack.c.l.b16 %v830
    %v1027 = vunpack.c.h.b16 %v830
    %v1028 = vunpack.c.l.b16 %v831
    %v1029 = vunpack.c.h.b16 %v831
    %v1030 = vunpack.c.l.b16 %v832
    %v1031 = vunpack.c.h.b16 %v832
    %v1032 = vunpack.c.l.b16 %v833
    %v1033 = vunpack.c.h.b16 %v833
    %v1034 = vunpack.c.l.b16 %v834
    %v1035 = vunpack.c.h.b16 %v834
    %v1036 = vunpack.c.l.b16 %v835
    %v1037 = vunpack.c.h.b16 %v835
    %v1038 = vunpack.c.l.b16 %v836
    %v1039 = vunpack.c.h.b16 %v836
    %v1040 = vunpack.c.l.b16 %v837
    %v1041 = vunpack.c.h.b16 %v837
    %v1042 = vpack.c.b16 %v916, %v914
    %v1043 = vpack.c.b16 %v917, %v915
    %v1044 = vpack.c.b16 %v920, %v918
    %v1045 = vpack.c.b16 %v921, %v919
    %v1046 = vpack.c.b16 %v924, %v922
    %v1047 = vpack.c.b16 %v925, %v923
    %v1048 = vpack.c.b16 %v928, %v926
    %v1049 = vpack.c.b16 %v929, %v927
    %v1050 = vpack.c.b16 %v932, %v930
    %v1051 = vpack.c.b16 %v933, %v931
    %v1052 = vpack.c.b16 %v936, %v934
    %v1053 = vpack.c.b16 %v937, %v935
    %v1054 = vpack.c.b16 %v940, %v938
    %v1055 = vpack.c.b16 %v941, %v939
    %v1056 = vpack.c.b16 %v944, %v942
    %v1057 = vpack.c.b16 %v945, %v943
    %v1058 = vpack.c.b16 %v948, %v946
    %v1059 = vpack.c.b16 %v949, %v947
    %v1060 = vpack.c.b16 %v952, %v950
    %v1061 = vpack.c.b16 %v953, %v951
    %v1062 = vpack.c.b16 %v956, %v954
    %v1063 = vpack.c.b16 %v957, %v955
    %v1064 = vpack.c.b16 %v960, %v958
    %v1065 = vpack.c.b16 %v961, %v959
    %v1066 = vpack.c.b16 %v964, %v962
    %v1067 = vpack.c.b16 %v965, %v963
    %v1068 = vpack.c.b16 %v968, %v966
    %v1069 = vpack.c.b16 %v969, %v967
    %v1070 = vpack.c.b16 %v972, %v970
    %v1071 = vpack.c.b16 %v973, %v971
    %v1072 = vpack.c.b16 %v976, %v974
    %v1073 = vpack.c.b16 %v977, %v975
    %v1074 = vpack.c.b16 %v980, %v978
    %v1075 = vpack.c.b16 %v981, %v979
    %v1076 = vpack.c.b16 %v984, %v982
    %v1077 = vpack.c.b16 %v985, %v983
    %v1078 = vpack.c.b16 %v988, %v986
    %v1079 = vpack.c.b16 %v989, %v987
    %v1080 = vpack.c.b16 %v992, %v990
    %v1081 = vpack.c.b16 %v993, %v991
    %v1082 = vpack.c.b16 %v996, %v994
    %v1083 = vpack.c.b16 %v997, %v995
    %v1084 = vpack.c.b16 %v1000, %v998
    %v1085 = vpack.c.b16 %v1001, %v999
    %v1086 = vpack.c.b16 %v1004, %v1002
    %v1087 = vpack.c.b16 %v1005, %v1003
    %v1088 = vpack.c.b16 %v1008, %v1006
    %v1089 = vpack.c.b16 %v1009, %v1007
    %v1090 = vpack.c.b16 %v1012, %v1010
    %v1091 = vpack.c.b16 %v1013, %v1011
    %v1092 = vpack.c.b16 %v1016, %v1014
    %v1093 = vpack.c.b16 %v1017, %v1015
    %v1094 = vpack.c.b16 %v1020, %v1018
    %v1095 = vpack.c.b16 %v1021, %v1019
    %v1096 = vpack.c.b16 %v1024, %v1022
    %v1097 = vpack.c.b16 %v1025, %v1023
    %v1098 = vpack.c.b16 %v1028, %v1026
    %v1099 = vpack.c.b16 %v1029, %v1027
    %v1100 = vpack.c.b16 %v1032, %v1030
    %v1101 = vpack.c.b16 %v1033, %v1031
    %v1102 = vpack.c.b16 %v1036, %v1034
    %v1103 = vpack.c.b16 %v1037, %v1035
    %v1104 = vpack.c.b16 %v1040, %v1038
    %v1105 = vpack.c.b16 %v1041, %v1039
    %1170 = vmatprep.subr.bf16.mxu0 %v1043
    %1171 = vmatpush1.bf16.msra.mxu0 %v1042
    %1172 = vmatprep.subr.bf16.mxu0 %v1045
    %1173 = vmatpush1.bf16.msra.mxu0 %v1044
    %1174 = vmatprep.subr.bf16.mxu0 %v1047
    %1175 = vmatpush1.bf16.msra.mxu0 %v1046
    %1176 = vmatprep.subr.bf16.mxu0 %v1049
    %1177 = vmatpush1.bf16.msra.mxu0 %v1048
    %1178 = vmatprep.subr.bf16.mxu0 %v1051
    %1179 = vmatpush1.bf16.msra.mxu0 %v1050
    %1180 = vmatprep.subr.bf16.mxu0 %v1053
    %1181 = vmatpush1.bf16.msra.mxu0 %v1052
    %1182 = vmatprep.subr.bf16.mxu0 %v1055
    %1183 = vmatpush1.bf16.msra.mxu0 %v1054
    %1184 = vmatprep.subr.bf16.mxu0 %v1057
    %1185 = vmatpush1.bf16.msra.mxu0 %v1056
    %1186 = vmatprep.subr.bf16.mxu0 %v1059
    %1187 = vmatpush1.bf16.msra.mxu0 %v1058
    %1188 = vmatprep.subr.bf16.mxu0 %v1061
    %1189 = vmatpush1.bf16.msra.mxu0 %v1060
    %1190 = vmatprep.subr.bf16.mxu0 %v1063
    %1191 = vmatpush1.bf16.msra.mxu0 %v1062
    %1192 = vmatprep.subr.bf16.mxu0 %v1065
    %1193 = vmatpush1.bf16.msra.mxu0 %v1064
    %1194 = vmatprep.subr.bf16.mxu0 %v1067
    %1195 = vmatpush1.bf16.msra.mxu0 %v1066
    %1196 = vmatprep.subr.bf16.mxu0 %v1069
    %1197 = vmatpush1.bf16.msra.mxu0 %v1068
    %1198 = vmatprep.subr.bf16.mxu0 %v1071
    %1199 = vmatpush1.bf16.msra.mxu0 %v1070
    %1200 = vmatprep.subr.bf16.mxu0 %v1073
    %1201 = vmatpush1.bf16.msra.mxu0 %v1072
    %1202 = vmatprep.mubr.bf16.mxu0 %v711
    %1203 = vmatmul.mubr.bf16.gmra.mrb[0].mxu0 %v710
    %v1204 = vpop.f32.mrb[0].mxu0
    %v1205 = vadd.f32 %v843, %v1204
    %v1206 = vpop.f32.mrb[0].mxu0
    %v1207 = vadd.f32 %v847, %v1206
    %v1208 = vpop.f32.mrb[0].mxu0
    %v1209 = vadd.f32 %v843, %v1208
    %v1210 = vpop.f32.mrb[0].mxu0
    %v1211 = vadd.f32 %v847, %v1210
    %1212 = vmatprep.mubr.bf16.mxu0 %v715
    %1213 = vmatmul.mubr.bf16.gmra.mrb[0].mxu0 %v714
    %v1214 = vpop.f32.mrb[0].mxu0
    %v1215 = vadd.f32 %v843, %v1214
    %v1216 = vpop.f32.mrb[0].mxu0
    %v1217 = vadd.f32 %v847, %v1216
    %v1218 = vpop.f32.mrb[0].mxu0
    %v1219 = vadd.f32 %v843, %v1218
    %v1220 = vpop.f32.mrb[0].mxu0
    %v1221 = vadd.f32 %v847, %v1220
    %1222 = vmatprep.mubr.bf16.mxu0 %v719
    %1223 = vmatmul.mubr.bf16.gmra.mrb[0].mxu0 %v718
    %v1224 = vpop.f32.mrb[0].mxu0
    %v1225 = vadd.f32 %v843, %v1224
    %v1226 = vpop.f32.mrb[0].mxu0
    %v1227 = vadd.f32 %v847, %v1226
    %v1228 = vpop.f32.mrb[0].mxu0
    %v1229 = vadd.f32 %v843, %v1228
    %v1230 = vpop.f32.mrb[0].mxu0
    %v1231 = vadd.f32 %v847, %v1230
    %1232 = vmatprep.mubr.bf16.mxu0 %v723
    %1233 = vmatmul.mubr.bf16.gmra.mrb[0].mxu0 %v722
    %v1234 = vpop.f32.mrb[0].mxu0
    %v1235 = vadd.f32 %v843, %v1234
    %v1236 = vpop.f32.mrb[0].mxu0
    %v1237 = vadd.f32 %v847, %v1236
    %v1238 = vpop.f32.mrb[0].mxu0
    %v1239 = vadd.f32 %v843, %v1238
    %v1240 = vpop.f32.mrb[0].mxu0
    %v1241 = vadd.f32 %v847, %v1240
    %1242 = vmatprep.mubr.bf16.mxu0 %v727
    %1243 = vmatmul.mubr.bf16.gmra.mrb[0].mxu0 %v726
    %v1244 = vpop.f32.mrb[0].mxu0
    %v1245 = vadd.f32 %v843, %v1244
    %v1246 = vpop.f32.mrb[0].mxu0
    %v1247 = vadd.f32 %v847, %v1246
    %v1248 = vpop.f32.mrb[0].mxu0
    %v1249 = vadd.f32 %v843, %v1248
    %v1250 = vpop.f32.mrb[0].mxu0
    %v1251 = vadd.f32 %v847, %v1250
    %1252 = vmatprep.mubr.bf16.mxu0 %v731
    %1253 = vmatmul.mubr.bf16.gmra.mrb[0].mxu0 %v730
    %v1254 = vpop.f32.mrb[0].mxu0
    %v1255 = vadd.f32 %v843, %v1254
    %v1256 = vpop.f32.mrb[0].mxu0
    %v1257 = vadd.f32 %v847, %v1256
    %v1258 = vpop.f32.mrb[0].mxu0
    %v1259 = vadd.f32 %v843, %v1258
    %v1260 = vpop.f32.mrb[0].mxu0
    %v1261 = vadd.f32 %v847, %v1260
    %1262 = vmatprep.mubr.bf16.mxu0 %v735
    %1263 = vmatmul.mubr.bf16.gmra.mrb[0].mxu0 %v734
    %v1264 = vpop.f32.mrb[0].mxu0
    %v1265 = vadd.f32 %v843, %v1264
    %v1266 = vpop.f32.mrb[0].mxu0
    %v1267 = vadd.f32 %v847, %v1266
    %v1268 = vpop.f32.mrb[0].mxu0
    %v1269 = vadd.f32 %v843, %v1268
    %v1270 = vpop.f32.mrb[0].mxu0
    %v1271 = vadd.f32 %v847, %v1270
    %1272 = vmatprep.mubr.bf16.mxu0 %v739
    %1273 = vmatmul.mubr.bf16.gmra.mrb[0].mxu0 %v738
    %v1274 = vpop.f32.mrb[0].mxu0
    %v1275 = vadd.f32 %v843, %v1274
    %v1276 = vpop.f32.mrb[0].mxu0
    %v1277 = vadd.f32 %v847, %v1276
    %v1278 = vpop.f32.mrb[0].mxu0
    %v1279 = vadd.f32 %v843, %v1278
    %v1280 = vpop.f32.mrb[0].mxu0
    %v1281 = vadd.f32 %v847, %v1280
    %1282 = vmatprep.mubr.bf16.mxu0 %v743
    %1283 = vmatmul.mubr.bf16.gmra.mrb[0].mxu0 %v742
    %v1284 = vpop.f32.mrb[0].mxu0
    %v1285 = vadd.f32 %v843, %v1284
    %v1286 = vpop.f32.mrb[0].mxu0
    %v1287 = vadd.f32 %v847, %v1286
    %v1288 = vpop.f32.mrb[0].mxu0
    %v1289 = vadd.f32 %v843, %v1288
    %v1290 = vpop.f32.mrb[0].mxu0
    %v1291 = vadd.f32 %v847, %v1290
    %1292 = vmatprep.mubr.bf16.mxu0 %v747
    %1293 = vmatmul.mubr.bf16.gmra.mrb[0].mxu0 %v746
    %v1294 = vpop.f32.mrb[0].mxu0
    %v1295 = vadd.f32 %v843, %v1294
    %v1296 = vpop.f32.mrb[0].mxu0
    %v1297 = vadd.f32 %v847, %v1296
    %v1298 = vpop.f32.mrb[0].mxu0
    %v1299 = vadd.f32 %v843, %v1298
    %v1300 = vpop.f32.mrb[0].mxu0
    %v1301 = vadd.f32 %v847, %v1300
    %1302 = vmatprep.mubr.bf16.mxu0 %v751
    %1303 = vmatmul.mubr.bf16.gmra.mrb[0].mxu0 %v750
    %v1304 = vpop.f32.mrb[0].mxu0
    %v1305 = vadd.f32 %v843, %v1304
    %v1306 = vpop.f32.mrb[0].mxu0
    %v1307 = vadd.f32 %v847, %v1306
    %v1308 = vpop.f32.mrb[0].mxu0
    %v1309 = vadd.f32 %v843, %v1308
    %v1310 = vpop.f32.mrb[0].mxu0
    %v1311 = vadd.f32 %v847, %v1310
    %1312 = vmatprep.mubr.bf16.mxu0 %v755
    %1313 = vmatmul.mubr.bf16.gmra.mrb[0].mxu0 %v754
    %v1314 = vpop.f32.mrb[0].mxu0
    %v1315 = vadd.f32 %v843, %v1314
    %v1316 = vpop.f32.mrb[0].mxu0
    %v1317 = vadd.f32 %v847, %v1316
    %v1318 = vpop.f32.mrb[0].mxu0
    %v1319 = vadd.f32 %v843, %v1318
    %v1320 = vpop.f32.mrb[0].mxu0
    %v1321 = vadd.f32 %v847, %v1320
    %1322 = vmatprep.mubr.bf16.mxu0 %v759
    %1323 = vmatmul.mubr.bf16.gmra.mrb[0].mxu0 %v758
    %v1324 = vpop.f32.mrb[0].mxu0
    %v1325 = vadd.f32 %v843, %v1324
    %v1326 = vpop.f32.mrb[0].mxu0
    %v1327 = vadd.f32 %v847, %v1326
    %v1328 = vpop.f32.mrb[0].mxu0
    %v1329 = vadd.f32 %v843, %v1328
    %v1330 = vpop.f32.mrb[0].mxu0
    %v1331 = vadd.f32 %v847, %v1330
    %1332 = vmatprep.mubr.bf16.mxu0 %v763
    %1333 = vmatmul.mubr.bf16.gmra.mrb[0].mxu0 %v762
    %v1334 = vpop.f32.mrb[0].mxu0
    %v1335 = vadd.f32 %v843, %v1334
    %v1336 = vpop.f32.mrb[0].mxu0
    %v1337 = vadd.f32 %v847, %v1336
    %v1338 = vpop.f32.mrb[0].mxu0
    %v1339 = vadd.f32 %v843, %v1338
    %v1340 = vpop.f32.mrb[0].mxu0
    %v1341 = vadd.f32 %v847, %v1340
    %1342 = vmatprep.mubr.bf16.mxu0 %v767
    %1343 = vmatmul.mubr.bf16.gmra.mrb[0].mxu0 %v766
    %v1344 = vpop.f32.mrb[0].mxu0
    %v1345 = vadd.f32 %v843, %v1344
    %v1346 = vpop.f32.mrb[0].mxu0
    %v1347 = vadd.f32 %v847, %v1346
    %v1348 = vpop.f32.mrb[0].mxu0
    %v1349 = vadd.f32 %v843, %v1348
    %v1350 = vpop.f32.mrb[0].mxu0
    %v1351 = vadd.f32 %v847, %v1350
    %1352 = vmatprep.mubr.bf16.mxu0 %v771
    %1353 = vmatmul.mubr.bf16.gmra.mrb[0].mxu0 %v770
    %v1354 = vpop.f32.mrb[0].mxu0
    %v1355 = vadd.f32 %v843, %v1354
    %v1356 = vpop.f32.mrb[0].mxu0
    %v1357 = vadd.f32 %v847, %v1356
    %v1358 = vpop.f32.mrb[0].mxu0
    %v1359 = vadd.f32 %v843, %v1358
    %v1360 = vpop.f32.mrb[0].mxu0
    %v1361 = vadd.f32 %v847, %v1360
    %1362 = vdwg.mxu0
    %1363 = vmatprep.subr.bf16.mxu0 %v1075
    %1364 = vmatpush1.bf16.msra.mxu0 %v1074
    %1365 = vmatprep.subr.bf16.mxu0 %v1077
    %1366 = vmatpush1.bf16.msra.mxu0 %v1076
    %1367 = vmatprep.subr.bf16.mxu0 %v1079
    %1368 = vmatpush1.bf16.msra.mxu0 %v1078
    %1369 = vmatprep.subr.bf16.mxu0 %v1081
    %1370 = vmatpush1.bf16.msra.mxu0 %v1080
    %1371 = vmatprep.subr.bf16.mxu0 %v1083
    %1372 = vmatpush1.bf16.msra.mxu0 %v1082
    %1373 = vmatprep.subr.bf16.mxu0 %v1085
    %1374 = vmatpush1.bf16.msra.mxu0 %v1084
    %1375 = vmatprep.subr.bf16.mxu0 %v1087
    %1376 = vmatpush1.bf16.msra.mxu0 %v1086
    %1377 = vmatprep.subr.bf16.mxu0 %v1089
    %1378 = vmatpush1.bf16.msra.mxu0 %v1088
    %1379 = vmatprep.subr.bf16.mxu0 %v1091
    %1380 = vmatpush1.bf16.msra.mxu0 %v1090
    %1381 = vmatprep.subr.bf16.mxu0 %v1093
    %1382 = vmatpush1.bf16.msra.mxu0 %v1092
    %1383 = vmatprep.subr.bf16.mxu0 %v1095
    %1384 = vmatpush1.bf16.msra.mxu0 %v1094
    %1385 = vmatprep.subr.bf16.mxu0 %v1097
    %1386 = vmatpush1.bf16.msra.mxu0 %v1096
    %1387 = vmatprep.subr.bf16.mxu0 %v1099
    %1388 = vmatpush1.bf16.msra.mxu0 %v1098
    %1389 = vmatprep.subr.bf16.mxu0 %v1101
    %1390 = vmatpush1.bf16.msra.mxu0 %v1100
    %1391 = vmatprep.subr.bf16.mxu0 %v1103
    %1392 = vmatpush1.bf16.msra.mxu0 %v1102
    %1393 = vmatprep.subr.bf16.mxu0 %v1105
    %1394 = vmatpush1.bf16.msra.mxu0 %v1104
    %1395 = vmatprep.mubr.bf16.mxu0 %v713
    %1396 = vmatmul.mubr.bf16.gmra.mrb[0].mxu0 %v712
    %v1397 = vpop.f32.mrb[0].mxu0
    %v1398 = vadd.f32 %v1205, %v1397
    %v1399 = vpop.f32.mrb[0].mxu0
    %v1400 = vadd.f32 %v1207, %v1399
    %v1401 = vpop.f32.mrb[0].mxu0
    %v1402 = vadd.f32 %v1209, %v1401
    %v1403 = vpop.f32.mrb[0].mxu0
    %v1404 = vadd.f32 %v1211, %v1403
    %1405 = vmatprep.mubr.bf16.mxu0 %v717
    %1406 = vmatmul.mubr.bf16.gmra.mrb[0].mxu0 %v716
    %v1407 = vpop.f32.mrb[0].mxu0
    %v1408 = vadd.f32 %v1215, %v1407
    %v1409 = vpop.f32.mrb[0].mxu0
    %v1410 = vadd.f32 %v1217, %v1409
    %v1411 = vpop.f32.mrb[0].mxu0
    %v1412 = vadd.f32 %v1219, %v1411
    %v1413 = vpop.f32.mrb[0].mxu0
    %v1414 = vadd.f32 %v1221, %v1413
    %1415 = vmatprep.mubr.bf16.mxu0 %v721
    %1416 = vmatmul.mubr.bf16.gmra.mrb[0].mxu0 %v720
    %v1417 = vpop.f32.mrb[0].mxu0
    %v1418 = vadd.f32 %v1225, %v1417
    %v1419 = vpop.f32.mrb[0].mxu0
    %v1420 = vadd.f32 %v1227, %v1419
    %v1421 = vpop.f32.mrb[0].mxu0
    %v1422 = vadd.f32 %v1229, %v1421
    %v1423 = vpop.f32.mrb[0].mxu0
    %v1424 = vadd.f32 %v1231, %v1423
    %1425 = vmatprep.mubr.bf16.mxu0 %v725
    %1426 = vmatmul.mubr.bf16.gmra.mrb[0].mxu0 %v724
    %v1427 = vpop.f32.mrb[0].mxu0
    %v1428 = vadd.f32 %v1235, %v1427
    %v1429 = vpop.f32.mrb[0].mxu0
    %v1430 = vadd.f32 %v1237, %v1429
    %v1431 = vpop.f32.mrb[0].mxu0
    %v1432 = vadd.f32 %v1239, %v1431
    %v1433 = vpop.f32.mrb[0].mxu0
    %v1434 = vadd.f32 %v1241, %v1433
    %1435 = vmatprep.mubr.bf16.mxu0 %v729
    %1436 = vmatmul.mubr.bf16.gmra.mrb[0].mxu0 %v728
    %v1437 = vpop.f32.mrb[0].mxu0
    %v1438 = vadd.f32 %v1245, %v1437
    %v1439 = vpop.f32.mrb[0].mxu0
    %v1440 = vadd.f32 %v1247, %v1439
    %v1441 = vpop.f32.mrb[0].mxu0
    %v1442 = vadd.f32 %v1249, %v1441
    %v1443 = vpop.f32.mrb[0].mxu0
    %v1444 = vadd.f32 %v1251, %v1443
    %1445 = vmatprep.mubr.bf16.mxu0 %v733
    %1446 = vmatmul.mubr.bf16.gmra.mrb[0].mxu0 %v732
    %v1447 = vpop.f32.mrb[0].mxu0
    %v1448 = vadd.f32 %v1255, %v1447
    %v1449 = vpop.f32.mrb[0].mxu0
    %v1450 = vadd.f32 %v1257, %v1449
    %v1451 = vpop.f32.mrb[0].mxu0
    %v1452 = vadd.f32 %v1259, %v1451
    %v1453 = vpop.f32.mrb[0].mxu0
    %v1454 = vadd.f32 %v1261, %v1453
    %1455 = vmatprep.mubr.bf16.mxu0 %v737
    %1456 = vmatmul.mubr.bf16.gmra.mrb[0].mxu0 %v736
    %v1457 = vpop.f32.mrb[0].mxu0
    %v1458 = vadd.f32 %v1265, %v1457
    %v1459 = vpop.f32.mrb[0].mxu0
    %v1460 = vadd.f32 %v1267, %v1459
    %v1461 = vpop.f32.mrb[0].mxu0
    %v1462 = vadd.f32 %v1269, %v1461
    %v1463 = vpop.f32.mrb[0].mxu0
    %v1464 = vadd.f32 %v1271, %v1463
    %1465 = vmatprep.mubr.bf16.mxu0 %v741
    %1466 = vmatmul.mubr.bf16.gmra.mrb[0].mxu0 %v740
    %v1467 = vpop.f32.mrb[0].mxu0
    %v1468 = vadd.f32 %v1275, %v1467
    %v1469 = vpop.f32.mrb[0].mxu0
    %v1470 = vadd.f32 %v1277, %v1469
    %v1471 = vpop.f32.mrb[0].mxu0
    %v1472 = vadd.f32 %v1279, %v1471
    %v1473 = vpop.f32.mrb[0].mxu0
    %v1474 = vadd.f32 %v1281, %v1473
    %1475 = vmatprep.mubr.bf16.mxu0 %v745
    %1476 = vmatmul.mubr.bf16.gmra.mrb[0].mxu0 %v744
    %v1477 = vpop.f32.mrb[0].mxu0
    %v1478 = vadd.f32 %v1285, %v1477
    %v1479 = vpop.f32.mrb[0].mxu0
    %v1480 = vadd.f32 %v1287, %v1479
    %v1481 = vpop.f32.mrb[0].mxu0
    %v1482 = vadd.f32 %v1289, %v1481
    %v1483 = vpop.f32.mrb[0].mxu0
    %v1484 = vadd.f32 %v1291, %v1483
    %1485 = vmatprep.mubr.bf16.mxu0 %v749
    %1486 = vmatmul.mubr.bf16.gmra.mrb[0].mxu0 %v748
    %v1487 = vpop.f32.mrb[0].mxu0
    %v1488 = vadd.f32 %v1295, %v1487
    %v1489 = vpop.f32.mrb[0].mxu0
    %v1490 = vadd.f32 %v1297, %v1489
    %v1491 = vpop.f32.mrb[0].mxu0
    %v1492 = vadd.f32 %v1299, %v1491
    %v1493 = vpop.f32.mrb[0].mxu0
    %v1494 = vadd.f32 %v1301, %v1493
    %1495 = vmatprep.mubr.bf16.mxu0 %v753
    %1496 = vmatmul.mubr.bf16.gmra.mrb[0].mxu0 %v752
    %v1497 = vpop.f32.mrb[0].mxu0
    %v1498 = vadd.f32 %v1305, %v1497
    %v1499 = vpop.f32.mrb[0].mxu0
    %v1500 = vadd.f32 %v1307, %v1499
    %v1501 = vpop.f32.mrb[0].mxu0
    %v1502 = vadd.f32 %v1309, %v1501
    %v1503 = vpop.f32.mrb[0].mxu0
    %v1504 = vadd.f32 %v1311, %v1503
    %1505 = vmatprep.mubr.bf16.mxu0 %v757
    %1506 = vmatmul.mubr.bf16.gmra.mrb[0].mxu0 %v756
    %v1507 = vpop.f32.mrb[0].mxu0
    %v1508 = vadd.f32 %v1315, %v1507
    %v1509 = vpop.f32.mrb[0].mxu0
    %v1510 = vadd.f32 %v1317, %v1509
    %v1511 = vpop.f32.mrb[0].mxu0
    %v1512 = vadd.f32 %v1319, %v1511
    %v1513 = vpop.f32.mrb[0].mxu0
    %v1514 = vadd.f32 %v1321, %v1513
    %1515 = vmatprep.mubr.bf16.mxu0 %v761
    %1516 = vmatmul.mubr.bf16.gmra.mrb[0].mxu0 %v760
    %v1517 = vpop.f32.mrb[0].mxu0
    %v1518 = vadd.f32 %v1325, %v1517
    %v1519 = vpop.f32.mrb[0].mxu0
    %v1520 = vadd.f32 %v1327, %v1519
    %v1521 = vpop.f32.mrb[0].mxu0
    %v1522 = vadd.f32 %v1329, %v1521
    %v1523 = vpop.f32.mrb[0].mxu0
    %v1524 = vadd.f32 %v1331, %v1523
    %1525 = vmatprep.mubr.bf16.mxu0 %v765
    %1526 = vmatmul.mubr.bf16.gmra.mrb[0].mxu0 %v764
    %v1527 = vpop.f32.mrb[0].mxu0
    %v1528 = vadd.f32 %v1335, %v1527
    %v1529 = vpop.f32.mrb[0].mxu0
    %v1530 = vadd.f32 %v1337, %v1529
    %v1531 = vpop.f32.mrb[0].mxu0
    %v1532 = vadd.f32 %v1339, %v1531
    %v1533 = vpop.f32.mrb[0].mxu0
    %v1534 = vadd.f32 %v1341, %v1533
    %1535 = vmatprep.mubr.bf16.mxu0 %v769
    %1536 = vmatmul.mubr.bf16.gmra.mrb[0].mxu0 %v768
    %v1537 = vpop.f32.mrb[0].mxu0
    %v1538 = vadd.f32 %v1345, %v1537
    %v1539 = vpop.f32.mrb[0].mxu0
    %v1540 = vadd.f32 %v1347, %v1539
    %v1541 = vpop.f32.mrb[0].mxu0
    %v1542 = vadd.f32 %v1349, %v1541
    %v1543 = vpop.f32.mrb[0].mxu0
    %v1544 = vadd.f32 %v1351, %v1543
    %1545 = vmatprep.mubr.bf16.mxu0 %v773
    %1546 = vmatmul.mubr.bf16.gmra.mrb[0].mxu0 %v772
    %v1547 = vpop.f32.mrb[0].mxu0
    %v1548 = vadd.f32 %v1355, %v1547
    %v1549 = vpop.f32.mrb[0].mxu0
    %v1550 = vadd.f32 %v1357, %v1549
    %v1551 = vpop.f32.mrb[0].mxu0
    %v1552 = vadd.f32 %v1359, %v1551
    %v1553 = vpop.f32.mrb[0].mxu0
    %v1554 = vadd.f32 %v1361, %v1553
    %1555 = vdwg.mxu0
    %v1556 = vmax.f32 %v1398, 0.0
    %v1557 = vmax.f32 %v1400, 0.0
    %v1558 = vmax.f32 %v1402, 0.0
    %v1559 = vmax.f32 %v1404, 0.0
    %v1560 = vmax.f32 %v1408, 0.0
    %v1561 = vmax.f32 %v1410, 0.0
    %v1562 = vmax.f32 %v1412, 0.0
    %v1563 = vmax.f32 %v1414, 0.0
    %v1564 = vmax.f32 %v1418, 0.0
    %v1565 = vmax.f32 %v1420, 0.0
    %v1566 = vmax.f32 %v1422, 0.0
    %v1567 = vmax.f32 %v1424, 0.0
    %v1568 = vmax.f32 %v1428, 0.0
    %v1569 = vmax.f32 %v1430, 0.0
    %v1570 = vmax.f32 %v1432, 0.0
    %v1571 = vmax.f32 %v1434, 0.0
    %v1572 = vmax.f32 %v1438, 0.0
    %v1573 = vmax.f32 %v1440, 0.0
    %v1574 = vmax.f32 %v1442, 0.0
    %v1575 = vmax.f32 %v1444, 0.0
    %v1576 = vmax.f32 %v1448, 0.0
    %v1577 = vmax.f32 %v1450, 0.0
    %v1578 = vmax.f32 %v1452, 0.0
    %v1579 = vmax.f32 %v1454, 0.0
    %v1580 = vmax.f32 %v1458, 0.0
    %v1581 = vmax.f32 %v1460, 0.0
    %v1582 = vmax.f32 %v1462, 0.0
    %v1583 = vmax.f32 %v1464, 0.0
    %v1584 = vmax.f32 %v1468, 0.0
    %v1585 = vmax.f32 %v1470, 0.0
    %v1586 = vmax.f32 %v1472, 0.0
    %v1587 = vmax.f32 %v1474, 0.0
    %v1588 = vmax.f32 %v1478, 0.0
    %v1589 = vmax.f32 %v1480, 0.0
    %v1590 = vmax.f32 %v1482, 0.0
    %v1591 = vmax.f32 %v1484, 0.0
    %v1592 = vmax.f32 %v1488, 0.0
    %v1593 = vmax.f32 %v1490, 0.0
    %v1594 = vmax.f32 %v1492, 0.0
    %v1595 = vmax.f32 %v1494, 0.0
    %v1596 = vmax.f32 %v1498, 0.0
    %v1597 = vmax.f32 %v1500, 0.0
    %v1598 = vmax.f32 %v1502, 0.0
    %v1599 = vmax.f32 %v1504, 0.0
    %v1600 = vmax.f32 %v1508, 0.0
    %v1601 = vmax.f32 %v1510, 0.0
    %v1602 = vmax.f32 %v1512, 0.0
    %v1603 = vmax.f32 %v1514, 0.0
    %v1604 = vmax.f32 %v1518, 0.0
    %v1605 = vmax.f32 %v1520, 0.0
    %v1606 = vmax.f32 %v1522, 0.0
    %v1607 = vmax.f32 %v1524, 0.0
    %v1608 = vmax.f32 %v1528, 0.0
    %v1609 = vmax.f32 %v1530, 0.0
    %v1610 = vmax.f32 %v1532, 0.0
    %v1611 = vmax.f32 %v1534, 0.0
    %v1612 = vmax.f32 %v1538, 0.0
    %v1613 = vmax.f32 %v1540, 0.0
    %v1614 = vmax.f32 %v1542, 0.0
    %v1615 = vmax.f32 %v1544, 0.0
    %v1616 = vmax.f32 %v1548, 0.0
    %v1617 = vmax.f32 %v1550, 0.0
    %v1618 = vmax.f32 %v1552, 0.0
    %v1619 = vmax.f32 %v1554, 0.0
    %v1620 = vpack.c.bf16 %v1558, %v1556
    %v1621 = vpack.c.bf16 %v1559, %v1557
    %v1622 = vpack.c.bf16 %v1562, %v1560
    %v1623 = vpack.c.bf16 %v1563, %v1561
    %v1624 = vpack.c.bf16 %v1566, %v1564
    %v1625 = vpack.c.bf16 %v1567, %v1565
    %v1626 = vpack.c.bf16 %v1570, %v1568
    %v1627 = vpack.c.bf16 %v1571, %v1569
    %v1628 = vpack.c.bf16 %v1574, %v1572
    %v1629 = vpack.c.bf16 %v1575, %v1573
    %v1630 = vpack.c.bf16 %v1578, %v1576
    %v1631 = vpack.c.bf16 %v1579, %v1577
    %v1632 = vpack.c.bf16 %v1582, %v1580
    %v1633 = vpack.c.bf16 %v1583, %v1581
    %v1634 = vpack.c.bf16 %v1586, %v1584
    %v1635 = vpack.c.bf16 %v1587, %v1585
    %v1636 = vpack.c.bf16 %v1590, %v1588
    %v1637 = vpack.c.bf16 %v1591, %v1589
    %v1638 = vpack.c.bf16 %v1594, %v1592
    %v1639 = vpack.c.bf16 %v1595, %v1593
    %v1640 = vpack.c.bf16 %v1598, %v1596
    %v1641 = vpack.c.bf16 %v1599, %v1597
    %v1642 = vpack.c.bf16 %v1602, %v1600
    %v1643 = vpack.c.bf16 %v1603, %v1601
    %v1644 = vpack.c.bf16 %v1606, %v1604
    %v1645 = vpack.c.bf16 %v1607, %v1605
    %v1646 = vpack.c.bf16 %v1610, %v1608
    %v1647 = vpack.c.bf16 %v1611, %v1609
    %v1648 = vpack.c.bf16 %v1614, %v1612
    %v1649 = vpack.c.bf16 %v1615, %v1613
    %v1650 = vpack.c.bf16 %v1618, %v1616
    %v1651 = vpack.c.bf16 %v1619, %v1617
    %v1652 = vld [vmem:[#allocation7] sm:$0xf]
    %v1653 = vld [vmem:[#allocation7 + $0x4] sm:$0xf]
    %v1654 = vld [vmem:[#allocation7 + $0x8] sm:$0xf]
    %v1655 = vld [vmem:[#allocation7 + $0xc] sm:$0xf]
    %v1656 = vld [vmem:[#allocation7 + $0x10] sm:$0xf]
    %v1657 = vld [vmem:[#allocation7 + $0x14] sm:$0xf]
    %v1658 = vld [vmem:[#allocation7 + $0x18] sm:$0xf]
    %v1659 = vld [vmem:[#allocation7 + $0x1c] sm:$0xf]
    %v1660 = vld [vmem:[#allocation7 + $0x20] sm:$0xf]
    %v1661 = vld [vmem:[#allocation7 + $0x24] sm:$0xf]
    %v1662 = vld [vmem:[#allocation7 + $0x28] sm:$0xf]
    %v1663 = vld [vmem:[#allocation7 + $0x2c] sm:$0xf]
    %v1664 = vld [vmem:[#allocation7 + $0x30] sm:$0xf]
    %v1665 = vld [vmem:[#allocation7 + $0x34] sm:$0xf]
    %v1666 = vld [vmem:[#allocation7 + $0x38] sm:$0xf]
    %v1667 = vld [vmem:[#allocation7 + $0x3c] sm:$0xf]
    %v1668 = vld [vmem:[#allocation7 + $0x40] sm:$0xf]
    %v1669 = vld [vmem:[#allocation7 + $0x44] sm:$0xf]
    %v1670 = vld [vmem:[#allocation7 + $0x48] sm:$0xf]
    %v1671 = vld [vmem:[#allocation7 + $0x4c] sm:$0xf]
    %v1672 = vld [vmem:[#allocation7 + $0x50] sm:$0xf]
    %v1673 = vld [vmem:[#allocation7 + $0x54] sm:$0xf]
    %v1674 = vld [vmem:[#allocation7 + $0x58] sm:$0xf]
    %v1675 = vld [vmem:[#allocation7 + $0x5c] sm:$0xf]
    %v1676 = vld [vmem:[#allocation7 + $0x60] sm:$0xf]
    %v1677 = vld [vmem:[#allocation7 + $0x64] sm:$0xf]
    %v1678 = vld [vmem:[#allocation7 + $0x68] sm:$0xf]
    %v1679 = vld [vmem:[#allocation7 + $0x6c] sm:$0xf]
    %v1680 = vld [vmem:[#allocation7 + $0x70] sm:$0xf]
    %v1681 = vld [vmem:[#allocation7 + $0x74] sm:$0xf]
    %v1682 = vld [vmem:[#allocation7 + $0x78] sm:$0xf]
    %v1683 = vld [vmem:[#allocation7 + $0x7c] sm:$0xf]
    %v1684 = vld [vmem:[%s4] sm:$0x1]
    %v1686 = vlaneseq
    %v1687 = vshrl.u32 %v1686, 7
    %v1688 = vsub.s32 0, %v1687
    %v1689 = vrot.slane %v1684, %v1688
    %v1723 = vunpack.c.l.b16 %v1652
    %v1724 = vunpack.c.l.b16 %v1653
    %v1725 = vunpack.c.l.b16 %v1654
    %v1726 = vunpack.c.l.b16 %v1655
    %v1727 = vunpack.c.l.b16 %v1656
    %v1728 = vunpack.c.l.b16 %v1657
    %v1729 = vunpack.c.l.b16 %v1658
    %v1730 = vunpack.c.l.b16 %v1659
    %v1731 = vunpack.c.l.b16 %v1660
    %v1732 = vunpack.c.l.b16 %v1661
    %v1733 = vunpack.c.l.b16 %v1662
    %v1734 = vunpack.c.l.b16 %v1663
    %v1735 = vunpack.c.l.b16 %v1664
    %v1736 = vunpack.c.l.b16 %v1665
    %v1737 = vunpack.c.l.b16 %v1666
    %v1738 = vunpack.c.l.b16 %v1667
    %v1739 = vunpack.c.l.b16 %v1668
    %v1740 = vunpack.c.l.b16 %v1669
    %v1741 = vunpack.c.l.b16 %v1670
    %v1742 = vunpack.c.l.b16 %v1671
    %v1743 = vunpack.c.l.b16 %v1672
    %v1744 = vunpack.c.l.b16 %v1673
    %v1745 = vunpack.c.l.b16 %v1674
    %v1746 = vunpack.c.l.b16 %v1675
    %v1747 = vunpack.c.l.b16 %v1676
    %v1748 = vunpack.c.l.b16 %v1677
    %v1749 = vunpack.c.l.b16 %v1678
    %v1750 = vunpack.c.l.b16 %v1679
    %v1751 = vunpack.c.l.b16 %v1680
    %v1752 = vunpack.c.l.b16 %v1681
    %v1753 = vunpack.c.l.b16 %v1682
    %v1754 = vunpack.c.l.b16 %v1683
    %v1755 = vpack.c.b16 %v1724, %v1723
    %v1756 = vpack.c.b16 %v1726, %v1725
    %v1757 = vpack.c.b16 %v1728, %v1727
    %v1758 = vpack.c.b16 %v1730, %v1729
    %v1759 = vpack.c.b16 %v1732, %v1731
    %v1760 = vpack.c.b16 %v1734, %v1733
    %v1761 = vpack.c.b16 %v1736, %v1735
    %v1762 = vpack.c.b16 %v1738, %v1737
    %v1763 = vpack.c.b16 %v1740, %v1739
    %v1764 = vpack.c.b16 %v1742, %v1741
    %v1765 = vpack.c.b16 %v1744, %v1743
    %v1766 = vpack.c.b16 %v1746, %v1745
    %v1767 = vpack.c.b16 %v1748, %v1747
    %v1768 = vpack.c.b16 %v1750, %v1749
    %v1769 = vpack.c.b16 %v1752, %v1751
    %v1770 = vpack.c.b16 %v1754, %v1753
    %1787 = vmatprep.subr.bf16.mxu0 0
    %1788 = vmatpush1.bf16.msra.mxu0 %v1755
    %1789 = vmatprep.subr.bf16.mxu0 0
    %1790 = vmatpush1.bf16.msra.mxu0 %v1756
    %1791 = vmatprep.subr.bf16.mxu0 0
    %1792 = vmatpush1.bf16.msra.mxu0 %v1757
    %1793 = vmatprep.subr.bf16.mxu0 0
    %1794 = vmatpush1.bf16.msra.mxu0 %v1758
    %1795 = vmatprep.subr.bf16.mxu0 0
    %1796 = vmatpush1.bf16.msra.mxu0 %v1759
    %1797 = vmatprep.subr.bf16.mxu0 0
    %1798 = vmatpush1.bf16.msra.mxu0 %v1760
    %1799 = vmatprep.subr.bf16.mxu0 0
    %1800 = vmatpush1.bf16.msra.mxu0 %v1761
    %1801 = vmatprep.subr.bf16.mxu0 0
    %1802 = vmatpush1.bf16.msra.mxu0 %v1762
    %1803 = vmatprep.subr.bf16.mxu0 0
    %1804 = vmatpush1.bf16.msra.mxu0 %v1763
    %1805 = vmatprep.subr.bf16.mxu0 0
    %1806 = vmatpush1.bf16.msra.mxu0 %v1764
    %1807 = vmatprep.subr.bf16.mxu0 0
    %1808 = vmatpush1.bf16.msra.mxu0 %v1765
    %1809 = vmatprep.subr.bf16.mxu0 0
    %1810 = vmatpush1.bf16.msra.mxu0 %v1766
    %1811 = vmatprep.subr.bf16.mxu0 0
    %1812 = vmatpush1.bf16.msra.mxu0 %v1767
    %1813 = vmatprep.subr.bf16.mxu0 0
    %1814 = vmatpush1.bf16.msra.mxu0 %v1768
    %1815 = vmatprep.subr.bf16.mxu0 0
    %1816 = vmatpush1.bf16.msra.mxu0 %v1769
    %1817 = vmatprep.subr.bf16.mxu0 0
    %1818 = vmatpush1.bf16.msra.mxu0 %v1770
    %1819 = vmatprep.mubr.bf16.mxu0 %v1621
    %1820 = vmatmul.mubr.bf16.gmra.mrb[0].mxu0 %v1620
    %v1821 = vpop.f32.mrb[0].mxu0
    %v1822 = vadd.f32 %v1689, %v1821
    %v1823 = vpop.f32.mrb[0].mxu0
    %v1824 = vpop.f32.mrb[0].mxu0
    %v1825 = vadd.f32 %v1689, %v1824
    %v1826 = vpop.f32.mrb[0].mxu0
    %1827 = vmatprep.mubr.bf16.mxu0 %v1623
    %1828 = vmatmul.mubr.bf16.gmra.mrb[0].mxu0 %v1622
    %v1829 = vpop.f32.mrb[0].mxu0
    %v1830 = vadd.f32 %v1689, %v1829
    %v1831 = vpop.f32.mrb[0].mxu0
    %v1832 = vpop.f32.mrb[0].mxu0
    %v1833 = vadd.f32 %v1689, %v1832
    %v1834 = vpop.f32.mrb[0].mxu0
    %1835 = vmatprep.mubr.bf16.mxu0 %v1625
    %1836 = vmatmul.mubr.bf16.gmra.mrb[0].mxu0 %v1624
    %v1837 = vpop.f32.mrb[0].mxu0
    %v1838 = vadd.f32 %v1689, %v1837
    %v1839 = vpop.f32.mrb[0].mxu0
    %v1840 = vpop.f32.mrb[0].mxu0
    %v1841 = vadd.f32 %v1689, %v1840
    %v1842 = vpop.f32.mrb[0].mxu0
    %1843 = vmatprep.mubr.bf16.mxu0 %v1627
    %1844 = vmatmul.mubr.bf16.gmra.mrb[0].mxu0 %v1626
    %v1845 = vpop.f32.mrb[0].mxu0
    %v1846 = vadd.f32 %v1689, %v1845
    %v1847 = vpop.f32.mrb[0].mxu0
    %v1848 = vpop.f32.mrb[0].mxu0
    %v1849 = vadd.f32 %v1689, %v1848
    %v1850 = vpop.f32.mrb[0].mxu0
    %1851 = vmatprep.mubr.bf16.mxu0 %v1629
    %1852 = vmatmul.mubr.bf16.gmra.mrb[0].mxu0 %v1628
    %v1853 = vpop.f32.mrb[0].mxu0
    %v1854 = vadd.f32 %v1689, %v1853
    %v1855 = vpop.f32.mrb[0].mxu0
    %v1856 = vpop.f32.mrb[0].mxu0
    %v1857 = vadd.f32 %v1689, %v1856
    %v1858 = vpop.f32.mrb[0].mxu0
    %1859 = vmatprep.mubr.bf16.mxu0 %v1631
    %1860 = vmatmul.mubr.bf16.gmra.mrb[0].mxu0 %v1630
    %v1861 = vpop.f32.mrb[0].mxu0
    %v1862 = vadd.f32 %v1689, %v1861
    %v1863 = vpop.f32.mrb[0].mxu0
    %v1864 = vpop.f32.mrb[0].mxu0
    %v1865 = vadd.f32 %v1689, %v1864
    %v1866 = vpop.f32.mrb[0].mxu0
    %1867 = vmatprep.mubr.bf16.mxu0 %v1633
    %1868 = vmatmul.mubr.bf16.gmra.mrb[0].mxu0 %v1632
    %v1869 = vpop.f32.mrb[0].mxu0
    %v1870 = vadd.f32 %v1689, %v1869
    %v1871 = vpop.f32.mrb[0].mxu0
    %v1872 = vpop.f32.mrb[0].mxu0
    %v1873 = vadd.f32 %v1689, %v1872
    %v1874 = vpop.f32.mrb[0].mxu0
    %1875 = vmatprep.mubr.bf16.mxu0 %v1635
    %1876 = vmatmul.mubr.bf16.gmra.mrb[0].mxu0 %v1634
    %v1877 = vpop.f32.mrb[0].mxu0
    %v1878 = vadd.f32 %v1689, %v1877
    %v1879 = vpop.f32.mrb[0].mxu0
    %v1880 = vpop.f32.mrb[0].mxu0
    %v1881 = vadd.f32 %v1689, %v1880
    %v1882 = vpop.f32.mrb[0].mxu0
    %1883 = vmatprep.mubr.bf16.mxu0 %v1637
    %1884 = vmatmul.mubr.bf16.gmra.mrb[0].mxu0 %v1636
    %v1885 = vpop.f32.mrb[0].mxu0
    %v1886 = vadd.f32 %v1689, %v1885
    %v1887 = vpop.f32.mrb[0].mxu0
    %v1888 = vpop.f32.mrb[0].mxu0
    %v1889 = vadd.f32 %v1689, %v1888
    %v1890 = vpop.f32.mrb[0].mxu0
    %1891 = vmatprep.mubr.bf16.mxu0 %v1639
    %1892 = vmatmul.mubr.bf16.gmra.mrb[0].mxu0 %v1638
    %v1893 = vpop.f32.mrb[0].mxu0
    %v1894 = vadd.f32 %v1689, %v1893
    %v1895 = vpop.f32.mrb[0].mxu0
    %v1896 = vpop.f32.mrb[0].mxu0
    %v1897 = vadd.f32 %v1689, %v1896
    %v1898 = vpop.f32.mrb[0].mxu0
    %1899 = vmatprep.mubr.bf16.mxu0 %v1641
    %1900 = vmatmul.mubr.bf16.gmra.mrb[0].mxu0 %v1640
    %v1901 = vpop.f32.mrb[0].mxu0
    %v1902 = vadd.f32 %v1689, %v1901
    %v1903 = vpop.f32.mrb[0].mxu0
    %v1904 = vpop.f32.mrb[0].mxu0
    %v1905 = vadd.f32 %v1689, %v1904
    %v1906 = vpop.f32.mrb[0].mxu0
    %1907 = vmatprep.mubr.bf16.mxu0 %v1643
    %1908 = vmatmul.mubr.bf16.gmra.mrb[0].mxu0 %v1642
    %v1909 = vpop.f32.mrb[0].mxu0
    %v1910 = vadd.f32 %v1689, %v1909
    %v1911 = vpop.f32.mrb[0].mxu0
    %v1912 = vpop.f32.mrb[0].mxu0
    %v1913 = vadd.f32 %v1689, %v1912
    %v1914 = vpop.f32.mrb[0].mxu0
    %1915 = vmatprep.mubr.bf16.mxu0 %v1645
    %1916 = vmatmul.mubr.bf16.gmra.mrb[0].mxu0 %v1644
    %v1917 = vpop.f32.mrb[0].mxu0
    %v1918 = vadd.f32 %v1689, %v1917
    %v1919 = vpop.f32.mrb[0].mxu0
    %v1920 = vpop.f32.mrb[0].mxu0
    %v1921 = vadd.f32 %v1689, %v1920
    %v1922 = vpop.f32.mrb[0].mxu0
    %1923 = vmatprep.mubr.bf16.mxu0 %v1647
    %1924 = vmatmul.mubr.bf16.gmra.mrb[0].mxu0 %v1646
    %v1925 = vpop.f32.mrb[0].mxu0
    %v1926 = vadd.f32 %v1689, %v1925
    %v1927 = vpop.f32.mrb[0].mxu0
    %v1928 = vpop.f32.mrb[0].mxu0
    %v1929 = vadd.f32 %v1689, %v1928
    %v1930 = vpop.f32.mrb[0].mxu0
    %1931 = vmatprep.mubr.bf16.mxu0 %v1649
    %1932 = vmatmul.mubr.bf16.gmra.mrb[0].mxu0 %v1648
    %v1933 = vpop.f32.mrb[0].mxu0
    %v1934 = vadd.f32 %v1689, %v1933
    %v1935 = vpop.f32.mrb[0].mxu0
    %v1936 = vpop.f32.mrb[0].mxu0
    %v1937 = vadd.f32 %v1689, %v1936
    %v1938 = vpop.f32.mrb[0].mxu0
    %1939 = vmatprep.mubr.bf16.mxu0 %v1651
    %1940 = vmatmul.mubr.bf16.gmra.mrb[0].mxu0 %v1650
    %v1941 = vpop.f32.mrb[0].mxu0
    %v1942 = vadd.f32 %v1689, %v1941
    %v1943 = vpop.f32.mrb[0].mxu0
    %v1944 = vpop.f32.mrb[0].mxu0
    %v1945 = vadd.f32 %v1689, %v1944
    %v1946 = vpop.f32.mrb[0].mxu0
    %1947 = vdwg.mxu0
    %v1948 = vpack.c.bf16 %v1825, %v1822
    %v1949 = vpack.c.bf16 %v1833, %v1830
    %v1950 = vpack.c.bf16 %v1841, %v1838
    %v1951 = vpack.c.bf16 %v1849, %v1846
    %v1952 = vpack.c.bf16 %v1857, %v1854
    %v1953 = vpack.c.bf16 %v1865, %v1862
    %v1954 = vpack.c.bf16 %v1873, %v1870
    %v1955 = vpack.c.bf16 %v1881, %v1878
    %v1956 = vpack.c.bf16 %v1889, %v1886
    %v1957 = vpack.c.bf16 %v1897, %v1894
    %v1958 = vpack.c.bf16 %v1905, %v1902
    %v1959 = vpack.c.bf16 %v1913, %v1910
    %v1960 = vpack.c.bf16 %v1921, %v1918
    %v1961 = vpack.c.bf16 %v1929, %v1926
    %v1962 = vpack.c.bf16 %v1937, %v1934
    %v1963 = vpack.c.bf16 %v1945, %v1942
    %v1964 = vld [vmem:[#allocation8] sm:$0xff]
    %v1965 = vld [vmem:[#allocation8 + $0x8] sm:$0xff]
    %v1966 = vld [vmem:[#allocation8 + $0x10] sm:$0xff]
    %v1967 = vld [vmem:[#allocation8 + $0x18] sm:$0xff]
    %v1968 = vld [vmem:[#allocation8 + $0x20] sm:$0xff]
    %v1969 = vld [vmem:[#allocation8 + $0x28] sm:$0xff]
    %v1970 = vld [vmem:[#allocation8 + $0x30] sm:$0xff]
    %v1971 = vld [vmem:[#allocation8 + $0x38] sm:$0xff]
    %v1972 = vld [vmem:[#allocation8 + $0x40] sm:$0xff]
    %v1973 = vld [vmem:[#allocation8 + $0x48] sm:$0xff]
    %v1974 = vld [vmem:[#allocation8 + $0x50] sm:$0xff]
    %v1975 = vld [vmem:[#allocation8 + $0x58] sm:$0xff]
    %v1976 = vld [vmem:[#allocation8 + $0x60] sm:$0xff]
    %v1977 = vld [vmem:[#allocation8 + $0x68] sm:$0xff]
    %v1978 = vld [vmem:[#allocation8 + $0x70] sm:$0xff]
    %v1979 = vld [vmem:[#allocation8 + $0x78] sm:$0xff]
    %v1980 = vld [vmem:[%s6] sm:$0x3]
    %v1982 = vlaneseq
    %v1983 = vshrl.u32 %v1982, 7
    %v1984 = vsub.s32 0, %v1983
    %v1985 = vrot.slane %v1980, %v1984
    %v1986 = vlaneseq
    %v1987 = vshrl.u32 %v1986, 7
    %v1988 = vsub.s32 1, %v1987
    %v1989 = vrot.slane %v1980, %v1988
    %v2008 = vunpack.c.l.b16 %v1964
    %v2009 = vunpack.c.h.b16 %v1964
    %v2010 = vunpack.c.l.b16 %v1965
    %v2011 = vunpack.c.h.b16 %v1965
    %v2012 = vunpack.c.l.b16 %v1966
    %v2013 = vunpack.c.h.b16 %v1966
    %v2014 = vunpack.c.l.b16 %v1967
    %v2015 = vunpack.c.h.b16 %v1967
    %v2016 = vunpack.c.l.b16 %v1968
    %v2017 = vunpack.c.h.b16 %v1968
    %v2018 = vunpack.c.l.b16 %v1969
    %v2019 = vunpack.c.h.b16 %v1969
    %v2020 = vunpack.c.l.b16 %v1970
    %v2021 = vunpack.c.h.b16 %v1970
    %v2022 = vunpack.c.l.b16 %v1971
    %v2023 = vunpack.c.h.b16 %v1971
    %v2024 = vunpack.c.l.b16 %v1972
    %v2025 = vunpack.c.h.b16 %v1972
    %v2026 = vunpack.c.l.b16 %v1973
    %v2027 = vunpack.c.h.b16 %v1973
    %v2028 = vunpack.c.l.b16 %v1974
    %v2029 = vunpack.c.h.b16 %v1974
    %v2030 = vunpack.c.l.b16 %v1975
    %v2031 = vunpack.c.h.b16 %v1975
    %v2032 = vunpack.c.l.b16 %v1976
    %v2033 = vunpack.c.h.b16 %v1976
    %v2034 = vunpack.c.l.b16 %v1977
    %v2035 = vunpack.c.h.b16 %v1977
    %v2036 = vunpack.c.l.b16 %v1978
    %v2037 = vunpack.c.h.b16 %v1978
    %v2038 = vunpack.c.l.b16 %v1979
    %v2039 = vunpack.c.h.b16 %v1979
    %v2040 = vpack.c.b16 %v2010, %v2008
    %v2041 = vpack.c.b16 %v2011, %v2009
    %v2042 = vpack.c.b16 %v2014, %v2012
    %v2043 = vpack.c.b16 %v2015, %v2013
    %v2044 = vpack.c.b16 %v2018, %v2016
    %v2045 = vpack.c.b16 %v2019, %v2017
    %v2046 = vpack.c.b16 %v2022, %v2020
    %v2047 = vpack.c.b16 %v2023, %v2021
    %v2048 = vpack.c.b16 %v2026, %v2024
    %v2049 = vpack.c.b16 %v2027, %v2025
    %v2050 = vpack.c.b16 %v2030, %v2028
    %v2051 = vpack.c.b16 %v2031, %v2029
    %v2052 = vpack.c.b16 %v2034, %v2032
    %v2053 = vpack.c.b16 %v2035, %v2033
    %v2054 = vpack.c.b16 %v2038, %v2036
    %v2055 = vpack.c.b16 %v2039, %v2037
    %2072 = vmatprep.subr.bf16.mxu0 %v2041
    %2073 = vmatpush1.bf16.msra.mxu0 %v2040
    %2074 = vmatprep.subr.bf16.mxu0 %v2043
    %2075 = vmatpush1.bf16.msra.mxu0 %v2042
    %2076 = vmatprep.subr.bf16.mxu0 %v2045
    %2077 = vmatpush1.bf16.msra.mxu0 %v2044
    %2078 = vmatprep.subr.bf16.mxu0 %v2047
    %2079 = vmatpush1.bf16.msra.mxu0 %v2046
    %2080 = vmatprep.subr.bf16.mxu0 %v2049
    %2081 = vmatpush1.bf16.msra.mxu0 %v2048
    %2082 = vmatprep.subr.bf16.mxu0 %v2051
    %2083 = vmatpush1.bf16.msra.mxu0 %v2050
    %2084 = vmatprep.subr.bf16.mxu0 %v2053
    %2085 = vmatpush1.bf16.msra.mxu0 %v2052
    %2086 = vmatprep.subr.bf16.mxu0 %v2055
    %2087 = vmatpush1.bf16.msra.mxu0 %v2054
    %2088 = vmatprep.subr.bf16.mxu0 0
    %2089 = vmatpush1.bf16.msra.mxu0 0
    %2090 = vmatprep.subr.bf16.mxu0 0
    %2091 = vmatpush1.bf16.msra.mxu0 0
    %2092 = vmatprep.subr.bf16.mxu0 0
    %2093 = vmatpush1.bf16.msra.mxu0 0
    %2094 = vmatprep.subr.bf16.mxu0 0
    %2095 = vmatpush1.bf16.msra.mxu0 0
    %2096 = vmatprep.subr.bf16.mxu0 0
    %2097 = vmatpush1.bf16.msra.mxu0 0
    %2098 = vmatprep.subr.bf16.mxu0 0
    %2099 = vmatpush1.bf16.msra.mxu0 0
    %2100 = vmatprep.subr.bf16.mxu0 0
    %2101 = vmatpush1.bf16.msra.mxu0 0
    %2102 = vmatprep.subr.bf16.mxu0 0
    %2103 = vmatpush1.bf16.msra.mxu0 0
    %2104 = vmatprep.mubr.bf16.mxu0 0
    %2105 = vmatmul.mubr.bf16.gmra.mrb[0].mxu0 %v1948
    %v2106 = vpop.f32.mrb[0].mxu0
    %v2107 = vadd.f32 %v1985, %v2106
    %v2108 = vpop.f32.mrb[0].mxu0
    %v2109 = vadd.f32 %v1989, %v2108
    %v2110 = vpop.f32.mrb[0].mxu0
    %v2111 = vadd.f32 %v1985, %v2110
    %v2112 = vpop.f32.mrb[0].mxu0
    %v2113 = vadd.f32 %v1989, %v2112
    %2114 = vmatprep.mubr.bf16.mxu0 0
    %2115 = vmatmul.mubr.bf16.gmra.mrb[0].mxu0 %v1949
    %v2116 = vpop.f32.mrb[0].mxu0
    %v2117 = vadd.f32 %v1985, %v2116
    %v2118 = vpop.f32.mrb[0].mxu0
    %v2119 = vadd.f32 %v1989, %v2118
    %v2120 = vpop.f32.mrb[0].mxu0
    %v2121 = vadd.f32 %v1985, %v2120
    %v2122 = vpop.f32.mrb[0].mxu0
    %v2123 = vadd.f32 %v1989, %v2122
    %2124 = vmatprep.mubr.bf16.mxu0 0
    %2125 = vmatmul.mubr.bf16.gmra.mrb[0].mxu0 %v1950
    %v2126 = vpop.f32.mrb[0].mxu0
    %v2127 = vadd.f32 %v1985, %v2126
    %v2128 = vpop.f32.mrb[0].mxu0
    %v2129 = vadd.f32 %v1989, %v2128
    %v2130 = vpop.f32.mrb[0].mxu0
    %v2131 = vadd.f32 %v1985, %v2130
    %v2132 = vpop.f32.mrb[0].mxu0
    %v2133 = vadd.f32 %v1989, %v2132
    %2134 = vmatprep.mubr.bf16.mxu0 0
    %2135 = vmatmul.mubr.bf16.gmra.mrb[0].mxu0 %v1951
    %v2136 = vpop.f32.mrb[0].mxu0
    %v2137 = vadd.f32 %v1985, %v2136
    %v2138 = vpop.f32.mrb[0].mxu0
    %v2139 = vadd.f32 %v1989, %v2138
    %v2140 = vpop.f32.mrb[0].mxu0
    %v2141 = vadd.f32 %v1985, %v2140
    %v2142 = vpop.f32.mrb[0].mxu0
    %v2143 = vadd.f32 %v1989, %v2142
    %2144 = vmatprep.mubr.bf16.mxu0 0
    %2145 = vmatmul.mubr.bf16.gmra.mrb[0].mxu0 %v1952
    %v2146 = vpop.f32.mrb[0].mxu0
    %v2147 = vadd.f32 %v1985, %v2146
    %v2148 = vpop.f32.mrb[0].mxu0
    %v2149 = vadd.f32 %v1989, %v2148
    %v2150 = vpop.f32.mrb[0].mxu0
    %v2151 = vadd.f32 %v1985, %v2150
    %v2152 = vpop.f32.mrb[0].mxu0
    %v2153 = vadd.f32 %v1989, %v2152
    %2154 = vmatprep.mubr.bf16.mxu0 0
    %2155 = vmatmul.mubr.bf16.gmra.mrb[0].mxu0 %v1953
    %v2156 = vpop.f32.mrb[0].mxu0
    %v2157 = vadd.f32 %v1985, %v2156
    %v2158 = vpop.f32.mrb[0].mxu0
    %v2159 = vadd.f32 %v1989, %v2158
    %v2160 = vpop.f32.mrb[0].mxu0
    %v2161 = vadd.f32 %v1985, %v2160
    %v2162 = vpop.f32.mrb[0].mxu0
    %v2163 = vadd.f32 %v1989, %v2162
    %2164 = vmatprep.mubr.bf16.mxu0 0
    %2165 = vmatmul.mubr.bf16.gmra.mrb[0].mxu0 %v1954
    %v2166 = vpop.f32.mrb[0].mxu0
    %v2167 = vadd.f32 %v1985, %v2166
    %v2168 = vpop.f32.mrb[0].mxu0
    %v2169 = vadd.f32 %v1989, %v2168
    %v2170 = vpop.f32.mrb[0].mxu0
    %v2171 = vadd.f32 %v1985, %v2170
    %v2172 = vpop.f32.mrb[0].mxu0
    %v2173 = vadd.f32 %v1989, %v2172
    %2174 = vmatprep.mubr.bf16.mxu0 0
    %2175 = vmatmul.mubr.bf16.gmra.mrb[0].mxu0 %v1955
    %v2176 = vpop.f32.mrb[0].mxu0
    %v2177 = vadd.f32 %v1985, %v2176
    %v2178 = vpop.f32.mrb[0].mxu0
    %v2179 = vadd.f32 %v1989, %v2178
    %v2180 = vpop.f32.mrb[0].mxu0
    %v2181 = vadd.f32 %v1985, %v2180
    %v2182 = vpop.f32.mrb[0].mxu0
    %v2183 = vadd.f32 %v1989, %v2182
    %2184 = vmatprep.mubr.bf16.mxu0 0
    %2185 = vmatmul.mubr.bf16.gmra.mrb[0].mxu0 %v1956
    %v2186 = vpop.f32.mrb[0].mxu0
    %v2187 = vadd.f32 %v1985, %v2186
    %v2188 = vpop.f32.mrb[0].mxu0
    %v2189 = vadd.f32 %v1989, %v2188
    %v2190 = vpop.f32.mrb[0].mxu0
    %v2191 = vadd.f32 %v1985, %v2190
    %v2192 = vpop.f32.mrb[0].mxu0
    %v2193 = vadd.f32 %v1989, %v2192
    %2194 = vmatprep.mubr.bf16.mxu0 0
    %2195 = vmatmul.mubr.bf16.gmra.mrb[0].mxu0 %v1957
    %v2196 = vpop.f32.mrb[0].mxu0
    %v2197 = vadd.f32 %v1985, %v2196
    %v2198 = vpop.f32.mrb[0].mxu0
    %v2199 = vadd.f32 %v1989, %v2198
    %v2200 = vpop.f32.mrb[0].mxu0
    %v2201 = vadd.f32 %v1985, %v2200
    %v2202 = vpop.f32.mrb[0].mxu0
    %v2203 = vadd.f32 %v1989, %v2202
    %2204 = vmatprep.mubr.bf16.mxu0 0
    %2205 = vmatmul.mubr.bf16.gmra.mrb[0].mxu0 %v1958
    %v2206 = vpop.f32.mrb[0].mxu0
    %v2207 = vadd.f32 %v1985, %v2206
    %v2208 = vpop.f32.mrb[0].mxu0
    %v2209 = vadd.f32 %v1989, %v2208
    %v2210 = vpop.f32.mrb[0].mxu0
    %v2211 = vadd.f32 %v1985, %v2210
    %v2212 = vpop.f32.mrb[0].mxu0
    %v2213 = vadd.f32 %v1989, %v2212
    %2214 = vmatprep.mubr.bf16.mxu0 0
    %2215 = vmatmul.mubr.bf16.gmra.mrb[0].mxu0 %v1959
    %v2216 = vpop.f32.mrb[0].mxu0
    %v2217 = vadd.f32 %v1985, %v2216
    %v2218 = vpop.f32.mrb[0].mxu0
    %v2219 = vadd.f32 %v1989, %v2218
    %v2220 = vpop.f32.mrb[0].mxu0
    %v2221 = vadd.f32 %v1985, %v2220
    %v2222 = vpop.f32.mrb[0].mxu0
    %v2223 = vadd.f32 %v1989, %v2222
    %2224 = vmatprep.mubr.bf16.mxu0 0
    %2225 = vmatmul.mubr.bf16.gmra.mrb[0].mxu0 %v1960
    %v2226 = vpop.f32.mrb[0].mxu0
    %v2227 = vadd.f32 %v1985, %v2226
    %v2228 = vpop.f32.mrb[0].mxu0
    %v2229 = vadd.f32 %v1989, %v2228
    %v2230 = vpop.f32.mrb[0].mxu0
    %v2231 = vadd.f32 %v1985, %v2230
    %v2232 = vpop.f32.mrb[0].mxu0
    %v2233 = vadd.f32 %v1989, %v2232
    %2234 = vmatprep.mubr.bf16.mxu0 0
    %2235 = vmatmul.mubr.bf16.gmra.mrb[0].mxu0 %v1961
    %v2236 = vpop.f32.mrb[0].mxu0
    %v2237 = vadd.f32 %v1985, %v2236
    %v2238 = vpop.f32.mrb[0].mxu0
    %v2239 = vadd.f32 %v1989, %v2238
    %v2240 = vpop.f32.mrb[0].mxu0
    %v2241 = vadd.f32 %v1985, %v2240
    %v2242 = vpop.f32.mrb[0].mxu0
    %v2243 = vadd.f32 %v1989, %v2242
    %2244 = vmatprep.mubr.bf16.mxu0 0
    %2245 = vmatmul.mubr.bf16.gmra.mrb[0].mxu0 %v1962
    %v2246 = vpop.f32.mrb[0].mxu0
    %v2247 = vadd.f32 %v1985, %v2246
    %v2248 = vpop.f32.mrb[0].mxu0
    %v2249 = vadd.f32 %v1989, %v2248
    %v2250 = vpop.f32.mrb[0].mxu0
    %v2251 = vadd.f32 %v1985, %v2250
    %v2252 = vpop.f32.mrb[0].mxu0
    %v2253 = vadd.f32 %v1989, %v2252
    %2254 = vmatprep.mubr.bf16.mxu0 0
    %2255 = vmatmul.mubr.bf16.gmra.mrb[0].mxu0 %v1963
    %v2256 = vpop.f32.mrb[0].mxu0
    %v2257 = vadd.f32 %v1985, %v2256
    %v2258 = vpop.f32.mrb[0].mxu0
    %v2259 = vadd.f32 %v1989, %v2258
    %v2260 = vpop.f32.mrb[0].mxu0
    %v2261 = vadd.f32 %v1985, %v2260
    %v2262 = vpop.f32.mrb[0].mxu0
    %v2263 = vadd.f32 %v1989, %v2262
    %2264 = vdwg.mxu0
    %v2265 = vmax.f32 %v2107, 0.0
    %v2266 = vmax.f32 %v2109, 0.0
    %v2267 = vmax.f32 %v2111, 0.0
    %v2268 = vmax.f32 %v2113, 0.0
    %v2269 = vmax.f32 %v2117, 0.0
    %v2270 = vmax.f32 %v2119, 0.0
    %v2271 = vmax.f32 %v2121, 0.0
    %v2272 = vmax.f32 %v2123, 0.0
    %v2273 = vmax.f32 %v2127, 0.0
    %v2274 = vmax.f32 %v2129, 0.0
    %v2275 = vmax.f32 %v2131, 0.0
    %v2276 = vmax.f32 %v2133, 0.0
    %v2277 = vmax.f32 %v2137, 0.0
    %v2278 = vmax.f32 %v2139, 0.0
    %v2279 = vmax.f32 %v2141, 0.0
    %v2280 = vmax.f32 %v2143, 0.0
    %v2281 = vmax.f32 %v2147, 0.0
    %v2282 = vmax.f32 %v2149, 0.0
    %v2283 = vmax.f32 %v2151, 0.0
    %v2284 = vmax.f32 %v2153, 0.0
    %v2285 = vmax.f32 %v2157, 0.0
    %v2286 = vmax.f32 %v2159, 0.0
    %v2287 = vmax.f32 %v2161, 0.0
    %v2288 = vmax.f32 %v2163, 0.0
    %v2289 = vmax.f32 %v2167, 0.0
    %v2290 = vmax.f32 %v2169, 0.0
    %v2291 = vmax.f32 %v2171, 0.0
    %v2292 = vmax.f32 %v2173, 0.0
    %v2293 = vmax.f32 %v2177, 0.0
    %v2294 = vmax.f32 %v2179, 0.0
    %v2295 = vmax.f32 %v2181, 0.0
    %v2296 = vmax.f32 %v2183, 0.0
    %v2297 = vmax.f32 %v2187, 0.0
    %v2298 = vmax.f32 %v2189, 0.0
    %v2299 = vmax.f32 %v2191, 0.0
    %v2300 = vmax.f32 %v2193, 0.0
    %v2301 = vmax.f32 %v2197, 0.0
    %v2302 = vmax.f32 %v2199, 0.0
    %v2303 = vmax.f32 %v2201, 0.0
    %v2304 = vmax.f32 %v2203, 0.0
    %v2305 = vmax.f32 %v2207, 0.0
    %v2306 = vmax.f32 %v2209, 0.0
    %v2307 = vmax.f32 %v2211, 0.0
    %v2308 = vmax.f32 %v2213, 0.0
    %v2309 = vmax.f32 %v2217, 0.0
    %v2310 = vmax.f32 %v2219, 0.0
    %v2311 = vmax.f32 %v2221, 0.0
    %v2312 = vmax.f32 %v2223, 0.0
    %v2313 = vmax.f32 %v2227, 0.0
    %v2314 = vmax.f32 %v2229, 0.0
    %v2315 = vmax.f32 %v2231, 0.0
    %v2316 = vmax.f32 %v2233, 0.0
    %v2317 = vmax.f32 %v2237, 0.0
    %v2318 = vmax.f32 %v2239, 0.0
    %v2319 = vmax.f32 %v2241, 0.0
    %v2320 = vmax.f32 %v2243, 0.0
    %v2321 = vmax.f32 %v2247, 0.0
    %v2322 = vmax.f32 %v2249, 0.0
    %v2323 = vmax.f32 %v2251, 0.0
    %v2324 = vmax.f32 %v2253, 0.0
    %v2325 = vmax.f32 %v2257, 0.0
    %v2326 = vmax.f32 %v2259, 0.0
    %v2327 = vmax.f32 %v2261, 0.0
    %v2328 = vmax.f32 %v2263, 0.0
    %v2329 = vpack.c.bf16 %v2267, %v2265
    %v2330 = vpack.c.bf16 %v2268, %v2266
    %v2331 = vpack.c.bf16 %v2271, %v2269
    %v2332 = vpack.c.bf16 %v2272, %v2270
    %v2333 = vpack.c.bf16 %v2275, %v2273
    %v2334 = vpack.c.bf16 %v2276, %v2274
    %v2335 = vpack.c.bf16 %v2279, %v2277
    %v2336 = vpack.c.bf16 %v2280, %v2278
    %v2337 = vpack.c.bf16 %v2283, %v2281
    %v2338 = vpack.c.bf16 %v2284, %v2282
    %v2339 = vpack.c.bf16 %v2287, %v2285
    %v2340 = vpack.c.bf16 %v2288, %v2286
    %v2341 = vpack.c.bf16 %v2291, %v2289
    %v2342 = vpack.c.bf16 %v2292, %v2290
    %v2343 = vpack.c.bf16 %v2295, %v2293
    %v2344 = vpack.c.bf16 %v2296, %v2294
    %v2345 = vpack.c.bf16 %v2299, %v2297
    %v2346 = vpack.c.bf16 %v2300, %v2298
    %v2347 = vpack.c.bf16 %v2303, %v2301
    %v2348 = vpack.c.bf16 %v2304, %v2302
    %v2349 = vpack.c.bf16 %v2307, %v2305
    %v2350 = vpack.c.bf16 %v2308, %v2306
    %v2351 = vpack.c.bf16 %v2311, %v2309
    %v2352 = vpack.c.bf16 %v2312, %v2310
    %v2353 = vpack.c.bf16 %v2315, %v2313
    %v2354 = vpack.c.bf16 %v2316, %v2314
    %v2355 = vpack.c.bf16 %v2319, %v2317
    %v2356 = vpack.c.bf16 %v2320, %v2318
    %v2357 = vpack.c.bf16 %v2323, %v2321
    %v2358 = vpack.c.bf16 %v2324, %v2322
    %v2359 = vpack.c.bf16 %v2327, %v2325
    %v2360 = vpack.c.bf16 %v2328, %v2326
    %v2361 = vld [vmem:[#allocation10] sm:$0xff]
    %v2362 = vld [vmem:[#allocation10 + $0x8] sm:$0xff]
    %v2363 = vld [vmem:[#allocation10 + $0x10] sm:$0xff]
    %v2364 = vld [vmem:[#allocation10 + $0x18] sm:$0xff]
    %v2365 = vld [vmem:[#allocation10 + $0x20] sm:$0xff]
    %v2366 = vld [vmem:[#allocation10 + $0x28] sm:$0xff]
    %v2367 = vld [vmem:[#allocation10 + $0x30] sm:$0xff]
    %v2368 = vld [vmem:[#allocation10 + $0x38] sm:$0xff]
    %v2369 = vld [vmem:[#allocation10 + $0x40] sm:$0xff]
    %v2370 = vld [vmem:[#allocation10 + $0x48] sm:$0xff]
    %v2371 = vld [vmem:[#allocation10 + $0x50] sm:$0xff]
    %v2372 = vld [vmem:[#allocation10 + $0x58] sm:$0xff]
    %v2373 = vld [vmem:[#allocation10 + $0x60] sm:$0xff]
    %v2374 = vld [vmem:[#allocation10 + $0x68] sm:$0xff]
    %v2375 = vld [vmem:[#allocation10 + $0x70] sm:$0xff]
    %v2376 = vld [vmem:[#allocation10 + $0x78] sm:$0xff]
    %v2377 = vld [vmem:[#allocation10 + $0x80] sm:$0xff]
    %v2378 = vld [vmem:[#allocation10 + $0x88] sm:$0xff]
    %v2379 = vld [vmem:[#allocation10 + $0x90] sm:$0xff]
    %v2380 = vld [vmem:[#allocation10 + $0x98] sm:$0xff]
    %v2381 = vld [vmem:[#allocation10 + $0xa0] sm:$0xff]
    %v2382 = vld [vmem:[#allocation10 + $0xa8] sm:$0xff]
    %v2383 = vld [vmem:[#allocation10 + $0xb0] sm:$0xff]
    %v2384 = vld [vmem:[#allocation10 + $0xb8] sm:$0xff]
    %v2385 = vld [vmem:[#allocation10 + $0xc0] sm:$0xff]
    %v2386 = vld [vmem:[#allocation10 + $0xc8] sm:$0xff]
    %v2387 = vld [vmem:[#allocation10 + $0xd0] sm:$0xff]
    %v2388 = vld [vmem:[#allocation10 + $0xd8] sm:$0xff]
    %v2389 = vld [vmem:[#allocation10 + $0xe0] sm:$0xff]
    %v2390 = vld [vmem:[#allocation10 + $0xe8] sm:$0xff]
    %v2391 = vld [vmem:[#allocation10 + $0xf0] sm:$0xff]
    %v2392 = vld [vmem:[#allocation10 + $0xf8] sm:$0xff]
    %v2393 = vld [vmem:[#allocation10 + $0x100] sm:$0xff]
    %v2394 = vld [vmem:[#allocation10 + $0x108] sm:$0xff]
    %v2395 = vld [vmem:[#allocation10 + $0x110] sm:$0xff]
    %v2396 = vld [vmem:[#allocation10 + $0x118] sm:$0xff]
    %v2397 = vld [vmem:[#allocation10 + $0x120] sm:$0xff]
    %v2398 = vld [vmem:[#allocation10 + $0x128] sm:$0xff]
    %v2399 = vld [vmem:[#allocation10 + $0x130] sm:$0xff]
    %v2400 = vld [vmem:[#allocation10 + $0x138] sm:$0xff]
    %v2401 = vld [vmem:[#allocation10 + $0x140] sm:$0xff]
    %v2402 = vld [vmem:[#allocation10 + $0x148] sm:$0xff]
    %v2403 = vld [vmem:[#allocation10 + $0x150] sm:$0xff]
    %v2404 = vld [vmem:[#allocation10 + $0x158] sm:$0xff]
    %v2405 = vld [vmem:[#allocation10 + $0x160] sm:$0xff]
    %v2406 = vld [vmem:[#allocation10 + $0x168] sm:$0xff]
    %v2407 = vld [vmem:[#allocation10 + $0x170] sm:$0xff]
    %v2408 = vld [vmem:[#allocation10 + $0x178] sm:$0xff]
    %v2409 = vld [vmem:[#allocation10 + $0x180] sm:$0xff]
    %v2410 = vld [vmem:[#allocation10 + $0x188] sm:$0xff]
    %v2411 = vld [vmem:[#allocation10 + $0x190] sm:$0xff]
    %v2412 = vld [vmem:[#allocation10 + $0x198] sm:$0xff]
    %v2413 = vld [vmem:[#allocation10 + $0x1a0] sm:$0xff]
    %v2414 = vld [vmem:[#allocation10 + $0x1a8] sm:$0xff]
    %v2415 = vld [vmem:[#allocation10 + $0x1b0] sm:$0xff]
    %v2416 = vld [vmem:[#allocation10 + $0x1b8] sm:$0xff]
    %v2417 = vld [vmem:[#allocation10 + $0x1c0] sm:$0xff]
    %v2418 = vld [vmem:[#allocation10 + $0x1c8] sm:$0xff]
    %v2419 = vld [vmem:[#allocation10 + $0x1d0] sm:$0xff]
    %v2420 = vld [vmem:[#allocation10 + $0x1d8] sm:$0xff]
    %v2421 = vld [vmem:[#allocation10 + $0x1e0] sm:$0xff]
    %v2422 = vld [vmem:[#allocation10 + $0x1e8] sm:$0xff]
    %v2423 = vld [vmem:[#allocation10 + $0x1f0] sm:$0xff]
    %v2424 = vld [vmem:[#allocation10 + $0x1f8] sm:$0xff]
    %v2425 = vld [vmem:[%s8] sm:$0xf]
    %v2427 = vlaneseq
    %v2428 = vshrl.u32 %v2427, 7
    %v2429 = vsub.s32 0, %v2428
    %v2430 = vrot.slane %v2425, %v2429
    %v2431 = vlaneseq
    %v2432 = vshrl.u32 %v2431, 7
    %v2433 = vsub.s32 1, %v2432
    %v2434 = vrot.slane %v2425, %v2433
    %v2435 = vlaneseq
    %v2436 = vshrl.u32 %v2435, 7
    %v2437 = vsub.s32 2, %v2436
    %v2438 = vrot.slane %v2425, %v2437
    %v2439 = vlaneseq
    %v2440 = vshrl.u32 %v2439, 7
    %v2441 = vsub.s32 3, %v2440
    %v2442 = vrot.slane %v2425, %v2441
    %v2511 = vunpack.c.l.b16 %v2361
    %v2512 = vunpack.c.h.b16 %v2361
    %v2513 = vunpack.c.l.b16 %v2362
    %v2514 = vunpack.c.h.b16 %v2362
    %v2515 = vunpack.c.l.b16 %v2363
    %v2516 = vunpack.c.h.b16 %v2363
    %v2517 = vunpack.c.l.b16 %v2364
    %v2518 = vunpack.c.h.b16 %v2364
    %v2519 = vunpack.c.l.b16 %v2365
    %v2520 = vunpack.c.h.b16 %v2365
    %v2521 = vunpack.c.l.b16 %v2366
    %v2522 = vunpack.c.h.b16 %v2366
    %v2523 = vunpack.c.l.b16 %v2367
    %v2524 = vunpack.c.h.b16 %v2367
    %v2525 = vunpack.c.l.b16 %v2368
    %v2526 = vunpack.c.h.b16 %v2368
    %v2527 = vunpack.c.l.b16 %v2369
    %v2528 = vunpack.c.h.b16 %v2369
    %v2529 = vunpack.c.l.b16 %v2370
    %v2530 = vunpack.c.h.b16 %v2370
    %v2531 = vunpack.c.l.b16 %v2371
    %v2532 = vunpack.c.h.b16 %v2371
    %v2533 = vunpack.c.l.b16 %v2372
    %v2534 = vunpack.c.h.b16 %v2372
    %v2535 = vunpack.c.l.b16 %v2373
    %v2536 = vunpack.c.h.b16 %v2373
    %v2537 = vunpack.c.l.b16 %v2374
    %v2538 = vunpack.c.h.b16 %v2374
    %v2539 = vunpack.c.l.b16 %v2375
    %v2540 = vunpack.c.h.b16 %v2375
    %v2541 = vunpack.c.l.b16 %v2376
    %v2542 = vunpack.c.h.b16 %v2376
    %v2543 = vunpack.c.l.b16 %v2377
    %v2544 = vunpack.c.h.b16 %v2377
    %v2545 = vunpack.c.l.b16 %v2378
    %v2546 = vunpack.c.h.b16 %v2378
    %v2547 = vunpack.c.l.b16 %v2379
    %v2548 = vunpack.c.h.b16 %v2379
    %v2549 = vunpack.c.l.b16 %v2380
    %v2550 = vunpack.c.h.b16 %v2380
    %v2551 = vunpack.c.l.b16 %v2381
    %v2552 = vunpack.c.h.b16 %v2381
    %v2553 = vunpack.c.l.b16 %v2382
    %v2554 = vunpack.c.h.b16 %v2382
    %v2555 = vunpack.c.l.b16 %v2383
    %v2556 = vunpack.c.h.b16 %v2383
    %v2557 = vunpack.c.l.b16 %v2384
    %v2558 = vunpack.c.h.b16 %v2384
    %v2559 = vunpack.c.l.b16 %v2385
    %v2560 = vunpack.c.h.b16 %v2385
    %v2561 = vunpack.c.l.b16 %v2386
    %v2562 = vunpack.c.h.b16 %v2386
    %v2563 = vunpack.c.l.b16 %v2387
    %v2564 = vunpack.c.h.b16 %v2387
    %v2565 = vunpack.c.l.b16 %v2388
    %v2566 = vunpack.c.h.b16 %v2388
    %v2567 = vunpack.c.l.b16 %v2389
    %v2568 = vunpack.c.h.b16 %v2389
    %v2569 = vunpack.c.l.b16 %v2390
    %v2570 = vunpack.c.h.b16 %v2390
    %v2571 = vunpack.c.l.b16 %v2391
    %v2572 = vunpack.c.h.b16 %v2391
    %v2573 = vunpack.c.l.b16 %v2392
    %v2574 = vunpack.c.h.b16 %v2392
    %v2575 = vunpack.c.l.b16 %v2393
    %v2576 = vunpack.c.h.b16 %v2393
    %v2577 = vunpack.c.l.b16 %v2394
    %v2578 = vunpack.c.h.b16 %v2394
    %v2579 = vunpack.c.l.b16 %v2395
    %v2580 = vunpack.c.h.b16 %v2395
    %v2581 = vunpack.c.l.b16 %v2396
    %v2582 = vunpack.c.h.b16 %v2396
    %v2583 = vunpack.c.l.b16 %v2397
    %v2584 = vunpack.c.h.b16 %v2397
    %v2585 = vunpack.c.l.b16 %v2398
    %v2586 = vunpack.c.h.b16 %v2398
    %v2587 = vunpack.c.l.b16 %v2399
    %v2588 = vunpack.c.h.b16 %v2399
    %v2589 = vunpack.c.l.b16 %v2400
    %v2590 = vunpack.c.h.b16 %v2400
    %v2591 = vunpack.c.l.b16 %v2401
    %v2592 = vunpack.c.h.b16 %v2401
    %v2593 = vunpack.c.l.b16 %v2402
    %v2594 = vunpack.c.h.b16 %v2402
    %v2595 = vunpack.c.l.b16 %v2403
    %v2596 = vunpack.c.h.b16 %v2403
    %v2597 = vunpack.c.l.b16 %v2404
    %v2598 = vunpack.c.h.b16 %v2404
    %v2599 = vunpack.c.l.b16 %v2405
    %v2600 = vunpack.c.h.b16 %v2405
    %v2601 = vunpack.c.l.b16 %v2406
    %v2602 = vunpack.c.h.b16 %v2406
    %v2603 = vunpack.c.l.b16 %v2407
    %v2604 = vunpack.c.h.b16 %v2407
    %v2605 = vunpack.c.l.b16 %v2408
    %v2606 = vunpack.c.h.b16 %v2408
    %v2607 = vunpack.c.l.b16 %v2409
    %v2608 = vunpack.c.h.b16 %v2409
    %v2609 = vunpack.c.l.b16 %v2410
    %v2610 = vunpack.c.h.b16 %v2410
    %v2611 = vunpack.c.l.b16 %v2411
    %v2612 = vunpack.c.h.b16 %v2411
    %v2613 = vunpack.c.l.b16 %v2412
    %v2614 = vunpack.c.h.b16 %v2412
    %v2615 = vunpack.c.l.b16 %v2413
    %v2616 = vunpack.c.h.b16 %v2413
    %v2617 = vunpack.c.l.b16 %v2414
    %v2618 = vunpack.c.h.b16 %v2414
    %v2619 = vunpack.c.l.b16 %v2415
    %v2620 = vunpack.c.h.b16 %v2415
    %v2621 = vunpack.c.l.b16 %v2416
    %v2622 = vunpack.c.h.b16 %v2416
    %v2623 = vunpack.c.l.b16 %v2417
    %v2624 = vunpack.c.h.b16 %v2417
    %v2625 = vunpack.c.l.b16 %v2418
    %v2626 = vunpack.c.h.b16 %v2418
    %v2627 = vunpack.c.l.b16 %v2419
    %v2628 = vunpack.c.h.b16 %v2419
    %v2629 = vunpack.c.l.b16 %v2420
    %v2630 = vunpack.c.h.b16 %v2420
    %v2631 = vunpack.c.l.b16 %v2421
    %v2632 = vunpack.c.h.b16 %v2421
    %v2633 = vunpack.c.l.b16 %v2422
    %v2634 = vunpack.c.h.b16 %v2422
    %v2635 = vunpack.c.l.b16 %v2423
    %v2636 = vunpack.c.h.b16 %v2423
    %v2637 = vunpack.c.l.b16 %v2424
    %v2638 = vunpack.c.h.b16 %v2424
    %v2639 = vpack.c.b16 %v2515, %v2511
    %v2640 = vpack.c.b16 %v2516, %v2512
    %v2641 = vpack.c.b16 %v2517, %v2513
    %v2642 = vpack.c.b16 %v2518, %v2514
    %v2643 = vpack.c.b16 %v2523, %v2519
    %v2644 = vpack.c.b16 %v2524, %v2520
    %v2645 = vpack.c.b16 %v2525, %v2521
    %v2646 = vpack.c.b16 %v2526, %v2522
    %v2647 = vpack.c.b16 %v2531, %v2527
    %v2648 = vpack.c.b16 %v2532, %v2528
    %v2649 = vpack.c.b16 %v2533, %v2529
    %v2650 = vpack.c.b16 %v2534, %v2530
    %v2651 = vpack.c.b16 %v2539, %v2535
    %v2652 = vpack.c.b16 %v2540, %v2536
    %v2653 = vpack.c.b16 %v2541, %v2537
    %v2654 = vpack.c.b16 %v2542, %v2538
    %v2655 = vpack.c.b16 %v2547, %v2543
    %v2656 = vpack.c.b16 %v2548, %v2544
    %v2657 = vpack.c.b16 %v2549, %v2545
    %v2658 = vpack.c.b16 %v2550, %v2546
    %v2659 = vpack.c.b16 %v2555, %v2551
    %v2660 = vpack.c.b16 %v2556, %v2552
    %v2661 = vpack.c.b16 %v2557, %v2553
    %v2662 = vpack.c.b16 %v2558, %v2554
    %v2663 = vpack.c.b16 %v2563, %v2559
    %v2664 = vpack.c.b16 %v2564, %v2560
    %v2665 = vpack.c.b16 %v2565, %v2561
    %v2666 = vpack.c.b16 %v2566, %v2562
    %v2667 = vpack.c.b16 %v2571, %v2567
    %v2668 = vpack.c.b16 %v2572, %v2568
    %v2669 = vpack.c.b16 %v2573, %v2569
    %v2670 = vpack.c.b16 %v2574, %v2570
    %v2671 = vpack.c.b16 %v2579, %v2575
    %v2672 = vpack.c.b16 %v2580, %v2576
    %v2673 = vpack.c.b16 %v2581, %v2577
    %v2674 = vpack.c.b16 %v2582, %v2578
    %v2675 = vpack.c.b16 %v2587, %v2583
    %v2676 = vpack.c.b16 %v2588, %v2584
    %v2677 = vpack.c.b16 %v2589, %v2585
    %v2678 = vpack.c.b16 %v2590, %v2586
    %v2679 = vpack.c.b16 %v2595, %v2591
    %v2680 = vpack.c.b16 %v2596, %v2592
    %v2681 = vpack.c.b16 %v2597, %v2593
    %v2682 = vpack.c.b16 %v2598, %v2594
    %v2683 = vpack.c.b16 %v2603, %v2599
    %v2684 = vpack.c.b16 %v2604, %v2600
    %v2685 = vpack.c.b16 %v2605, %v2601
    %v2686 = vpack.c.b16 %v2606, %v2602
    %v2687 = vpack.c.b16 %v2611, %v2607
    %v2688 = vpack.c.b16 %v2612, %v2608
    %v2689 = vpack.c.b16 %v2613, %v2609
    %v2690 = vpack.c.b16 %v2614, %v2610
    %v2691 = vpack.c.b16 %v2619, %v2615
    %v2692 = vpack.c.b16 %v2620, %v2616
    %v2693 = vpack.c.b16 %v2621, %v2617
    %v2694 = vpack.c.b16 %v2622, %v2618
    %v2695 = vpack.c.b16 %v2627, %v2623
    %v2696 = vpack.c.b16 %v2628, %v2624
    %v2697 = vpack.c.b16 %v2629, %v2625
    %v2698 = vpack.c.b16 %v2630, %v2626
    %v2699 = vpack.c.b16 %v2635, %v2631
    %v2700 = vpack.c.b16 %v2636, %v2632
    %v2701 = vpack.c.b16 %v2637, %v2633
    %v2702 = vpack.c.b16 %v2638, %v2634
    %2767 = vmatprep.subr.bf16.mxu0 %v2640
    %2768 = vmatpush1.bf16.msra.mxu0 %v2639
    %2769 = vmatprep.subr.bf16.mxu0 %v2644
    %2770 = vmatpush1.bf16.msra.mxu0 %v2643
    %2771 = vmatprep.subr.bf16.mxu0 %v2648
    %2772 = vmatpush1.bf16.msra.mxu0 %v2647
    %2773 = vmatprep.subr.bf16.mxu0 %v2652
    %2774 = vmatpush1.bf16.msra.mxu0 %v2651
    %2775 = vmatprep.subr.bf16.mxu0 %v2656
    %2776 = vmatpush1.bf16.msra.mxu0 %v2655
    %2777 = vmatprep.subr.bf16.mxu0 %v2660
    %2778 = vmatpush1.bf16.msra.mxu0 %v2659
    %2779 = vmatprep.subr.bf16.mxu0 %v2664
    %2780 = vmatpush1.bf16.msra.mxu0 %v2663
    %2781 = vmatprep.subr.bf16.mxu0 %v2668
    %2782 = vmatpush1.bf16.msra.mxu0 %v2667
    %2783 = vmatprep.subr.bf16.mxu0 %v2672
    %2784 = vmatpush1.bf16.msra.mxu0 %v2671
    %2785 = vmatprep.subr.bf16.mxu0 %v2676
    %2786 = vmatpush1.bf16.msra.mxu0 %v2675
    %2787 = vmatprep.subr.bf16.mxu0 %v2680
    %2788 = vmatpush1.bf16.msra.mxu0 %v2679
    %2789 = vmatprep.subr.bf16.mxu0 %v2684
    %2790 = vmatpush1.bf16.msra.mxu0 %v2683
    %2791 = vmatprep.subr.bf16.mxu0 %v2688
    %2792 = vmatpush1.bf16.msra.mxu0 %v2687
    %2793 = vmatprep.subr.bf16.mxu0 %v2692
    %2794 = vmatpush1.bf16.msra.mxu0 %v2691
    %2795 = vmatprep.subr.bf16.mxu0 %v2696
    %2796 = vmatpush1.bf16.msra.mxu0 %v2695
    %2797 = vmatprep.subr.bf16.mxu0 %v2700
    %2798 = vmatpush1.bf16.msra.mxu0 %v2699
    %2799 = vmatprep.mubr.bf16.mxu0 %v2330
    %2800 = vmatmul.mubr.bf16.gmra.mrb[0].mxu0 %v2329
    %v2801 = vpop.f32.mrb[0].mxu0
    %v2802 = vadd.f32 %v2430, %v2801
    %v2803 = vpop.f32.mrb[0].mxu0
    %v2804 = vadd.f32 %v2434, %v2803
    %v2805 = vpop.f32.mrb[0].mxu0
    %v2806 = vadd.f32 %v2430, %v2805
    %v2807 = vpop.f32.mrb[0].mxu0
    %v2808 = vadd.f32 %v2434, %v2807
    %2809 = vmatprep.mubr.bf16.mxu0 %v2332
    %2810 = vmatmul.mubr.bf16.gmra.mrb[0].mxu0 %v2331
    %v2811 = vpop.f32.mrb[0].mxu0
    %v2812 = vadd.f32 %v2430, %v2811
    %v2813 = vpop.f32.mrb[0].mxu0
    %v2814 = vadd.f32 %v2434, %v2813
    %v2815 = vpop.f32.mrb[0].mxu0
    %v2816 = vadd.f32 %v2430, %v2815
    %v2817 = vpop.f32.mrb[0].mxu0
    %v2818 = vadd.f32 %v2434, %v2817
    %2819 = vmatprep.mubr.bf16.mxu0 %v2334
    %2820 = vmatmul.mubr.bf16.gmra.mrb[0].mxu0 %v2333
    %v2821 = vpop.f32.mrb[0].mxu0
    %v2822 = vadd.f32 %v2430, %v2821
    %v2823 = vpop.f32.mrb[0].mxu0
    %v2824 = vadd.f32 %v2434, %v2823
    %v2825 = vpop.f32.mrb[0].mxu0
    %v2826 = vadd.f32 %v2430, %v2825
    %v2827 = vpop.f32.mrb[0].mxu0
    %v2828 = vadd.f32 %v2434, %v2827
    %2829 = vmatprep.mubr.bf16.mxu0 %v2336
    %2830 = vmatmul.mubr.bf16.gmra.mrb[0].mxu0 %v2335
    %v2831 = vpop.f32.mrb[0].mxu0
    %v2832 = vadd.f32 %v2430, %v2831
    %v2833 = vpop.f32.mrb[0].mxu0
    %v2834 = vadd.f32 %v2434, %v2833
    %v2835 = vpop.f32.mrb[0].mxu0
    %v2836 = vadd.f32 %v2430, %v2835
    %v2837 = vpop.f32.mrb[0].mxu0
    %v2838 = vadd.f32 %v2434, %v2837
    %2839 = vmatprep.mubr.bf16.mxu0 %v2338
    %2840 = vmatmul.mubr.bf16.gmra.mrb[0].mxu0 %v2337
    %v2841 = vpop.f32.mrb[0].mxu0
    %v2842 = vadd.f32 %v2430, %v2841
    %v2843 = vpop.f32.mrb[0].mxu0
    %v2844 = vadd.f32 %v2434, %v2843
    %v2845 = vpop.f32.mrb[0].mxu0
    %v2846 = vadd.f32 %v2430, %v2845
    %v2847 = vpop.f32.mrb[0].mxu0
    %v2848 = vadd.f32 %v2434, %v2847
    %2849 = vmatprep.mubr.bf16.mxu0 %v2340
    %2850 = vmatmul.mubr.bf16.gmra.mrb[0].mxu0 %v2339
    %v2851 = vpop.f32.mrb[0].mxu0
    %v2852 = vadd.f32 %v2430, %v2851
    %v2853 = vpop.f32.mrb[0].mxu0
    %v2854 = vadd.f32 %v2434, %v2853
    %v2855 = vpop.f32.mrb[0].mxu0
    %v2856 = vadd.f32 %v2430, %v2855
    %v2857 = vpop.f32.mrb[0].mxu0
    %v2858 = vadd.f32 %v2434, %v2857
    %2859 = vmatprep.mubr.bf16.mxu0 %v2342
    %2860 = vmatmul.mubr.bf16.gmra.mrb[0].mxu0 %v2341
    %v2861 = vpop.f32.mrb[0].mxu0
    %v2862 = vadd.f32 %v2430, %v2861
    %v2863 = vpop.f32.mrb[0].mxu0
    %v2864 = vadd.f32 %v2434, %v2863
    %v2865 = vpop.f32.mrb[0].mxu0
    %v2866 = vadd.f32 %v2430, %v2865
    %v2867 = vpop.f32.mrb[0].mxu0
    %v2868 = vadd.f32 %v2434, %v2867
    %2869 = vmatprep.mubr.bf16.mxu0 %v2344
    %2870 = vmatmul.mubr.bf16.gmra.mrb[0].mxu0 %v2343
    %v2871 = vpop.f32.mrb[0].mxu0
    %v2872 = vadd.f32 %v2430, %v2871
    %v2873 = vpop.f32.mrb[0].mxu0
    %v2874 = vadd.f32 %v2434, %v2873
    %v2875 = vpop.f32.mrb[0].mxu0
    %v2876 = vadd.f32 %v2430, %v2875
    %v2877 = vpop.f32.mrb[0].mxu0
    %v2878 = vadd.f32 %v2434, %v2877
    %2879 = vmatprep.mubr.bf16.mxu0 %v2346
    %2880 = vmatmul.mubr.bf16.gmra.mrb[0].mxu0 %v2345
    %v2881 = vpop.f32.mrb[0].mxu0
    %v2882 = vadd.f32 %v2430, %v2881
    %v2883 = vpop.f32.mrb[0].mxu0
    %v2884 = vadd.f32 %v2434, %v2883
    %v2885 = vpop.f32.mrb[0].mxu0
    %v2886 = vadd.f32 %v2430, %v2885
    %v2887 = vpop.f32.mrb[0].mxu0
    %v2888 = vadd.f32 %v2434, %v2887
    %2889 = vmatprep.mubr.bf16.mxu0 %v2348
    %2890 = vmatmul.mubr.bf16.gmra.mrb[0].mxu0 %v2347
    %v2891 = vpop.f32.mrb[0].mxu0
    %v2892 = vadd.f32 %v2430, %v2891
    %v2893 = vpop.f32.mrb[0].mxu0
    %v2894 = vadd.f32 %v2434, %v2893
    %v2895 = vpop.f32.mrb[0].mxu0
    %v2896 = vadd.f32 %v2430, %v2895
    %v2897 = vpop.f32.mrb[0].mxu0
    %v2898 = vadd.f32 %v2434, %v2897
    %2899 = vmatprep.mubr.bf16.mxu0 %v2350
    %2900 = vmatmul.mubr.bf16.gmra.mrb[0].mxu0 %v2349
    %v2901 = vpop.f32.mrb[0].mxu0
    %v2902 = vadd.f32 %v2430, %v2901
    %v2903 = vpop.f32.mrb[0].mxu0
    %v2904 = vadd.f32 %v2434, %v2903
    %v2905 = vpop.f32.mrb[0].mxu0
    %v2906 = vadd.f32 %v2430, %v2905
    %v2907 = vpop.f32.mrb[0].mxu0
    %v2908 = vadd.f32 %v2434, %v2907
    %2909 = vmatprep.mubr.bf16.mxu0 %v2352
    %2910 = vmatmul.mubr.bf16.gmra.mrb[0].mxu0 %v2351
    %v2911 = vpop.f32.mrb[0].mxu0
    %v2912 = vadd.f32 %v2430, %v2911
    %v2913 = vpop.f32.mrb[0].mxu0
    %v2914 = vadd.f32 %v2434, %v2913
    %v2915 = vpop.f32.mrb[0].mxu0
    %v2916 = vadd.f32 %v2430, %v2915
    %v2917 = vpop.f32.mrb[0].mxu0
    %v2918 = vadd.f32 %v2434, %v2917
    %2919 = vmatprep.mubr.bf16.mxu0 %v2354
    %2920 = vmatmul.mubr.bf16.gmra.mrb[0].mxu0 %v2353
    %v2921 = vpop.f32.mrb[0].mxu0
    %v2922 = vadd.f32 %v2430, %v2921
    %v2923 = vpop.f32.mrb[0].mxu0
    %v2924 = vadd.f32 %v2434, %v2923
    %v2925 = vpop.f32.mrb[0].mxu0
    %v2926 = vadd.f32 %v2430, %v2925
    %v2927 = vpop.f32.mrb[0].mxu0
    %v2928 = vadd.f32 %v2434, %v2927
    %2929 = vmatprep.mubr.bf16.mxu0 %v2356
    %2930 = vmatmul.mubr.bf16.gmra.mrb[0].mxu0 %v2355
    %v2931 = vpop.f32.mrb[0].mxu0
    %v2932 = vadd.f32 %v2430, %v2931
    %v2933 = vpop.f32.mrb[0].mxu0
    %v2934 = vadd.f32 %v2434, %v2933
    %v2935 = vpop.f32.mrb[0].mxu0
    %v2936 = vadd.f32 %v2430, %v2935
    %v2937 = vpop.f32.mrb[0].mxu0
    %v2938 = vadd.f32 %v2434, %v2937
    %2939 = vmatprep.mubr.bf16.mxu0 %v2358
    %2940 = vmatmul.mubr.bf16.gmra.mrb[0].mxu0 %v2357
    %v2941 = vpop.f32.mrb[0].mxu0
    %v2942 = vadd.f32 %v2430, %v2941
    %v2943 = vpop.f32.mrb[0].mxu0
    %v2944 = vadd.f32 %v2434, %v2943
    %v2945 = vpop.f32.mrb[0].mxu0
    %v2946 = vadd.f32 %v2430, %v2945
    %v2947 = vpop.f32.mrb[0].mxu0
    %v2948 = vadd.f32 %v2434, %v2947
    %2949 = vmatprep.mubr.bf16.mxu0 %v2360
    %2950 = vmatmul.mubr.bf16.gmra.mrb[0].mxu0 %v2359
    %v2951 = vpop.f32.mrb[0].mxu0
    %v2952 = vadd.f32 %v2430, %v2951
    %v2953 = vpop.f32.mrb[0].mxu0
    %v2954 = vadd.f32 %v2434, %v2953
    %v2955 = vpop.f32.mrb[0].mxu0
    %v2956 = vadd.f32 %v2430, %v2955
    %v2957 = vpop.f32.mrb[0].mxu0
    %v2958 = vadd.f32 %v2434, %v2957
    %2959 = vdwg.mxu0
    %2960 = vmatprep.subr.bf16.mxu0 %v2642
    %2961 = vmatpush1.bf16.msra.mxu0 %v2641
    %2962 = vmatprep.subr.bf16.mxu0 %v2646
    %2963 = vmatpush1.bf16.msra.mxu0 %v2645
    %2964 = vmatprep.subr.bf16.mxu0 %v2650
    %2965 = vmatpush1.bf16.msra.mxu0 %v2649
    %2966 = vmatprep.subr.bf16.mxu0 %v2654
    %2967 = vmatpush1.bf16.msra.mxu0 %v2653
    %2968 = vmatprep.subr.bf16.mxu0 %v2658
    %2969 = vmatpush1.bf16.msra.mxu0 %v2657
    %2970 = vmatprep.subr.bf16.mxu0 %v2662
    %2971 = vmatpush1.bf16.msra.mxu0 %v2661
    %2972 = vmatprep.subr.bf16.mxu0 %v2666
    %2973 = vmatpush1.bf16.msra.mxu0 %v2665
    %2974 = vmatprep.subr.bf16.mxu0 %v2670
    %2975 = vmatpush1.bf16.msra.mxu0 %v2669
    %2976 = vmatprep.subr.bf16.mxu0 %v2674
    %2977 = vmatpush1.bf16.msra.mxu0 %v2673
    %2978 = vmatprep.subr.bf16.mxu0 %v2678
    %2979 = vmatpush1.bf16.msra.mxu0 %v2677
    %2980 = vmatprep.subr.bf16.mxu0 %v2682
    %2981 = vmatpush1.bf16.msra.mxu0 %v2681
    %2982 = vmatprep.subr.bf16.mxu0 %v2686
    %2983 = vmatpush1.bf16.msra.mxu0 %v2685
    %2984 = vmatprep.subr.bf16.mxu0 %v2690
    %2985 = vmatpush1.bf16.msra.mxu0 %v2689
    %2986 = vmatprep.subr.bf16.mxu0 %v2694
    %2987 = vmatpush1.bf16.msra.mxu0 %v2693
    %2988 = vmatprep.subr.bf16.mxu0 %v2698
    %2989 = vmatpush1.bf16.msra.mxu0 %v2697
    %2990 = vmatprep.subr.bf16.mxu0 %v2702
    %2991 = vmatpush1.bf16.msra.mxu0 %v2701
    %2992 = vmatprep.mubr.bf16.mxu0 %v2330
    %2993 = vmatmul.mubr.bf16.gmra.mrb[0].mxu0 %v2329
    %v2994 = vpop.f32.mrb[0].mxu0
    %v2995 = vadd.f32 %v2438, %v2994
    %v2996 = vpop.f32.mrb[0].mxu0
    %v2997 = vadd.f32 %v2442, %v2996
    %v2998 = vpop.f32.mrb[0].mxu0
    %v2999 = vadd.f32 %v2438, %v2998
    %v3000 = vpop.f32.mrb[0].mxu0
    %v3001 = vadd.f32 %v2442, %v3000
    %3002 = vmatprep.mubr.bf16.mxu0 %v2332
    %3003 = vmatmul.mubr.bf16.gmra.mrb[0].mxu0 %v2331
    %v3004 = vpop.f32.mrb[0].mxu0
    %v3005 = vadd.f32 %v2438, %v3004
    %v3006 = vpop.f32.mrb[0].mxu0
    %v3007 = vadd.f32 %v2442, %v3006
    %v3008 = vpop.f32.mrb[0].mxu0
    %v3009 = vadd.f32 %v2438, %v3008
    %v3010 = vpop.f32.mrb[0].mxu0
    %v3011 = vadd.f32 %v2442, %v3010
    %3012 = vmatprep.mubr.bf16.mxu0 %v2334
    %3013 = vmatmul.mubr.bf16.gmra.mrb[0].mxu0 %v2333
    %v3014 = vpop.f32.mrb[0].mxu0
    %v3015 = vadd.f32 %v2438, %v3014
    %v3016 = vpop.f32.mrb[0].mxu0
    %v3017 = vadd.f32 %v2442, %v3016
    %v3018 = vpop.f32.mrb[0].mxu0
    %v3019 = vadd.f32 %v2438, %v3018
    %v3020 = vpop.f32.mrb[0].mxu0
    %v3021 = vadd.f32 %v2442, %v3020
    %3022 = vmatprep.mubr.bf16.mxu0 %v2336
    %3023 = vmatmul.mubr.bf16.gmra.mrb[0].mxu0 %v2335
    %v3024 = vpop.f32.mrb[0].mxu0
    %v3025 = vadd.f32 %v2438, %v3024
    %v3026 = vpop.f32.mrb[0].mxu0
    %v3027 = vadd.f32 %v2442, %v3026
    %v3028 = vpop.f32.mrb[0].mxu0
    %v3029 = vadd.f32 %v2438, %v3028
    %v3030 = vpop.f32.mrb[0].mxu0
    %v3031 = vadd.f32 %v2442, %v3030
    %3032 = vmatprep.mubr.bf16.mxu0 %v2338
    %3033 = vmatmul.mubr.bf16.gmra.mrb[0].mxu0 %v2337
    %v3034 = vpop.f32.mrb[0].mxu0
    %v3035 = vadd.f32 %v2438, %v3034
    %v3036 = vpop.f32.mrb[0].mxu0
    %v3037 = vadd.f32 %v2442, %v3036
    %v3038 = vpop.f32.mrb[0].mxu0
    %v3039 = vadd.f32 %v2438, %v3038
    %v3040 = vpop.f32.mrb[0].mxu0
    %v3041 = vadd.f32 %v2442, %v3040
    %3042 = vmatprep.mubr.bf16.mxu0 %v2340
    %3043 = vmatmul.mubr.bf16.gmra.mrb[0].mxu0 %v2339
    %v3044 = vpop.f32.mrb[0].mxu0
    %v3045 = vadd.f32 %v2438, %v3044
    %v3046 = vpop.f32.mrb[0].mxu0
    %v3047 = vadd.f32 %v2442, %v3046
    %v3048 = vpop.f32.mrb[0].mxu0
    %v3049 = vadd.f32 %v2438, %v3048
    %v3050 = vpop.f32.mrb[0].mxu0
    %v3051 = vadd.f32 %v2442, %v3050
    %3052 = vmatprep.mubr.bf16.mxu0 %v2342
    %3053 = vmatmul.mubr.bf16.gmra.mrb[0].mxu0 %v2341
    %v3054 = vpop.f32.mrb[0].mxu0
    %v3055 = vadd.f32 %v2438, %v3054
    %v3056 = vpop.f32.mrb[0].mxu0
    %v3057 = vadd.f32 %v2442, %v3056
    %v3058 = vpop.f32.mrb[0].mxu0
    %v3059 = vadd.f32 %v2438, %v3058
    %v3060 = vpop.f32.mrb[0].mxu0
    %v3061 = vadd.f32 %v2442, %v3060
    %3062 = vmatprep.mubr.bf16.mxu0 %v2344
    %3063 = vmatmul.mubr.bf16.gmra.mrb[0].mxu0 %v2343
    %v3064 = vpop.f32.mrb[0].mxu0
    %v3065 = vadd.f32 %v2438, %v3064
    %v3066 = vpop.f32.mrb[0].mxu0
    %v3067 = vadd.f32 %v2442, %v3066
    %v3068 = vpop.f32.mrb[0].mxu0
    %v3069 = vadd.f32 %v2438, %v3068
    %v3070 = vpop.f32.mrb[0].mxu0
    %v3071 = vadd.f32 %v2442, %v3070
    %3072 = vmatprep.mubr.bf16.mxu0 %v2346
    %3073 = vmatmul.mubr.bf16.gmra.mrb[0].mxu0 %v2345
    %v3074 = vpop.f32.mrb[0].mxu0
    %v3075 = vadd.f32 %v2438, %v3074
    %v3076 = vpop.f32.mrb[0].mxu0
    %v3077 = vadd.f32 %v2442, %v3076
    %v3078 = vpop.f32.mrb[0].mxu0
    %v3079 = vadd.f32 %v2438, %v3078
    %v3080 = vpop.f32.mrb[0].mxu0
    %v3081 = vadd.f32 %v2442, %v3080
    %3082 = vmatprep.mubr.bf16.mxu0 %v2348
    %3083 = vmatmul.mubr.bf16.gmra.mrb[0].mxu0 %v2347
    %v3084 = vpop.f32.mrb[0].mxu0
    %v3085 = vadd.f32 %v2438, %v3084
    %v3086 = vpop.f32.mrb[0].mxu0
    %v3087 = vadd.f32 %v2442, %v3086
    %v3088 = vpop.f32.mrb[0].mxu0
    %v3089 = vadd.f32 %v2438, %v3088
    %v3090 = vpop.f32.mrb[0].mxu0
    %v3091 = vadd.f32 %v2442, %v3090
    %3092 = vmatprep.mubr.bf16.mxu0 %v2350
    %3093 = vmatmul.mubr.bf16.gmra.mrb[0].mxu0 %v2349
    %v3094 = vpop.f32.mrb[0].mxu0
    %v3095 = vadd.f32 %v2438, %v3094
    %v3096 = vpop.f32.mrb[0].mxu0
    %v3097 = vadd.f32 %v2442, %v3096
    %v3098 = vpop.f32.mrb[0].mxu0
    %v3099 = vadd.f32 %v2438, %v3098
    %v3100 = vpop.f32.mrb[0].mxu0
    %v3101 = vadd.f32 %v2442, %v3100
    %3102 = vmatprep.mubr.bf16.mxu0 %v2352
    %3103 = vmatmul.mubr.bf16.gmra.mrb[0].mxu0 %v2351
    %v3104 = vpop.f32.mrb[0].mxu0
    %v3105 = vadd.f32 %v2438, %v3104
    %v3106 = vpop.f32.mrb[0].mxu0
    %v3107 = vadd.f32 %v2442, %v3106
    %v3108 = vpop.f32.mrb[0].mxu0
    %v3109 = vadd.f32 %v2438, %v3108
    %v3110 = vpop.f32.mrb[0].mxu0
    %v3111 = vadd.f32 %v2442, %v3110
    %3112 = vmatprep.mubr.bf16.mxu0 %v2354
    %3113 = vmatmul.mubr.bf16.gmra.mrb[0].mxu0 %v2353
    %v3114 = vpop.f32.mrb[0].mxu0
    %v3115 = vadd.f32 %v2438, %v3114
    %v3116 = vpop.f32.mrb[0].mxu0
    %v3117 = vadd.f32 %v2442, %v3116
    %v3118 = vpop.f32.mrb[0].mxu0
    %v3119 = vadd.f32 %v2438, %v3118
    %v3120 = vpop.f32.mrb[0].mxu0
    %v3121 = vadd.f32 %v2442, %v3120
    %3122 = vmatprep.mubr.bf16.mxu0 %v2356
    %3123 = vmatmul.mubr.bf16.gmra.mrb[0].mxu0 %v2355
    %v3124 = vpop.f32.mrb[0].mxu0
    %v3125 = vadd.f32 %v2438, %v3124
    %v3126 = vpop.f32.mrb[0].mxu0
    %v3127 = vadd.f32 %v2442, %v3126
    %v3128 = vpop.f32.mrb[0].mxu0
    %v3129 = vadd.f32 %v2438, %v3128
    %v3130 = vpop.f32.mrb[0].mxu0
    %v3131 = vadd.f32 %v2442, %v3130
    %3132 = vmatprep.mubr.bf16.mxu0 %v2358
    %3133 = vmatmul.mubr.bf16.gmra.mrb[0].mxu0 %v2357
    %v3134 = vpop.f32.mrb[0].mxu0
    %v3135 = vadd.f32 %v2438, %v3134
    %v3136 = vpop.f32.mrb[0].mxu0
    %v3137 = vadd.f32 %v2442, %v3136
    %v3138 = vpop.f32.mrb[0].mxu0
    %v3139 = vadd.f32 %v2438, %v3138
    %v3140 = vpop.f32.mrb[0].mxu0
    %v3141 = vadd.f32 %v2442, %v3140
    %3142 = vmatprep.mubr.bf16.mxu0 %v2360
    %3143 = vmatmul.mubr.bf16.gmra.mrb[0].mxu0 %v2359
    %v3144 = vpop.f32.mrb[0].mxu0
    %v3145 = vadd.f32 %v2438, %v3144
    %v3146 = vpop.f32.mrb[0].mxu0
    %v3147 = vadd.f32 %v2442, %v3146
    %v3148 = vpop.f32.mrb[0].mxu0
    %v3149 = vadd.f32 %v2438, %v3148
    %v3150 = vpop.f32.mrb[0].mxu0
    %v3151 = vadd.f32 %v2442, %v3150
    %3152 = vdwg.mxu0
    %v3153 = vmax.f32 %v2802, %v2804
    %v3154 = vmax.f32 %v3153, %v2995
    %v3155 = vmax.f32 %v3154, %v2997
    %3156 = vmax.xlane.f32.xlu0 %v3155
    %v3157 = vpop.xlane.xlu0 %3156
    %v3158 = vmax.f32 %v2806, %v2808
    %v3159 = vmax.f32 %v3158, %v2999
    %v3160 = vmax.f32 %v3159, %v3001
    %3161 = vmax.xlane.f32.xlu0 %v3160
    %v3162 = vpop.xlane.xlu0 %3161
    %v3163 = vmax.f32 %v2812, %v2814
    %v3164 = vmax.f32 %v3163, %v3005
    %v3165 = vmax.f32 %v3164, %v3007
    %3166 = vmax.xlane.f32.xlu0 %v3165
    %v3167 = vpop.xlane.xlu0 %3166
    %v3168 = vmax.f32 %v2816, %v2818
    %v3169 = vmax.f32 %v3168, %v3009
    %v3170 = vmax.f32 %v3169, %v3011
    %3171 = vmax.xlane.f32.xlu0 %v3170
    %v3172 = vpop.xlane.xlu0 %3171
    %v3173 = vmax.f32 %v2822, %v2824
    %v3174 = vmax.f32 %v3173, %v3015
    %v3175 = vmax.f32 %v3174, %v3017
    %3176 = vmax.xlane.f32.xlu0 %v3175
    %v3177 = vpop.xlane.xlu0 %3176
    %v3178 = vmax.f32 %v2826, %v2828
    %v3179 = vmax.f32 %v3178, %v3019
    %v3180 = vmax.f32 %v3179, %v3021
    %3181 = vmax.xlane.f32.xlu0 %v3180
    %v3182 = vpop.xlane.xlu0 %3181
    %v3183 = vmax.f32 %v2832, %v2834
    %v3184 = vmax.f32 %v3183, %v3025
    %v3185 = vmax.f32 %v3184, %v3027
    %3186 = vmax.xlane.f32.xlu0 %v3185
    %v3187 = vpop.xlane.xlu0 %3186
    %v3188 = vmax.f32 %v2836, %v2838
    %v3189 = vmax.f32 %v3188, %v3029
    %v3190 = vmax.f32 %v3189, %v3031
    %3191 = vmax.xlane.f32.xlu0 %v3190
    %v3192 = vpop.xlane.xlu0 %3191
    %v3193 = vmax.f32 %v2842, %v2844
    %v3194 = vmax.f32 %v3193, %v3035
    %v3195 = vmax.f32 %v3194, %v3037
    %3196 = vmax.xlane.f32.xlu0 %v3195
    %v3197 = vpop.xlane.xlu0 %3196
    %v3198 = vmax.f32 %v2846, %v2848
    %v3199 = vmax.f32 %v3198, %v3039
    %v3200 = vmax.f32 %v3199, %v3041
    %3201 = vmax.xlane.f32.xlu0 %v3200
    %v3202 = vpop.xlane.xlu0 %3201
    %v3203 = vmax.f32 %v2852, %v2854
    %v3204 = vmax.f32 %v3203, %v3045
    %v3205 = vmax.f32 %v3204, %v3047
    %3206 = vmax.xlane.f32.xlu0 %v3205
    %v3207 = vpop.xlane.xlu0 %3206
    %v3208 = vmax.f32 %v2856, %v2858
    %v3209 = vmax.f32 %v3208, %v3049
    %v3210 = vmax.f32 %v3209, %v3051
    %3211 = vmax.xlane.f32.xlu0 %v3210
    %v3212 = vpop.xlane.xlu0 %3211
    %v3213 = vmax.f32 %v2862, %v2864
    %v3214 = vmax.f32 %v3213, %v3055
    %v3215 = vmax.f32 %v3214, %v3057
    %3216 = vmax.xlane.f32.xlu0 %v3215
    %v3217 = vpop.xlane.xlu0 %3216
    %v3218 = vmax.f32 %v2866, %v2868
    %v3219 = vmax.f32 %v3218, %v3059
    %v3220 = vmax.f32 %v3219, %v3061
    %3221 = vmax.xlane.f32.xlu0 %v3220
    %v3222 = vpop.xlane.xlu0 %3221
    %v3223 = vmax.f32 %v2872, %v2874
    %v3224 = vmax.f32 %v3223, %v3065
    %v3225 = vmax.f32 %v3224, %v3067
    %3226 = vmax.xlane.f32.xlu0 %v3225
    %v3227 = vpop.xlane.xlu0 %3226
    %v3228 = vmax.f32 %v2876, %v2878
    %v3229 = vmax.f32 %v3228, %v3069
    %v3230 = vmax.f32 %v3229, %v3071
    %3231 = vmax.xlane.f32.xlu0 %v3230
    %v3232 = vpop.xlane.xlu0 %3231
    %v3233 = vmax.f32 %v2882, %v2884
    %v3234 = vmax.f32 %v3233, %v3075
    %v3235 = vmax.f32 %v3234, %v3077
    %3236 = vmax.xlane.f32.xlu0 %v3235
    %v3237 = vpop.xlane.xlu0 %3236
    %v3238 = vmax.f32 %v2886, %v2888
    %v3239 = vmax.f32 %v3238, %v3079
    %v3240 = vmax.f32 %v3239, %v3081
    %3241 = vmax.xlane.f32.xlu0 %v3240
    %v3242 = vpop.xlane.xlu0 %3241
    %v3243 = vmax.f32 %v2892, %v2894
    %v3244 = vmax.f32 %v3243, %v3085
    %v3245 = vmax.f32 %v3244, %v3087
    %3246 = vmax.xlane.f32.xlu0 %v3245
    %v3247 = vpop.xlane.xlu0 %3246
    %v3248 = vmax.f32 %v2896, %v2898
    %v3249 = vmax.f32 %v3248, %v3089
    %v3250 = vmax.f32 %v3249, %v3091
    %3251 = vmax.xlane.f32.xlu0 %v3250
    %v3252 = vpop.xlane.xlu0 %3251
    %v3253 = vmax.f32 %v2902, %v2904
    %v3254 = vmax.f32 %v3253, %v3095
    %v3255 = vmax.f32 %v3254, %v3097
    %3256 = vmax.xlane.f32.xlu0 %v3255
    %v3257 = vpop.xlane.xlu0 %3256
    %v3258 = vmax.f32 %v2906, %v2908
    %v3259 = vmax.f32 %v3258, %v3099
    %v3260 = vmax.f32 %v3259, %v3101
    %3261 = vmax.xlane.f32.xlu0 %v3260
    %v3262 = vpop.xlane.xlu0 %3261
    %v3263 = vmax.f32 %v2912, %v2914
    %v3264 = vmax.f32 %v3263, %v3105
    %v3265 = vmax.f32 %v3264, %v3107
    %3266 = vmax.xlane.f32.xlu0 %v3265
    %v3267 = vpop.xlane.xlu0 %3266
    %v3268 = vmax.f32 %v2916, %v2918
    %v3269 = vmax.f32 %v3268, %v3109
    %v3270 = vmax.f32 %v3269, %v3111
    %3271 = vmax.xlane.f32.xlu0 %v3270
    %v3272 = vpop.xlane.xlu0 %3271
    %v3273 = vmax.f32 %v2922, %v2924
    %v3274 = vmax.f32 %v3273, %v3115
    %v3275 = vmax.f32 %v3274, %v3117
    %3276 = vmax.xlane.f32.xlu0 %v3275
    %v3277 = vpop.xlane.xlu0 %3276
    %v3278 = vmax.f32 %v2926, %v2928
    %v3279 = vmax.f32 %v3278, %v3119
    %v3280 = vmax.f32 %v3279, %v3121
    %3281 = vmax.xlane.f32.xlu0 %v3280
    %v3282 = vpop.xlane.xlu0 %3281
    %v3283 = vmax.f32 %v2932, %v2934
    %v3284 = vmax.f32 %v3283, %v3125
    %v3285 = vmax.f32 %v3284, %v3127
    %3286 = vmax.xlane.f32.xlu0 %v3285
    %v3287 = vpop.xlane.xlu0 %3286
    %v3288 = vmax.f32 %v2936, %v2938
    %v3289 = vmax.f32 %v3288, %v3129
    %v3290 = vmax.f32 %v3289, %v3131
    %3291 = vmax.xlane.f32.xlu0 %v3290
    %v3292 = vpop.xlane.xlu0 %3291
    %v3293 = vmax.f32 %v2942, %v2944
    %v3294 = vmax.f32 %v3293, %v3135
    %v3295 = vmax.f32 %v3294, %v3137
    %3296 = vmax.xlane.f32.xlu0 %v3295
    %v3297 = vpop.xlane.xlu0 %3296
    %v3298 = vmax.f32 %v2946, %v2948
    %v3299 = vmax.f32 %v3298, %v3139
    %v3300 = vmax.f32 %v3299, %v3141
    %3301 = vmax.xlane.f32.xlu0 %v3300
    %v3302 = vpop.xlane.xlu0 %3301
    %v3303 = vmax.f32 %v2952, %v2954
    %v3304 = vmax.f32 %v3303, %v3145
    %v3305 = vmax.f32 %v3304, %v3147
    %3306 = vmax.xlane.f32.xlu0 %v3305
    %v3307 = vpop.xlane.xlu0 %3306
    %v3308 = vmax.f32 %v2956, %v2958
    %v3309 = vmax.f32 %v3308, %v3149
    %v3310 = vmax.f32 %v3309, %v3151
    %3311 = vmax.xlane.f32.xlu0 %v3310
    %v3312 = vpop.xlane.xlu0 %3311
    %v3313 = vsub.f32 %v2802, %v3157
    %v3314 = vsub.f32 %v2804, %v3157
    %v3315 = vsub.f32 %v2995, %v3157
    %v3316 = vsub.f32 %v2997, %v3157
    %v3317 = vsub.f32 %v2806, %v3162
    %v3318 = vsub.f32 %v2808, %v3162
    %v3319 = vsub.f32 %v2999, %v3162
    %v3320 = vsub.f32 %v3001, %v3162
    %v3321 = vsub.f32 %v2812, %v3167
    %v3322 = vsub.f32 %v2814, %v3167
    %v3323 = vsub.f32 %v3005, %v3167
    %v3324 = vsub.f32 %v3007, %v3167
    %v3325 = vsub.f32 %v2816, %v3172
    %v3326 = vsub.f32 %v2818, %v3172
    %v3327 = vsub.f32 %v3009, %v3172
    %v3328 = vsub.f32 %v3011, %v3172
    %v3329 = vsub.f32 %v2822, %v3177
    %v3330 = vsub.f32 %v2824, %v3177
    %v3331 = vsub.f32 %v3015, %v3177
    %v3332 = vsub.f32 %v3017, %v3177
    %v3333 = vsub.f32 %v2826, %v3182
    %v3334 = vsub.f32 %v2828, %v3182
    %v3335 = vsub.f32 %v3019, %v3182
    %v3336 = vsub.f32 %v3021, %v3182
    %v3337 = vsub.f32 %v2832, %v3187
    %v3338 = vsub.f32 %v2834, %v3187
    %v3339 = vsub.f32 %v3025, %v3187
    %v3340 = vsub.f32 %v3027, %v3187
    %v3341 = vsub.f32 %v2836, %v3192
    %v3342 = vsub.f32 %v2838, %v3192
    %v3343 = vsub.f32 %v3029, %v3192
    %v3344 = vsub.f32 %v3031, %v3192
    %v3345 = vsub.f32 %v2842, %v3197
    %v3346 = vsub.f32 %v2844, %v3197
    %v3347 = vsub.f32 %v3035, %v3197
    %v3348 = vsub.f32 %v3037, %v3197
    %v3349 = vsub.f32 %v2846, %v3202
    %v3350 = vsub.f32 %v2848, %v3202
    %v3351 = vsub.f32 %v3039, %v3202
    %v3352 = vsub.f32 %v3041, %v3202
    %v3353 = vsub.f32 %v2852, %v3207
    %v3354 = vsub.f32 %v2854, %v3207
    %v3355 = vsub.f32 %v3045, %v3207
    %v3356 = vsub.f32 %v3047, %v3207
    %v3357 = vsub.f32 %v2856, %v3212
    %v3358 = vsub.f32 %v2858, %v3212
    %v3359 = vsub.f32 %v3049, %v3212
    %v3360 = vsub.f32 %v3051, %v3212
    %v3361 = vsub.f32 %v2862, %v3217
    %v3362 = vsub.f32 %v2864, %v3217
    %v3363 = vsub.f32 %v3055, %v3217
    %v3364 = vsub.f32 %v3057, %v3217
    %v3365 = vsub.f32 %v2866, %v3222
    %v3366 = vsub.f32 %v2868, %v3222
    %v3367 = vsub.f32 %v3059, %v3222
    %v3368 = vsub.f32 %v3061, %v3222
    %v3369 = vsub.f32 %v2872, %v3227
    %v3370 = vsub.f32 %v2874, %v3227
    %v3371 = vsub.f32 %v3065, %v3227
    %v3372 = vsub.f32 %v3067, %v3227
    %v3373 = vsub.f32 %v2876, %v3232
    %v3374 = vsub.f32 %v2878, %v3232
    %v3375 = vsub.f32 %v3069, %v3232
    %v3376 = vsub.f32 %v3071, %v3232
    %v3377 = vsub.f32 %v2882, %v3237
    %v3378 = vsub.f32 %v2884, %v3237
    %v3379 = vsub.f32 %v3075, %v3237
    %v3380 = vsub.f32 %v3077, %v3237
    %v3381 = vsub.f32 %v2886, %v3242
    %v3382 = vsub.f32 %v2888, %v3242
    %v3383 = vsub.f32 %v3079, %v3242
    %v3384 = vsub.f32 %v3081, %v3242
    %v3385 = vsub.f32 %v2892, %v3247
    %v3386 = vsub.f32 %v2894, %v3247
    %v3387 = vsub.f32 %v3085, %v3247
    %v3388 = vsub.f32 %v3087, %v3247
    %v3389 = vsub.f32 %v2896, %v3252
    %v3390 = vsub.f32 %v2898, %v3252
    %v3391 = vsub.f32 %v3089, %v3252
    %v3392 = vsub.f32 %v3091, %v3252
    %v3393 = vsub.f32 %v2902, %v3257
    %v3394 = vsub.f32 %v2904, %v3257
    %v3395 = vsub.f32 %v3095, %v3257
    %v3396 = vsub.f32 %v3097, %v3257
    %v3397 = vsub.f32 %v2906, %v3262
    %v3398 = vsub.f32 %v2908, %v3262
    %v3399 = vsub.f32 %v3099, %v3262
    %v3400 = vsub.f32 %v3101, %v3262
    %v3401 = vsub.f32 %v2912, %v3267
    %v3402 = vsub.f32 %v2914, %v3267
    %v3403 = vsub.f32 %v3105, %v3267
    %v3404 = vsub.f32 %v3107, %v3267
    %v3405 = vsub.f32 %v2916, %v3272
    %v3406 = vsub.f32 %v2918, %v3272
    %v3407 = vsub.f32 %v3109, %v3272
    %v3408 = vsub.f32 %v3111, %v3272
    %v3409 = vsub.f32 %v2922, %v3277
    %v3410 = vsub.f32 %v2924, %v3277
    %v3411 = vsub.f32 %v3115, %v3277
    %v3412 = vsub.f32 %v3117, %v3277
    %v3413 = vsub.f32 %v2926, %v3282
    %v3414 = vsub.f32 %v2928, %v3282
    %v3415 = vsub.f32 %v3119, %v3282
    %v3416 = vsub.f32 %v3121, %v3282
    %v3417 = vsub.f32 %v2932, %v3287
    %v3418 = vsub.f32 %v2934, %v3287
    %v3419 = vsub.f32 %v3125, %v3287
    %v3420 = vsub.f32 %v3127, %v3287
    %v3421 = vsub.f32 %v2936, %v3292
    %v3422 = vsub.f32 %v2938, %v3292
    %v3423 = vsub.f32 %v3129, %v3292
    %v3424 = vsub.f32 %v3131, %v3292
    %v3425 = vsub.f32 %v2942, %v3297
    %v3426 = vsub.f32 %v2944, %v3297
    %v3427 = vsub.f32 %v3135, %v3297
    %v3428 = vsub.f32 %v3137, %v3297
    %v3429 = vsub.f32 %v2946, %v3302
    %v3430 = vsub.f32 %v2948, %v3302
    %v3431 = vsub.f32 %v3139, %v3302
    %v3432 = vsub.f32 %v3141, %v3302
    %v3433 = vsub.f32 %v2952, %v3307
    %v3434 = vsub.f32 %v2954, %v3307
    %v3435 = vsub.f32 %v3145, %v3307
    %v3436 = vsub.f32 %v3147, %v3307
    %v3437 = vsub.f32 %v2956, %v3312
    %v3438 = vsub.f32 %v2958, %v3312
    %v3439 = vsub.f32 %v3149, %v3312
    %v3440 = vsub.f32 %v3151, %v3312
    %v3441 = vmul.f32 %v3313, 1.442695
    %v3442 = vpow.pop %v3441
    %v3443 = vmul.f32 %v3314, 1.442695
    %v3444 = vpow.pop %v3443
    %v3445 = vmul.f32 %v3315, 1.442695
    %v3446 = vpow.pop %v3445
    %v3447 = vmul.f32 %v3316, 1.442695
    %v3448 = vpow.pop %v3447
    %v3449 = vmul.f32 %v3317, 1.442695
    %v3450 = vpow.pop %v3449
    %v3451 = vmul.f32 %v3318, 1.442695
    %v3452 = vpow.pop %v3451
    %v3453 = vmul.f32 %v3319, 1.442695
    %v3454 = vpow.pop %v3453
    %v3455 = vmul.f32 %v3320, 1.442695
    %v3456 = vpow.pop %v3455
    %v3457 = vmul.f32 %v3321, 1.442695
    %v3458 = vpow.pop %v3457
    %v3459 = vmul.f32 %v3322, 1.442695
    %v3460 = vpow.pop %v3459
    %v3461 = vmul.f32 %v3323, 1.442695
    %v3462 = vpow.pop %v3461
    %v3463 = vmul.f32 %v3324, 1.442695
    %v3464 = vpow.pop %v3463
    %v3465 = vmul.f32 %v3325, 1.442695
    %v3466 = vpow.pop %v3465
    %v3467 = vmul.f32 %v3326, 1.442695
    %v3468 = vpow.pop %v3467
    %v3469 = vmul.f32 %v3327, 1.442695
    %v3470 = vpow.pop %v3469
    %v3471 = vmul.f32 %v3328, 1.442695
    %v3472 = vpow.pop %v3471
    %v3473 = vmul.f32 %v3329, 1.442695
    %v3474 = vpow.pop %v3473
    %v3475 = vmul.f32 %v3330, 1.442695
    %v3476 = vpow.pop %v3475
    %v3477 = vmul.f32 %v3331, 1.442695
    %v3478 = vpow.pop %v3477
    %v3479 = vmul.f32 %v3332, 1.442695
    %v3480 = vpow.pop %v3479
    %v3481 = vmul.f32 %v3333, 1.442695
    %v3482 = vpow.pop %v3481
    %v3483 = vmul.f32 %v3334, 1.442695
    %v3484 = vpow.pop %v3483
    %v3485 = vmul.f32 %v3335, 1.442695
    %v3486 = vpow.pop %v3485
    %v3487 = vmul.f32 %v3336, 1.442695
    %v3488 = vpow.pop %v3487
    %v3489 = vmul.f32 %v3337, 1.442695
    %v3490 = vpow.pop %v3489
    %v3491 = vmul.f32 %v3338, 1.442695
    %v3492 = vpow.pop %v3491
    %v3493 = vmul.f32 %v3339, 1.442695
    %v3494 = vpow.pop %v3493
    %v3495 = vmul.f32 %v3340, 1.442695
    %v3496 = vpow.pop %v3495
    %v3497 = vmul.f32 %v3341, 1.442695
    %v3498 = vpow.pop %v3497
    %v3499 = vmul.f32 %v3342, 1.442695
    %v3500 = vpow.pop %v3499
    %v3501 = vmul.f32 %v3343, 1.442695
    %v3502 = vpow.pop %v3501
    %v3503 = vmul.f32 %v3344, 1.442695
    %v3504 = vpow.pop %v3503
    %v3505 = vmul.f32 %v3345, 1.442695
    %v3506 = vpow.pop %v3505
    %v3507 = vmul.f32 %v3346, 1.442695
    %v3508 = vpow.pop %v3507
    %v3509 = vmul.f32 %v3347, 1.442695
    %v3510 = vpow.pop %v3509
    %v3511 = vmul.f32 %v3348, 1.442695
    %v3512 = vpow.pop %v3511
    %v3513 = vmul.f32 %v3349, 1.442695
    %v3514 = vpow.pop %v3513
    %v3515 = vmul.f32 %v3350, 1.442695
    %v3516 = vpow.pop %v3515
    %v3517 = vmul.f32 %v3351, 1.442695
    %v3518 = vpow.pop %v3517
    %v3519 = vmul.f32 %v3352, 1.442695
    %v3520 = vpow.pop %v3519
    %v3521 = vmul.f32 %v3353, 1.442695
    %v3522 = vpow.pop %v3521
    %v3523 = vmul.f32 %v3354, 1.442695
    %v3524 = vpow.pop %v3523
    %v3525 = vmul.f32 %v3355, 1.442695
    %v3526 = vpow.pop %v3525
    %v3527 = vmul.f32 %v3356, 1.442695
    %v3528 = vpow.pop %v3527
    %v3529 = vmul.f32 %v3357, 1.442695
    %v3530 = vpow.pop %v3529
    %v3531 = vmul.f32 %v3358, 1.442695
    %v3532 = vpow.pop %v3531
    %v3533 = vmul.f32 %v3359, 1.442695
    %v3534 = vpow.pop %v3533
    %v3535 = vmul.f32 %v3360, 1.442695
    %v3536 = vpow.pop %v3535
    %v3537 = vmul.f32 %v3361, 1.442695
    %v3538 = vpow.pop %v3537
    %v3539 = vmul.f32 %v3362, 1.442695
    %v3540 = vpow.pop %v3539
    %v3541 = vmul.f32 %v3363, 1.442695
    %v3542 = vpow.pop %v3541
    %v3543 = vmul.f32 %v3364, 1.442695
    %v3544 = vpow.pop %v3543
    %v3545 = vmul.f32 %v3365, 1.442695
    %v3546 = vpow.pop %v3545
    %v3547 = vmul.f32 %v3366, 1.442695
    %v3548 = vpow.pop %v3547
    %v3549 = vmul.f32 %v3367, 1.442695
    %v3550 = vpow.pop %v3549
    %v3551 = vmul.f32 %v3368, 1.442695
    %v3552 = vpow.pop %v3551
    %v3553 = vmul.f32 %v3369, 1.442695
    %v3554 = vpow.pop %v3553
    %v3555 = vmul.f32 %v3370, 1.442695
    %v3556 = vpow.pop %v3555
    %v3557 = vmul.f32 %v3371, 1.442695
    %v3558 = vpow.pop %v3557
    %v3559 = vmul.f32 %v3372, 1.442695
    %v3560 = vpow.pop %v3559
    %v3561 = vmul.f32 %v3373, 1.442695
    %v3562 = vpow.pop %v3561
    %v3563 = vmul.f32 %v3374, 1.442695
    %v3564 = vpow.pop %v3563
    %v3565 = vmul.f32 %v3375, 1.442695
    %v3566 = vpow.pop %v3565
    %v3567 = vmul.f32 %v3376, 1.442695
    %v3568 = vpow.pop %v3567
    %v3569 = vmul.f32 %v3377, 1.442695
    %v3570 = vpow.pop %v3569
    %v3571 = vmul.f32 %v3378, 1.442695
    %v3572 = vpow.pop %v3571
    %v3573 = vmul.f32 %v3379, 1.442695
    %v3574 = vpow.pop %v3573
    %v3575 = vmul.f32 %v3380, 1.442695
    %v3576 = vpow.pop %v3575
    %v3577 = vmul.f32 %v3381, 1.442695
    %v3578 = vpow.pop %v3577
    %v3579 = vmul.f32 %v3382, 1.442695
    %v3580 = vpow.pop %v3579
    %v3581 = vmul.f32 %v3383, 1.442695
    %v3582 = vpow.pop %v3581
    %v3583 = vmul.f32 %v3384, 1.442695
    %v3584 = vpow.pop %v3583
    %v3585 = vmul.f32 %v3385, 1.442695
    %v3586 = vpow.pop %v3585
    %v3587 = vmul.f32 %v3386, 1.442695
    %v3588 = vpow.pop %v3587
    %v3589 = vmul.f32 %v3387, 1.442695
    %v3590 = vpow.pop %v3589
    %v3591 = vmul.f32 %v3388, 1.442695
    %v3592 = vpow.pop %v3591
    %v3593 = vmul.f32 %v3389, 1.442695
    %v3594 = vpow.pop %v3593
    %v3595 = vmul.f32 %v3390, 1.442695
    %v3596 = vpow.pop %v3595
    %v3597 = vmul.f32 %v3391, 1.442695
    %v3598 = vpow.pop %v3597
    %v3599 = vmul.f32 %v3392, 1.442695
    %v3600 = vpow.pop %v3599
    %v3601 = vmul.f32 %v3393, 1.442695
    %v3602 = vpow.pop %v3601
    %v3603 = vmul.f32 %v3394, 1.442695
    %v3604 = vpow.pop %v3603
    %v3605 = vmul.f32 %v3395, 1.442695
    %v3606 = vpow.pop %v3605
    %v3607 = vmul.f32 %v3396, 1.442695
    %v3608 = vpow.pop %v3607
    %v3609 = vmul.f32 %v3397, 1.442695
    %v3610 = vpow.pop %v3609
    %v3611 = vmul.f32 %v3398, 1.442695
    %v3612 = vpow.pop %v3611
    %v3613 = vmul.f32 %v3399, 1.442695
    %v3614 = vpow.pop %v3613
    %v3615 = vmul.f32 %v3400, 1.442695
    %v3616 = vpow.pop %v3615
    %v3617 = vmul.f32 %v3401, 1.442695
    %v3618 = vpow.pop %v3617
    %v3619 = vmul.f32 %v3402, 1.442695
    %v3620 = vpow.pop %v3619
    %v3621 = vmul.f32 %v3403, 1.442695
    %v3622 = vpow.pop %v3621
    %v3623 = vmul.f32 %v3404, 1.442695
    %v3624 = vpow.pop %v3623
    %v3625 = vmul.f32 %v3405, 1.442695
    %v3626 = vpow.pop %v3625
    %v3627 = vmul.f32 %v3406, 1.442695
    %v3628 = vpow.pop %v3627
    %v3629 = vmul.f32 %v3407, 1.442695
    %v3630 = vpow.pop %v3629
    %v3631 = vmul.f32 %v3408, 1.442695
    %v3632 = vpow.pop %v3631
    %v3633 = vmul.f32 %v3409, 1.442695
    %v3634 = vpow.pop %v3633
    %v3635 = vmul.f32 %v3410, 1.442695
    %v3636 = vpow.pop %v3635
    %v3637 = vmul.f32 %v3411, 1.442695
    %v3638 = vpow.pop %v3637
    %v3639 = vmul.f32 %v3412, 1.442695
    %v3640 = vpow.pop %v3639
    %v3641 = vmul.f32 %v3413, 1.442695
    %v3642 = vpow.pop %v3641
    %v3643 = vmul.f32 %v3414, 1.442695
    %v3644 = vpow.pop %v3643
    %v3645 = vmul.f32 %v3415, 1.442695
    %v3646 = vpow.pop %v3645
    %v3647 = vmul.f32 %v3416, 1.442695
    %v3648 = vpow.pop %v3647
    %v3649 = vmul.f32 %v3417, 1.442695
    %v3650 = vpow.pop %v3649
    %v3651 = vmul.f32 %v3418, 1.442695
    %v3652 = vpow.pop %v3651
    %v3653 = vmul.f32 %v3419, 1.442695
    %v3654 = vpow.pop %v3653
    %v3655 = vmul.f32 %v3420, 1.442695
    %v3656 = vpow.pop %v3655
    %v3657 = vmul.f32 %v3421, 1.442695
    %v3658 = vpow.pop %v3657
    %v3659 = vmul.f32 %v3422, 1.442695
    %v3660 = vpow.pop %v3659
    %v3661 = vmul.f32 %v3423, 1.442695
    %v3662 = vpow.pop %v3661
    %v3663 = vmul.f32 %v3424, 1.442695
    %v3664 = vpow.pop %v3663
    %v3665 = vmul.f32 %v3425, 1.442695
    %v3666 = vpow.pop %v3665
    %v3667 = vmul.f32 %v3426, 1.442695
    %v3668 = vpow.pop %v3667
    %v3669 = vmul.f32 %v3427, 1.442695
    %v3670 = vpow.pop %v3669
    %v3671 = vmul.f32 %v3428, 1.442695
    %v3672 = vpow.pop %v3671
    %v3673 = vmul.f32 %v3429, 1.442695
    %v3674 = vpow.pop %v3673
    %v3675 = vmul.f32 %v3430, 1.442695
    %v3676 = vpow.pop %v3675
    %v3677 = vmul.f32 %v3431, 1.442695
    %v3678 = vpow.pop %v3677
    %v3679 = vmul.f32 %v3432, 1.442695
    %v3680 = vpow.pop %v3679
    %v3681 = vmul.f32 %v3433, 1.442695
    %v3682 = vpow.pop %v3681
    %v3683 = vmul.f32 %v3434, 1.442695
    %v3684 = vpow.pop %v3683
    %v3685 = vmul.f32 %v3435, 1.442695
    %v3686 = vpow.pop %v3685
    %v3687 = vmul.f32 %v3436, 1.442695
    %v3688 = vpow.pop %v3687
    %v3689 = vmul.f32 %v3437, 1.442695
    %v3690 = vpow.pop %v3689
    %v3691 = vmul.f32 %v3438, 1.442695
    %v3692 = vpow.pop %v3691
    %v3693 = vmul.f32 %v3439, 1.442695
    %v3694 = vpow.pop %v3693
    %v3695 = vmul.f32 %v3440, 1.442695
    %v3696 = vpow.pop %v3695
    %v3697 = vpack.c.bf16 %v3450, %v3442
    %v3698 = vpack.c.bf16 %v3452, %v3444
    %v3699 = vpack.c.bf16 %v3454, %v3446
    %v3700 = vpack.c.bf16 %v3456, %v3448
    %v3701 = vpack.c.bf16 %v3466, %v3458
    %v3702 = vpack.c.bf16 %v3468, %v3460
    %v3703 = vpack.c.bf16 %v3470, %v3462
    %v3704 = vpack.c.bf16 %v3472, %v3464
    %v3705 = vpack.c.bf16 %v3482, %v3474
    %v3706 = vpack.c.bf16 %v3484, %v3476
    %v3707 = vpack.c.bf16 %v3486, %v3478
    %v3708 = vpack.c.bf16 %v3488, %v3480
    %v3709 = vpack.c.bf16 %v3498, %v3490
    %v3710 = vpack.c.bf16 %v3500, %v3492
    %v3711 = vpack.c.bf16 %v3502, %v3494
    %v3712 = vpack.c.bf16 %v3504, %v3496
    %v3713 = vpack.c.bf16 %v3514, %v3506
    %v3714 = vpack.c.bf16 %v3516, %v3508
    %v3715 = vpack.c.bf16 %v3518, %v3510
    %v3716 = vpack.c.bf16 %v3520, %v3512
    %v3717 = vpack.c.bf16 %v3530, %v3522
    %v3718 = vpack.c.bf16 %v3532, %v3524
    %v3719 = vpack.c.bf16 %v3534, %v3526
    %v3720 = vpack.c.bf16 %v3536, %v3528
    %v3721 = vpack.c.bf16 %v3546, %v3538
    %v3722 = vpack.c.bf16 %v3548, %v3540
    %v3723 = vpack.c.bf16 %v3550, %v3542
    %v3724 = vpack.c.bf16 %v3552, %v3544
    %v3725 = vpack.c.bf16 %v3562, %v3554
    %v3726 = vpack.c.bf16 %v3564, %v3556
    %v3727 = vpack.c.bf16 %v3566, %v3558
    %v3728 = vpack.c.bf16 %v3568, %v3560
    %v3729 = vpack.c.bf16 %v3578, %v3570
    %v3730 = vpack.c.bf16 %v3580, %v3572
    %v3731 = vpack.c.bf16 %v3582, %v3574
    %v3732 = vpack.c.bf16 %v3584, %v3576
    %v3733 = vpack.c.bf16 %v3594, %v3586
    %v3734 = vpack.c.bf16 %v3596, %v3588
    %v3735 = vpack.c.bf16 %v3598, %v3590
    %v3736 = vpack.c.bf16 %v3600, %v3592
    %v3737 = vpack.c.bf16 %v3610, %v3602
    %v3738 = vpack.c.bf16 %v3612, %v3604
    %v3739 = vpack.c.bf16 %v3614, %v3606
    %v3740 = vpack.c.bf16 %v3616, %v3608
    %v3741 = vpack.c.bf16 %v3626, %v3618
    %v3742 = vpack.c.bf16 %v3628, %v3620
    %v3743 = vpack.c.bf16 %v3630, %v3622
    %v3744 = vpack.c.bf16 %v3632, %v3624
    %v3745 = vpack.c.bf16 %v3642, %v3634
    %v3746 = vpack.c.bf16 %v3644, %v3636
    %v3747 = vpack.c.bf16 %v3646, %v3638
    %v3748 = vpack.c.bf16 %v3648, %v3640
    %v3749 = vpack.c.bf16 %v3658, %v3650
    %v3750 = vpack.c.bf16 %v3660, %v3652
    %v3751 = vpack.c.bf16 %v3662, %v3654
    %v3752 = vpack.c.bf16 %v3664, %v3656
    %v3753 = vpack.c.bf16 %v3674, %v3666
    %v3754 = vpack.c.bf16 %v3676, %v3668
    %v3755 = vpack.c.bf16 %v3678, %v3670
    %v3756 = vpack.c.bf16 %v3680, %v3672
    %v3757 = vpack.c.bf16 %v3690, %v3682
    %v3758 = vpack.c.bf16 %v3692, %v3684
    %v3759 = vpack.c.bf16 %v3694, %v3686
    %v3760 = vpack.c.bf16 %v3696, %v3688
    %v3825 = vunpack.c.l.b16 %v3697
    %v3826 = vunpack.c.l.b16 %v3698
    %v3827 = vunpack.c.l.b16 %v3699
    %v3828 = vunpack.c.l.b16 %v3700
    %v3829 = vunpack.c.h.b16 %v3697
    %v3830 = vunpack.c.h.b16 %v3698
    %v3831 = vunpack.c.h.b16 %v3699
    %v3832 = vunpack.c.h.b16 %v3700
    %v3833 = vunpack.c.l.b16 %v3701
    %v3834 = vunpack.c.l.b16 %v3702
    %v3835 = vunpack.c.l.b16 %v3703
    %v3836 = vunpack.c.l.b16 %v3704
    %v3837 = vunpack.c.h.b16 %v3701
    %v3838 = vunpack.c.h.b16 %v3702
    %v3839 = vunpack.c.h.b16 %v3703
    %v3840 = vunpack.c.h.b16 %v3704
    %v3841 = vunpack.c.l.b16 %v3705
    %v3842 = vunpack.c.l.b16 %v3706
    %v3843 = vunpack.c.l.b16 %v3707
    %v3844 = vunpack.c.l.b16 %v3708
    %v3845 = vunpack.c.h.b16 %v3705
    %v3846 = vunpack.c.h.b16 %v3706
    %v3847 = vunpack.c.h.b16 %v3707
    %v3848 = vunpack.c.h.b16 %v3708
    %v3849 = vunpack.c.l.b16 %v3709
    %v3850 = vunpack.c.l.b16 %v3710
    %v3851 = vunpack.c.l.b16 %v3711
    %v3852 = vunpack.c.l.b16 %v3712
    %v3853 = vunpack.c.h.b16 %v3709
    %v3854 = vunpack.c.h.b16 %v3710
    %v3855 = vunpack.c.h.b16 %v3711
    %v3856 = vunpack.c.h.b16 %v3712
    %v3857 = vunpack.c.l.b16 %v3713
    %v3858 = vunpack.c.l.b16 %v3714
    %v3859 = vunpack.c.l.b16 %v3715
    %v3860 = vunpack.c.l.b16 %v3716
    %v3861 = vunpack.c.h.b16 %v3713
    %v3862 = vunpack.c.h.b16 %v3714
    %v3863 = vunpack.c.h.b16 %v3715
    %v3864 = vunpack.c.h.b16 %v3716
    %v3865 = vunpack.c.l.b16 %v3717
    %v3866 = vunpack.c.l.b16 %v3718
    %v3867 = vunpack.c.l.b16 %v3719
    %v3868 = vunpack.c.l.b16 %v3720
    %v3869 = vunpack.c.h.b16 %v3717
    %v3870 = vunpack.c.h.b16 %v3718
    %v3871 = vunpack.c.h.b16 %v3719
    %v3872 = vunpack.c.h.b16 %v3720
    %v3873 = vunpack.c.l.b16 %v3721
    %v3874 = vunpack.c.l.b16 %v3722
    %v3875 = vunpack.c.l.b16 %v3723
    %v3876 = vunpack.c.l.b16 %v3724
    %v3877 = vunpack.c.h.b16 %v3721
    %v3878 = vunpack.c.h.b16 %v3722
    %v3879 = vunpack.c.h.b16 %v3723
    %v3880 = vunpack.c.h.b16 %v3724
    %v3881 = vunpack.c.l.b16 %v3725
    %v3882 = vunpack.c.l.b16 %v3726
    %v3883 = vunpack.c.l.b16 %v3727
    %v3884 = vunpack.c.l.b16 %v3728
    %v3885 = vunpack.c.h.b16 %v3725
    %v3886 = vunpack.c.h.b16 %v3726
    %v3887 = vunpack.c.h.b16 %v3727
    %v3888 = vunpack.c.h.b16 %v3728
    %v3889 = vunpack.c.l.b16 %v3729
    %v3890 = vunpack.c.l.b16 %v3730
    %v3891 = vunpack.c.l.b16 %v3731
    %v3892 = vunpack.c.l.b16 %v3732
    %v3893 = vunpack.c.h.b16 %v3729
    %v3894 = vunpack.c.h.b16 %v3730
    %v3895 = vunpack.c.h.b16 %v3731
    %v3896 = vunpack.c.h.b16 %v3732
    %v3897 = vunpack.c.l.b16 %v3733
    %v3898 = vunpack.c.l.b16 %v3734
    %v3899 = vunpack.c.l.b16 %v3735
    %v3900 = vunpack.c.l.b16 %v3736
    %v3901 = vunpack.c.h.b16 %v3733
    %v3902 = vunpack.c.h.b16 %v3734
    %v3903 = vunpack.c.h.b16 %v3735
    %v3904 = vunpack.c.h.b16 %v3736
    %v3905 = vunpack.c.l.b16 %v3737
    %v3906 = vunpack.c.l.b16 %v3738
    %v3907 = vunpack.c.l.b16 %v3739
    %v3908 = vunpack.c.l.b16 %v3740
    %v3909 = vunpack.c.h.b16 %v3737
    %v3910 = vunpack.c.h.b16 %v3738
    %v3911 = vunpack.c.h.b16 %v3739
    %v3912 = vunpack.c.h.b16 %v3740
    %v3913 = vunpack.c.l.b16 %v3741
    %v3914 = vunpack.c.l.b16 %v3742
    %v3915 = vunpack.c.l.b16 %v3743
    %v3916 = vunpack.c.l.b16 %v3744
    %v3917 = vunpack.c.h.b16 %v3741
    %v3918 = vunpack.c.h.b16 %v3742
    %v3919 = vunpack.c.h.b16 %v3743
    %v3920 = vunpack.c.h.b16 %v3744
    %v3921 = vunpack.c.l.b16 %v3745
    %v3922 = vunpack.c.l.b16 %v3746
    %v3923 = vunpack.c.l.b16 %v3747
    %v3924 = vunpack.c.l.b16 %v3748
    %v3925 = vunpack.c.h.b16 %v3745
    %v3926 = vunpack.c.h.b16 %v3746
    %v3927 = vunpack.c.h.b16 %v3747
    %v3928 = vunpack.c.h.b16 %v3748
    %v3929 = vunpack.c.l.b16 %v3749
    %v3930 = vunpack.c.l.b16 %v3750
    %v3931 = vunpack.c.l.b16 %v3751
    %v3932 = vunpack.c.l.b16 %v3752
    %v3933 = vunpack.c.h.b16 %v3749
    %v3934 = vunpack.c.h.b16 %v3750
    %v3935 = vunpack.c.h.b16 %v3751
    %v3936 = vunpack.c.h.b16 %v3752
    %v3937 = vunpack.c.l.b16 %v3753
    %v3938 = vunpack.c.l.b16 %v3754
    %v3939 = vunpack.c.l.b16 %v3755
    %v3940 = vunpack.c.l.b16 %v3756
    %v3941 = vunpack.c.h.b16 %v3753
    %v3942 = vunpack.c.h.b16 %v3754
    %v3943 = vunpack.c.h.b16 %v3755
    %v3944 = vunpack.c.h.b16 %v3756
    %v3945 = vunpack.c.l.b16 %v3757
    %v3946 = vunpack.c.l.b16 %v3758
    %v3947 = vunpack.c.l.b16 %v3759
    %v3948 = vunpack.c.l.b16 %v3760
    %v3949 = vunpack.c.h.b16 %v3757
    %v3950 = vunpack.c.h.b16 %v3758
    %v3951 = vunpack.c.h.b16 %v3759
    %v3952 = vunpack.c.h.b16 %v3760
    %v3953 = vpack.c.b16 %v3826, %v3825
    %v3954 = vpack.c.b16 %v3828, %v3827
    %v3955 = vpack.c.b16 %v3830, %v3829
    %v3956 = vpack.c.b16 %v3832, %v3831
    %v3957 = vpack.c.b16 %v3834, %v3833
    %v3958 = vpack.c.b16 %v3836, %v3835
    %v3959 = vpack.c.b16 %v3838, %v3837
    %v3960 = vpack.c.b16 %v3840, %v3839
    %v3961 = vpack.c.b16 %v3842, %v3841
    %v3962 = vpack.c.b16 %v3844, %v3843
    %v3963 = vpack.c.b16 %v3846, %v3845
    %v3964 = vpack.c.b16 %v3848, %v3847
    %v3965 = vpack.c.b16 %v3850, %v3849
    %v3966 = vpack.c.b16 %v3852, %v3851
    %v3967 = vpack.c.b16 %v3854, %v3853
    %v3968 = vpack.c.b16 %v3856, %v3855
    %v3969 = vpack.c.b16 %v3858, %v3857
    %v3970 = vpack.c.b16 %v3860, %v3859
    %v3971 = vpack.c.b16 %v3862, %v3861
    %v3972 = vpack.c.b16 %v3864, %v3863
    %v3973 = vpack.c.b16 %v3866, %v3865
    %v3974 = vpack.c.b16 %v3868, %v3867
    %v3975 = vpack.c.b16 %v3870, %v3869
    %v3976 = vpack.c.b16 %v3872, %v3871
    %v3977 = vpack.c.b16 %v3874, %v3873
    %v3978 = vpack.c.b16 %v3876, %v3875
    %v3979 = vpack.c.b16 %v3878, %v3877
    %v3980 = vpack.c.b16 %v3880, %v3879
    %v3981 = vpack.c.b16 %v3882, %v3881
    %v3982 = vpack.c.b16 %v3884, %v3883
    %v3983 = vpack.c.b16 %v3886, %v3885
    %v3984 = vpack.c.b16 %v3888, %v3887
    %v3985 = vpack.c.b16 %v3890, %v3889
    %v3986 = vpack.c.b16 %v3892, %v3891
    %v3987 = vpack.c.b16 %v3894, %v3893
    %v3988 = vpack.c.b16 %v3896, %v3895
    %v3989 = vpack.c.b16 %v3898, %v3897
    %v3990 = vpack.c.b16 %v3900, %v3899
    %v3991 = vpack.c.b16 %v3902, %v3901
    %v3992 = vpack.c.b16 %v3904, %v3903
    %v3993 = vpack.c.b16 %v3906, %v3905
    %v3994 = vpack.c.b16 %v3908, %v3907
    %v3995 = vpack.c.b16 %v3910, %v3909
    %v3996 = vpack.c.b16 %v3912, %v3911
    %v3997 = vpack.c.b16 %v3914, %v3913
    %v3998 = vpack.c.b16 %v3916, %v3915
    %v3999 = vpack.c.b16 %v3918, %v3917
    %v4000 = vpack.c.b16 %v3920, %v3919
    %v4001 = vpack.c.b16 %v3922, %v3921
    %v4002 = vpack.c.b16 %v3924, %v3923
    %v4003 = vpack.c.b16 %v3926, %v3925
    %v4004 = vpack.c.b16 %v3928, %v3927
    %v4005 = vpack.c.b16 %v3930, %v3929
    %v4006 = vpack.c.b16 %v3932, %v3931
    %v4007 = vpack.c.b16 %v3934, %v3933
    %v4008 = vpack.c.b16 %v3936, %v3935
    %v4009 = vpack.c.b16 %v3938, %v3937
    %v4010 = vpack.c.b16 %v3940, %v3939
    %v4011 = vpack.c.b16 %v3942, %v3941
    %v4012 = vpack.c.b16 %v3944, %v3943
    %v4013 = vpack.c.b16 %v3946, %v3945
    %v4014 = vpack.c.b16 %v3948, %v3947
    %v4015 = vpack.c.b16 %v3950, %v3949
    %v4016 = vpack.c.b16 %v3952, %v3951
    %4081 = vst [vmem:[#allocation11] sm:$0xff] %v3953
    %4082 = vst [vmem:[#allocation11 + $0x8] sm:$0xff] %v3954
    %4083 = vst [vmem:[#allocation11 + $0x10] sm:$0xff] %v3955
    %4084 = vst [vmem:[#allocation11 + $0x18] sm:$0xff] %v3956
    %4085 = vst [vmem:[#allocation11 + $0x20] sm:$0xff] %v3957
    %4086 = vst [vmem:[#allocation11 + $0x28] sm:$0xff] %v3958
    %4087 = vst [vmem:[#allocation11 + $0x30] sm:$0xff] %v3959
    %4088 = vst [vmem:[#allocation11 + $0x38] sm:$0xff] %v3960
    %4089 = vst [vmem:[#allocation11 + $0x40] sm:$0xff] %v3961
    %4090 = vst [vmem:[#allocation11 + $0x48] sm:$0xff] %v3962
    %4091 = vst [vmem:[#allocation11 + $0x50] sm:$0xff] %v3963
    %4092 = vst [vmem:[#allocation11 + $0x58] sm:$0xff] %v3964
    %4093 = vst [vmem:[#allocation11 + $0x60] sm:$0xff] %v3965
    %4094 = vst [vmem:[#allocation11 + $0x68] sm:$0xff] %v3966
    %4095 = vst [vmem:[#allocation11 + $0x70] sm:$0xff] %v3967
    %4096 = vst [vmem:[#allocation11 + $0x78] sm:$0xff] %v3968
    %4097 = vst [vmem:[#allocation11 + $0x80] sm:$0xff] %v3969
    %4098 = vst [vmem:[#allocation11 + $0x88] sm:$0xff] %v3970
    %4099 = vst [vmem:[#allocation11 + $0x90] sm:$0xff] %v3971
    %4100 = vst [vmem:[#allocation11 + $0x98] sm:$0xff] %v3972
    %4101 = vst [vmem:[#allocation11 + $0xa0] sm:$0xff] %v3973
    %4102 = vst [vmem:[#allocation11 + $0xa8] sm:$0xff] %v3974
    %4103 = vst [vmem:[#allocation11 + $0xb0] sm:$0xff] %v3975
    %4104 = vst [vmem:[#allocation11 + $0xb8] sm:$0xff] %v3976
    %4105 = vst [vmem:[#allocation11 + $0xc0] sm:$0xff] %v3977
    %4106 = vst [vmem:[#allocation11 + $0xc8] sm:$0xff] %v3978
    %4107 = vst [vmem:[#allocation11 + $0xd0] sm:$0xff] %v3979
    %4108 = vst [vmem:[#allocation11 + $0xd8] sm:$0xff] %v3980
    %4109 = vst [vmem:[#allocation11 + $0xe0] sm:$0xff] %v3981
    %4110 = vst [vmem:[#allocation11 + $0xe8] sm:$0xff] %v3982
    %4111 = vst [vmem:[#allocation11 + $0xf0] sm:$0xff] %v3983
    %4112 = vst [vmem:[#allocation11 + $0xf8] sm:$0xff] %v3984
    %4113 = vst [vmem:[#allocation11 + $0x100] sm:$0xff] %v3985
    %4114 = vst [vmem:[#allocation11 + $0x108] sm:$0xff] %v3986
    %4115 = vst [vmem:[#allocation11 + $0x110] sm:$0xff] %v3987
    %4116 = vst [vmem:[#allocation11 + $0x118] sm:$0xff] %v3988
    %4117 = vst [vmem:[#allocation11 + $0x120] sm:$0xff] %v3989
    %4118 = vst [vmem:[#allocation11 + $0x128] sm:$0xff] %v3990
    %4119 = vst [vmem:[#allocation11 + $0x130] sm:$0xff] %v3991
    %4120 = vst [vmem:[#allocation11 + $0x138] sm:$0xff] %v3992
    %4121 = vst [vmem:[#allocation11 + $0x140] sm:$0xff] %v3993
    %4122 = vst [vmem:[#allocation11 + $0x148] sm:$0xff] %v3994
    %4123 = vst [vmem:[#allocation11 + $0x150] sm:$0xff] %v3995
    %4124 = vst [vmem:[#allocation11 + $0x158] sm:$0xff] %v3996
    %4125 = vst [vmem:[#allocation11 + $0x160] sm:$0xff] %v3997
    %4126 = vst [vmem:[#allocation11 + $0x168] sm:$0xff] %v3998
    %4127 = vst [vmem:[#allocation11 + $0x170] sm:$0xff] %v3999
    %4128 = vst [vmem:[#allocation11 + $0x178] sm:$0xff] %v4000
    %4129 = vst [vmem:[#allocation11 + $0x180] sm:$0xff] %v4001
    %4130 = vst [vmem:[#allocation11 + $0x188] sm:$0xff] %v4002
    %4131 = vst [vmem:[#allocation11 + $0x190] sm:$0xff] %v4003
    %4132 = vst [vmem:[#allocation11 + $0x198] sm:$0xff] %v4004
    %4133 = vst [vmem:[#allocation11 + $0x1a0] sm:$0xff] %v4005
    %4134 = vst [vmem:[#allocation11 + $0x1a8] sm:$0xff] %v4006
    %4135 = vst [vmem:[#allocation11 + $0x1b0] sm:$0xff] %v4007
    %4136 = vst [vmem:[#allocation11 + $0x1b8] sm:$0xff] %v4008
    %4137 = vst [vmem:[#allocation11 + $0x1c0] sm:$0xff] %v4009
    %4138 = vst [vmem:[#allocation11 + $0x1c8] sm:$0xff] %v4010
    %4139 = vst [vmem:[#allocation11 + $0x1d0] sm:$0xff] %v4011
    %4140 = vst [vmem:[#allocation11 + $0x1d8] sm:$0xff] %v4012
    %4141 = vst [vmem:[#allocation11 + $0x1e0] sm:$0xff] %v4013
    %4142 = vst [vmem:[#allocation11 + $0x1e8] sm:$0xff] %v4014
    %4143 = vst [vmem:[#allocation11 + $0x1f0] sm:$0xff] %v4015
    %4144 = vst [vmem:[#allocation11 + $0x1f8] sm:$0xff] %v4016
    %v4145 = vld [vmem:[#allocation11] sm:$0xff]
    %v4146 = vld [vmem:[#allocation11 + $0x8] sm:$0xff]
    %v4147 = vld [vmem:[#allocation11 + $0x10] sm:$0xff]
    %v4148 = vld [vmem:[#allocation11 + $0x18] sm:$0xff]
    %v4149 = vld [vmem:[#allocation11 + $0x20] sm:$0xff]
    %v4150 = vld [vmem:[#allocation11 + $0x28] sm:$0xff]
    %v4151 = vld [vmem:[#allocation11 + $0x30] sm:$0xff]
    %v4152 = vld [vmem:[#allocation11 + $0x38] sm:$0xff]
    %v4153 = vld [vmem:[#allocation11 + $0x40] sm:$0xff]
    %v4154 = vld [vmem:[#allocation11 + $0x48] sm:$0xff]
    %v4155 = vld [vmem:[#allocation11 + $0x50] sm:$0xff]
    %v4156 = vld [vmem:[#allocation11 + $0x58] sm:$0xff]
    %v4157 = vld [vmem:[#allocation11 + $0x60] sm:$0xff]
    %v4158 = vld [vmem:[#allocation11 + $0x68] sm:$0xff]
    %v4159 = vld [vmem:[#allocation11 + $0x70] sm:$0xff]
    %v4160 = vld [vmem:[#allocation11 + $0x78] sm:$0xff]
    %v4161 = vld [vmem:[#allocation11 + $0x80] sm:$0xff]
    %v4162 = vld [vmem:[#allocation11 + $0x88] sm:$0xff]
    %v4163 = vld [vmem:[#allocation11 + $0x90] sm:$0xff]
    %v4164 = vld [vmem:[#allocation11 + $0x98] sm:$0xff]
    %v4165 = vld [vmem:[#allocation11 + $0xa0] sm:$0xff]
    %v4166 = vld [vmem:[#allocation11 + $0xa8] sm:$0xff]
    %v4167 = vld [vmem:[#allocation11 + $0xb0] sm:$0xff]
    %v4168 = vld [vmem:[#allocation11 + $0xb8] sm:$0xff]
    %v4169 = vld [vmem:[#allocation11 + $0xc0] sm:$0xff]
    %v4170 = vld [vmem:[#allocation11 + $0xc8] sm:$0xff]
    %v4171 = vld [vmem:[#allocation11 + $0xd0] sm:$0xff]
    %v4172 = vld [vmem:[#allocation11 + $0xd8] sm:$0xff]
    %v4173 = vld [vmem:[#allocation11 + $0xe0] sm:$0xff]
    %v4174 = vld [vmem:[#allocation11 + $0xe8] sm:$0xff]
    %v4175 = vld [vmem:[#allocation11 + $0xf0] sm:$0xff]
    %v4176 = vld [vmem:[#allocation11 + $0xf8] sm:$0xff]
    %v4177 = vld [vmem:[#allocation11 + $0x100] sm:$0xff]
    %v4178 = vld [vmem:[#allocation11 + $0x108] sm:$0xff]
    %v4179 = vld [vmem:[#allocation11 + $0x110] sm:$0xff]
    %v4180 = vld [vmem:[#allocation11 + $0x118] sm:$0xff]
    %v4181 = vld [vmem:[#allocation11 + $0x120] sm:$0xff]
    %v4182 = vld [vmem:[#allocation11 + $0x128] sm:$0xff]
    %v4183 = vld [vmem:[#allocation11 + $0x130] sm:$0xff]
    %v4184 = vld [vmem:[#allocation11 + $0x138] sm:$0xff]
    %v4185 = vld [vmem:[#allocation11 + $0x140] sm:$0xff]
    %v4186 = vld [vmem:[#allocation11 + $0x148] sm:$0xff]
    %v4187 = vld [vmem:[#allocation11 + $0x150] sm:$0xff]
    %v4188 = vld [vmem:[#allocation11 + $0x158] sm:$0xff]
    %v4189 = vld [vmem:[#allocation11 + $0x160] sm:$0xff]
    %v4190 = vld [vmem:[#allocation11 + $0x168] sm:$0xff]
    %v4191 = vld [vmem:[#allocation11 + $0x170] sm:$0xff]
    %v4192 = vld [vmem:[#allocation11 + $0x178] sm:$0xff]
    %v4193 = vld [vmem:[#allocation11 + $0x180] sm:$0xff]
    %v4194 = vld [vmem:[#allocation11 + $0x188] sm:$0xff]
    %v4195 = vld [vmem:[#allocation11 + $0x190] sm:$0xff]
    %v4196 = vld [vmem:[#allocation11 + $0x198] sm:$0xff]
    %v4197 = vld [vmem:[#allocation11 + $0x1a0] sm:$0xff]
    %v4198 = vld [vmem:[#allocation11 + $0x1a8] sm:$0xff]
    %v4199 = vld [vmem:[#allocation11 + $0x1b0] sm:$0xff]
    %v4200 = vld [vmem:[#allocation11 + $0x1b8] sm:$0xff]
    %v4201 = vld [vmem:[#allocation11 + $0x1c0] sm:$0xff]
    %v4202 = vld [vmem:[#allocation11 + $0x1c8] sm:$0xff]
    %v4203 = vld [vmem:[#allocation11 + $0x1d0] sm:$0xff]
    %v4204 = vld [vmem:[#allocation11 + $0x1d8] sm:$0xff]
    %v4205 = vld [vmem:[#allocation11 + $0x1e0] sm:$0xff]
    %v4206 = vld [vmem:[#allocation11 + $0x1e8] sm:$0xff]
    %v4207 = vld [vmem:[#allocation11 + $0x1f0] sm:$0xff]
    %v4208 = vld [vmem:[#allocation11 + $0x1f8] sm:$0xff]
    %v4209 = vunpack.c.l.bf16 %v4145
    %v4210 = vunpack.c.h.bf16 %v4145
    %v4211 = vunpack.c.l.bf16 %v4146
    %v4212 = vunpack.c.h.bf16 %v4146
    %v4213 = vunpack.c.l.bf16 %v4147
    %v4214 = vunpack.c.h.bf16 %v4147
    %v4215 = vunpack.c.l.bf16 %v4148
    %v4216 = vunpack.c.h.bf16 %v4148
    %v4217 = vunpack.c.l.bf16 %v4149
    %v4218 = vunpack.c.h.bf16 %v4149
    %v4219 = vunpack.c.l.bf16 %v4150
    %v4220 = vunpack.c.h.bf16 %v4150
    %v4221 = vunpack.c.l.bf16 %v4151
    %v4222 = vunpack.c.h.bf16 %v4151
    %v4223 = vunpack.c.l.bf16 %v4152
    %v4224 = vunpack.c.h.bf16 %v4152
    %v4225 = vunpack.c.l.bf16 %v4153
    %v4226 = vunpack.c.h.bf16 %v4153
    %v4227 = vunpack.c.l.bf16 %v4154
    %v4228 = vunpack.c.h.bf16 %v4154
    %v4229 = vunpack.c.l.bf16 %v4155
    %v4230 = vunpack.c.h.bf16 %v4155
    %v4231 = vunpack.c.l.bf16 %v4156
    %v4232 = vunpack.c.h.bf16 %v4156
    %v4233 = vunpack.c.l.bf16 %v4157
    %v4234 = vunpack.c.h.bf16 %v4157
    %v4235 = vunpack.c.l.bf16 %v4158
    %v4236 = vunpack.c.h.bf16 %v4158
    %v4237 = vunpack.c.l.bf16 %v4159
    %v4238 = vunpack.c.h.bf16 %v4159
    %v4239 = vunpack.c.l.bf16 %v4160
    %v4240 = vunpack.c.h.bf16 %v4160
    %v4241 = vunpack.c.l.bf16 %v4161
    %v4242 = vunpack.c.h.bf16 %v4161
    %v4243 = vunpack.c.l.bf16 %v4162
    %v4244 = vunpack.c.h.bf16 %v4162
    %v4245 = vunpack.c.l.bf16 %v4163
    %v4246 = vunpack.c.h.bf16 %v4163
    %v4247 = vunpack.c.l.bf16 %v4164
    %v4248 = vunpack.c.h.bf16 %v4164
    %v4249 = vunpack.c.l.bf16 %v4165
    %v4250 = vunpack.c.h.bf16 %v4165
    %v4251 = vunpack.c.l.bf16 %v4166
    %v4252 = vunpack.c.h.bf16 %v4166
    %v4253 = vunpack.c.l.bf16 %v4167
    %v4254 = vunpack.c.h.bf16 %v4167
    %v4255 = vunpack.c.l.bf16 %v4168
    %v4256 = vunpack.c.h.bf16 %v4168
    %v4257 = vunpack.c.l.bf16 %v4169
    %v4258 = vunpack.c.h.bf16 %v4169
    %v4259 = vunpack.c.l.bf16 %v4170
    %v4260 = vunpack.c.h.bf16 %v4170
    %v4261 = vunpack.c.l.bf16 %v4171
    %v4262 = vunpack.c.h.bf16 %v4171
    %v4263 = vunpack.c.l.bf16 %v4172
    %v4264 = vunpack.c.h.bf16 %v4172
    %v4265 = vunpack.c.l.bf16 %v4173
    %v4266 = vunpack.c.h.bf16 %v4173
    %v4267 = vunpack.c.l.bf16 %v4174
    %v4268 = vunpack.c.h.bf16 %v4174
    %v4269 = vunpack.c.l.bf16 %v4175
    %v4270 = vunpack.c.h.bf16 %v4175
    %v4271 = vunpack.c.l.bf16 %v4176
    %v4272 = vunpack.c.h.bf16 %v4176
    %v4273 = vunpack.c.l.bf16 %v4177
    %v4274 = vunpack.c.h.bf16 %v4177
    %v4275 = vunpack.c.l.bf16 %v4178
    %v4276 = vunpack.c.h.bf16 %v4178
    %v4277 = vunpack.c.l.bf16 %v4179
    %v4278 = vunpack.c.h.bf16 %v4179
    %v4279 = vunpack.c.l.bf16 %v4180
    %v4280 = vunpack.c.h.bf16 %v4180
    %v4281 = vunpack.c.l.bf16 %v4181
    %v4282 = vunpack.c.h.bf16 %v4181
    %v4283 = vunpack.c.l.bf16 %v4182
    %v4284 = vunpack.c.h.bf16 %v4182
    %v4285 = vunpack.c.l.bf16 %v4183
    %v4286 = vunpack.c.h.bf16 %v4183
    %v4287 = vunpack.c.l.bf16 %v4184
    %v4288 = vunpack.c.h.bf16 %v4184
    %v4289 = vunpack.c.l.bf16 %v4185
    %v4290 = vunpack.c.h.bf16 %v4185
    %v4291 = vunpack.c.l.bf16 %v4186
    %v4292 = vunpack.c.h.bf16 %v4186
    %v4293 = vunpack.c.l.bf16 %v4187
    %v4294 = vunpack.c.h.bf16 %v4187
    %v4295 = vunpack.c.l.bf16 %v4188
    %v4296 = vunpack.c.h.bf16 %v4188
    %v4297 = vunpack.c.l.bf16 %v4189
    %v4298 = vunpack.c.h.bf16 %v4189
    %v4299 = vunpack.c.l.bf16 %v4190
    %v4300 = vunpack.c.h.bf16 %v4190
    %v4301 = vunpack.c.l.bf16 %v4191
    %v4302 = vunpack.c.h.bf16 %v4191
    %v4303 = vunpack.c.l.bf16 %v4192
    %v4304 = vunpack.c.h.bf16 %v4192
    %v4305 = vunpack.c.l.bf16 %v4193
    %v4306 = vunpack.c.h.bf16 %v4193
    %v4307 = vunpack.c.l.bf16 %v4194
    %v4308 = vunpack.c.h.bf16 %v4194
    %v4309 = vunpack.c.l.bf16 %v4195
    %v4310 = vunpack.c.h.bf16 %v4195
    %v4311 = vunpack.c.l.bf16 %v4196
    %v4312 = vunpack.c.h.bf16 %v4196
    %v4313 = vunpack.c.l.bf16 %v4197
    %v4314 = vunpack.c.h.bf16 %v4197
    %v4315 = vunpack.c.l.bf16 %v4198
    %v4316 = vunpack.c.h.bf16 %v4198
    %v4317 = vunpack.c.l.bf16 %v4199
    %v4318 = vunpack.c.h.bf16 %v4199
    %v4319 = vunpack.c.l.bf16 %v4200
    %v4320 = vunpack.c.h.bf16 %v4200
    %v4321 = vunpack.c.l.bf16 %v4201
    %v4322 = vunpack.c.h.bf16 %v4201
    %v4323 = vunpack.c.l.bf16 %v4202
    %v4324 = vunpack.c.h.bf16 %v4202
    %v4325 = vunpack.c.l.bf16 %v4203
    %v4326 = vunpack.c.h.bf16 %v4203
    %v4327 = vunpack.c.l.bf16 %v4204
    %v4328 = vunpack.c.h.bf16 %v4204
    %v4329 = vunpack.c.l.bf16 %v4205
    %v4330 = vunpack.c.h.bf16 %v4205
    %v4331 = vunpack.c.l.bf16 %v4206
    %v4332 = vunpack.c.h.bf16 %v4206
    %v4333 = vunpack.c.l.bf16 %v4207
    %v4334 = vunpack.c.h.bf16 %v4207
    %v4335 = vunpack.c.l.bf16 %v4208
    %v4336 = vunpack.c.h.bf16 %v4208
    %v4337 = vadd.f32 %v4209, %v4210
    %v4338 = vadd.f32 %v4337, %v4211
    %v4339 = vadd.f32 %v4338, %v4212
    %4340 = vadd.xlane.f32.xlu0 %v4339
    %v4341 = vpop.xlane.xlu0 %4340
    %v4342 = vadd.f32 %v4213, %v4214
    %v4343 = vadd.f32 %v4342, %v4215
    %v4344 = vadd.f32 %v4343, %v4216
    %4345 = vadd.xlane.f32.xlu0 %v4344
    %v4346 = vpop.xlane.xlu0 %4345
    %v4347 = vadd.f32 %v4217, %v4218
    %v4348 = vadd.f32 %v4347, %v4219
    %v4349 = vadd.f32 %v4348, %v4220
    %4350 = vadd.xlane.f32.xlu0 %v4349
    %v4351 = vpop.xlane.xlu0 %4350
    %v4352 = vadd.f32 %v4221, %v4222
    %v4353 = vadd.f32 %v4352, %v4223
    %v4354 = vadd.f32 %v4353, %v4224
    %4355 = vadd.xlane.f32.xlu0 %v4354
    %v4356 = vpop.xlane.xlu0 %4355
    %v4357 = vadd.f32 %v4225, %v4226
    %v4358 = vadd.f32 %v4357, %v4227
    %v4359 = vadd.f32 %v4358, %v4228
    %4360 = vadd.xlane.f32.xlu0 %v4359
    %v4361 = vpop.xlane.xlu0 %4360
    %v4362 = vadd.f32 %v4229, %v4230
    %v4363 = vadd.f32 %v4362, %v4231
    %v4364 = vadd.f32 %v4363, %v4232
    %4365 = vadd.xlane.f32.xlu0 %v4364
    %v4366 = vpop.xlane.xlu0 %4365
    %v4367 = vadd.f32 %v4233, %v4234
    %v4368 = vadd.f32 %v4367, %v4235
    %v4369 = vadd.f32 %v4368, %v4236
    %4370 = vadd.xlane.f32.xlu0 %v4369
    %v4371 = vpop.xlane.xlu0 %4370
    %v4372 = vadd.f32 %v4237, %v4238
    %v4373 = vadd.f32 %v4372, %v4239
    %v4374 = vadd.f32 %v4373, %v4240
    %4375 = vadd.xlane.f32.xlu0 %v4374
    %v4376 = vpop.xlane.xlu0 %4375
    %v4377 = vadd.f32 %v4241, %v4242
    %v4378 = vadd.f32 %v4377, %v4243
    %v4379 = vadd.f32 %v4378, %v4244
    %4380 = vadd.xlane.f32.xlu0 %v4379
    %v4381 = vpop.xlane.xlu0 %4380
    %v4382 = vadd.f32 %v4245, %v4246
    %v4383 = vadd.f32 %v4382, %v4247
    %v4384 = vadd.f32 %v4383, %v4248
    %4385 = vadd.xlane.f32.xlu0 %v4384
    %v4386 = vpop.xlane.xlu0 %4385
    %v4387 = vadd.f32 %v4249, %v4250
    %v4388 = vadd.f32 %v4387, %v4251
    %v4389 = vadd.f32 %v4388, %v4252
    %4390 = vadd.xlane.f32.xlu0 %v4389
    %v4391 = vpop.xlane.xlu0 %4390
    %v4392 = vadd.f32 %v4253, %v4254
    %v4393 = vadd.f32 %v4392, %v4255
    %v4394 = vadd.f32 %v4393, %v4256
    %4395 = vadd.xlane.f32.xlu0 %v4394
    %v4396 = vpop.xlane.xlu0 %4395
    %v4397 = vadd.f32 %v4257, %v4258
    %v4398 = vadd.f32 %v4397, %v4259
    %v4399 = vadd.f32 %v4398, %v4260
    %4400 = vadd.xlane.f32.xlu0 %v4399
    %v4401 = vpop.xlane.xlu0 %4400
    %v4402 = vadd.f32 %v4261, %v4262
    %v4403 = vadd.f32 %v4402, %v4263
    %v4404 = vadd.f32 %v4403, %v4264
    %4405 = vadd.xlane.f32.xlu0 %v4404
    %v4406 = vpop.xlane.xlu0 %4405
    %v4407 = vadd.f32 %v4265, %v4266
    %v4408 = vadd.f32 %v4407, %v4267
    %v4409 = vadd.f32 %v4408, %v4268
    %4410 = vadd.xlane.f32.xlu0 %v4409
    %v4411 = vpop.xlane.xlu0 %4410
    %v4412 = vadd.f32 %v4269, %v4270
    %v4413 = vadd.f32 %v4412, %v4271
    %v4414 = vadd.f32 %v4413, %v4272
    %4415 = vadd.xlane.f32.xlu0 %v4414
    %v4416 = vpop.xlane.xlu0 %4415
    %v4417 = vadd.f32 %v4273, %v4274
    %v4418 = vadd.f32 %v4417, %v4275
    %v4419 = vadd.f32 %v4418, %v4276
    %4420 = vadd.xlane.f32.xlu0 %v4419
    %v4421 = vpop.xlane.xlu0 %4420
    %v4422 = vadd.f32 %v4277, %v4278
    %v4423 = vadd.f32 %v4422, %v4279
    %v4424 = vadd.f32 %v4423, %v4280
    %4425 = vadd.xlane.f32.xlu0 %v4424
    %v4426 = vpop.xlane.xlu0 %4425
    %v4427 = vadd.f32 %v4281, %v4282
    %v4428 = vadd.f32 %v4427, %v4283
    %v4429 = vadd.f32 %v4428, %v4284
    %4430 = vadd.xlane.f32.xlu0 %v4429
    %v4431 = vpop.xlane.xlu0 %4430
    %v4432 = vadd.f32 %v4285, %v4286
    %v4433 = vadd.f32 %v4432, %v4287
    %v4434 = vadd.f32 %v4433, %v4288
    %4435 = vadd.xlane.f32.xlu0 %v4434
    %v4436 = vpop.xlane.xlu0 %4435
    %v4437 = vadd.f32 %v4289, %v4290
    %v4438 = vadd.f32 %v4437, %v4291
    %v4439 = vadd.f32 %v4438, %v4292
    %4440 = vadd.xlane.f32.xlu0 %v4439
    %v4441 = vpop.xlane.xlu0 %4440
    %v4442 = vadd.f32 %v4293, %v4294
    %v4443 = vadd.f32 %v4442, %v4295
    %v4444 = vadd.f32 %v4443, %v4296
    %4445 = vadd.xlane.f32.xlu0 %v4444
    %v4446 = vpop.xlane.xlu0 %4445
    %v4447 = vadd.f32 %v4297, %v4298
    %v4448 = vadd.f32 %v4447, %v4299
    %v4449 = vadd.f32 %v4448, %v4300
    %4450 = vadd.xlane.f32.xlu0 %v4449
    %v4451 = vpop.xlane.xlu0 %4450
    %v4452 = vadd.f32 %v4301, %v4302
    %v4453 = vadd.f32 %v4452, %v4303
    %v4454 = vadd.f32 %v4453, %v4304
    %4455 = vadd.xlane.f32.xlu0 %v4454
    %v4456 = vpop.xlane.xlu0 %4455
    %v4457 = vadd.f32 %v4305, %v4306
    %v4458 = vadd.f32 %v4457, %v4307
    %v4459 = vadd.f32 %v4458, %v4308
    %4460 = vadd.xlane.f32.xlu0 %v4459
    %v4461 = vpop.xlane.xlu0 %4460
    %v4462 = vadd.f32 %v4309, %v4310
    %v4463 = vadd.f32 %v4462, %v4311
    %v4464 = vadd.f32 %v4463, %v4312
    %4465 = vadd.xlane.f32.xlu0 %v4464
    %v4466 = vpop.xlane.xlu0 %4465
    %v4467 = vadd.f32 %v4313, %v4314
    %v4468 = vadd.f32 %v4467, %v4315
    %v4469 = vadd.f32 %v4468, %v4316
    %4470 = vadd.xlane.f32.xlu0 %v4469
    %v4471 = vpop.xlane.xlu0 %4470
    %v4472 = vadd.f32 %v4317, %v4318
    %v4473 = vadd.f32 %v4472, %v4319
    %v4474 = vadd.f32 %v4473, %v4320
    %4475 = vadd.xlane.f32.xlu0 %v4474
    %v4476 = vpop.xlane.xlu0 %4475
    %v4477 = vadd.f32 %v4321, %v4322
    %v4478 = vadd.f32 %v4477, %v4323
    %v4479 = vadd.f32 %v4478, %v4324
    %4480 = vadd.xlane.f32.xlu0 %v4479
    %v4481 = vpop.xlane.xlu0 %4480
    %v4482 = vadd.f32 %v4325, %v4326
    %v4483 = vadd.f32 %v4482, %v4327
    %v4484 = vadd.f32 %v4483, %v4328
    %4485 = vadd.xlane.f32.xlu0 %v4484
    %v4486 = vpop.xlane.xlu0 %4485
    %v4487 = vadd.f32 %v4329, %v4330
    %v4488 = vadd.f32 %v4487, %v4331
    %v4489 = vadd.f32 %v4488, %v4332
    %4490 = vadd.xlane.f32.xlu0 %v4489
    %v4491 = vpop.xlane.xlu0 %4490
    %v4492 = vadd.f32 %v4333, %v4334
    %v4493 = vadd.f32 %v4492, %v4335
    %v4494 = vadd.f32 %v4493, %v4336
    %4495 = vadd.xlane.f32.xlu0 %v4494
    %v4496 = vpop.xlane.xlu0 %4495
    %v4497 = vrcp.pop %v4341
    %v4498 = vrcp.pop %v4346
    %v4499 = vrcp.pop %v4351
    %v4500 = vrcp.pop %v4356
    %v4501 = vrcp.pop %v4361
    %v4502 = vrcp.pop %v4366
    %v4503 = vrcp.pop %v4371
    %v4504 = vrcp.pop %v4376
    %v4505 = vrcp.pop %v4381
    %v4506 = vrcp.pop %v4386
    %v4507 = vrcp.pop %v4391
    %v4508 = vrcp.pop %v4396
    %v4509 = vrcp.pop %v4401
    %v4510 = vrcp.pop %v4406
    %v4511 = vrcp.pop %v4411
    %v4512 = vrcp.pop %v4416
    %v4513 = vrcp.pop %v4421
    %v4514 = vrcp.pop %v4426
    %v4515 = vrcp.pop %v4431
    %v4516 = vrcp.pop %v4436
    %v4517 = vrcp.pop %v4441
    %v4518 = vrcp.pop %v4446
    %v4519 = vrcp.pop %v4451
    %v4520 = vrcp.pop %v4456
    %v4521 = vrcp.pop %v4461
    %v4522 = vrcp.pop %v4466
    %v4523 = vrcp.pop %v4471
    %v4524 = vrcp.pop %v4476
    %v4525 = vrcp.pop %v4481
    %v4526 = vrcp.pop %v4486
    %v4527 = vrcp.pop %v4491
    %v4528 = vrcp.pop %v4496
    %v4529 = vmul.f32 %v4209, %v4497
    %v4530 = vmul.f32 %v4210, %v4497
    %v4531 = vmul.f32 %v4211, %v4497
    %v4532 = vmul.f32 %v4212, %v4497
    %v4533 = vmul.f32 %v4213, %v4498
    %v4534 = vmul.f32 %v4214, %v4498
    %v4535 = vmul.f32 %v4215, %v4498
    %v4536 = vmul.f32 %v4216, %v4498
    %v4537 = vmul.f32 %v4217, %v4499
    %v4538 = vmul.f32 %v4218, %v4499
    %v4539 = vmul.f32 %v4219, %v4499
    %v4540 = vmul.f32 %v4220, %v4499
    %v4541 = vmul.f32 %v4221, %v4500
    %v4542 = vmul.f32 %v4222, %v4500
    %v4543 = vmul.f32 %v4223, %v4500
    %v4544 = vmul.f32 %v4224, %v4500
    %v4545 = vmul.f32 %v4225, %v4501
    %v4546 = vmul.f32 %v4226, %v4501
    %v4547 = vmul.f32 %v4227, %v4501
    %v4548 = vmul.f32 %v4228, %v4501
    %v4549 = vmul.f32 %v4229, %v4502
    %v4550 = vmul.f32 %v4230, %v4502
    %v4551 = vmul.f32 %v4231, %v4502
    %v4552 = vmul.f32 %v4232, %v4502
    %v4553 = vmul.f32 %v4233, %v4503
    %v4554 = vmul.f32 %v4234, %v4503
    %v4555 = vmul.f32 %v4235, %v4503
    %v4556 = vmul.f32 %v4236, %v4503
    %v4557 = vmul.f32 %v4237, %v4504
    %v4558 = vmul.f32 %v4238, %v4504
    %v4559 = vmul.f32 %v4239, %v4504
    %v4560 = vmul.f32 %v4240, %v4504
    %v4561 = vmul.f32 %v4241, %v4505
    %v4562 = vmul.f32 %v4242, %v4505
    %v4563 = vmul.f32 %v4243, %v4505
    %v4564 = vmul.f32 %v4244, %v4505
    %v4565 = vmul.f32 %v4245, %v4506
    %v4566 = vmul.f32 %v4246, %v4506
    %v4567 = vmul.f32 %v4247, %v4506
    %v4568 = vmul.f32 %v4248, %v4506
    %v4569 = vmul.f32 %v4249, %v4507
    %v4570 = vmul.f32 %v4250, %v4507
    %v4571 = vmul.f32 %v4251, %v4507
    %v4572 = vmul.f32 %v4252, %v4507
    %v4573 = vmul.f32 %v4253, %v4508
    %v4574 = vmul.f32 %v4254, %v4508
    %v4575 = vmul.f32 %v4255, %v4508
    %v4576 = vmul.f32 %v4256, %v4508
    %v4577 = vmul.f32 %v4257, %v4509
    %v4578 = vmul.f32 %v4258, %v4509
    %v4579 = vmul.f32 %v4259, %v4509
    %v4580 = vmul.f32 %v4260, %v4509
    %v4581 = vmul.f32 %v4261, %v4510
    %v4582 = vmul.f32 %v4262, %v4510
    %v4583 = vmul.f32 %v4263, %v4510
    %v4584 = vmul.f32 %v4264, %v4510
    %v4585 = vmul.f32 %v4265, %v4511
    %v4586 = vmul.f32 %v4266, %v4511
    %v4587 = vmul.f32 %v4267, %v4511
    %v4588 = vmul.f32 %v4268, %v4511
    %v4589 = vmul.f32 %v4269, %v4512
    %v4590 = vmul.f32 %v4270, %v4512
    %v4591 = vmul.f32 %v4271, %v4512
    %v4592 = vmul.f32 %v4272, %v4512
    %v4593 = vmul.f32 %v4273, %v4513
    %v4594 = vmul.f32 %v4274, %v4513
    %v4595 = vmul.f32 %v4275, %v4513
    %v4596 = vmul.f32 %v4276, %v4513
    %v4597 = vmul.f32 %v4277, %v4514
    %v4598 = vmul.f32 %v4278, %v4514
    %v4599 = vmul.f32 %v4279, %v4514
    %v4600 = vmul.f32 %v4280, %v4514
    %v4601 = vmul.f32 %v4281, %v4515
    %v4602 = vmul.f32 %v4282, %v4515
    %v4603 = vmul.f32 %v4283, %v4515
    %v4604 = vmul.f32 %v4284, %v4515
    %v4605 = vmul.f32 %v4285, %v4516
    %v4606 = vmul.f32 %v4286, %v4516
    %v4607 = vmul.f32 %v4287, %v4516
    %v4608 = vmul.f32 %v4288, %v4516
    %v4609 = vmul.f32 %v4289, %v4517
    %v4610 = vmul.f32 %v4290, %v4517
    %v4611 = vmul.f32 %v4291, %v4517
    %v4612 = vmul.f32 %v4292, %v4517
    %v4613 = vmul.f32 %v4293, %v4518
    %v4614 = vmul.f32 %v4294, %v4518
    %v4615 = vmul.f32 %v4295, %v4518
    %v4616 = vmul.f32 %v4296, %v4518
    %v4617 = vmul.f32 %v4297, %v4519
    %v4618 = vmul.f32 %v4298, %v4519
    %v4619 = vmul.f32 %v4299, %v4519
    %v4620 = vmul.f32 %v4300, %v4519
    %v4621 = vmul.f32 %v4301, %v4520
    %v4622 = vmul.f32 %v4302, %v4520
    %v4623 = vmul.f32 %v4303, %v4520
    %v4624 = vmul.f32 %v4304, %v4520
    %v4625 = vmul.f32 %v4305, %v4521
    %v4626 = vmul.f32 %v4306, %v4521
    %v4627 = vmul.f32 %v4307, %v4521
    %v4628 = vmul.f32 %v4308, %v4521
    %v4629 = vmul.f32 %v4309, %v4522
    %v4630 = vmul.f32 %v4310, %v4522
    %v4631 = vmul.f32 %v4311, %v4522
    %v4632 = vmul.f32 %v4312, %v4522
    %v4633 = vmul.f32 %v4313, %v4523
    %v4634 = vmul.f32 %v4314, %v4523
    %v4635 = vmul.f32 %v4315, %v4523
    %v4636 = vmul.f32 %v4316, %v4523
    %v4637 = vmul.f32 %v4317, %v4524
    %v4638 = vmul.f32 %v4318, %v4524
    %v4639 = vmul.f32 %v4319, %v4524
    %v4640 = vmul.f32 %v4320, %v4524
    %v4641 = vmul.f32 %v4321, %v4525
    %v4642 = vmul.f32 %v4322, %v4525
    %v4643 = vmul.f32 %v4323, %v4525
    %v4644 = vmul.f32 %v4324, %v4525
    %v4645 = vmul.f32 %v4325, %v4526
    %v4646 = vmul.f32 %v4326, %v4526
    %v4647 = vmul.f32 %v4327, %v4526
    %v4648 = vmul.f32 %v4328, %v4526
    %v4649 = vmul.f32 %v4329, %v4527
    %v4650 = vmul.f32 %v4330, %v4527
    %v4651 = vmul.f32 %v4331, %v4527
    %v4652 = vmul.f32 %v4332, %v4527
    %v4653 = vmul.f32 %v4333, %v4528
    %v4654 = vmul.f32 %v4334, %v4528
    %v4655 = vmul.f32 %v4335, %v4528
    %v4656 = vmul.f32 %v4336, %v4528
    %v4657 = vpack.c.bf16 %v4533, %v4529
    %v4658 = vpack.c.bf16 %v4534, %v4530
    %v4659 = vpack.c.bf16 %v4535, %v4531
    %v4660 = vpack.c.bf16 %v4536, %v4532
    %v4661 = vpack.c.bf16 %v4541, %v4537
    %v4662 = vpack.c.bf16 %v4542, %v4538
    %v4663 = vpack.c.bf16 %v4543, %v4539
    %v4664 = vpack.c.bf16 %v4544, %v4540
    %v4665 = vpack.c.bf16 %v4549, %v4545
    %v4666 = vpack.c.bf16 %v4550, %v4546
    %v4667 = vpack.c.bf16 %v4551, %v4547
    %v4668 = vpack.c.bf16 %v4552, %v4548
    %v4669 = vpack.c.bf16 %v4557, %v4553
    %v4670 = vpack.c.bf16 %v4558, %v4554
    %v4671 = vpack.c.bf16 %v4559, %v4555
    %v4672 = vpack.c.bf16 %v4560, %v4556
    %v4673 = vpack.c.bf16 %v4565, %v4561
    %v4674 = vpack.c.bf16 %v4566, %v4562
    %v4675 = vpack.c.bf16 %v4567, %v4563
    %v4676 = vpack.c.bf16 %v4568, %v4564
    %v4677 = vpack.c.bf16 %v4573, %v4569
    %v4678 = vpack.c.bf16 %v4574, %v4570
    %v4679 = vpack.c.bf16 %v4575, %v4571
    %v4680 = vpack.c.bf16 %v4576, %v4572
    %v4681 = vpack.c.bf16 %v4581, %v4577
    %v4682 = vpack.c.bf16 %v4582, %v4578
    %v4683 = vpack.c.bf16 %v4583, %v4579
    %v4684 = vpack.c.bf16 %v4584, %v4580
    %v4685 = vpack.c.bf16 %v4589, %v4585
    %v4686 = vpack.c.bf16 %v4590, %v4586
    %v4687 = vpack.c.bf16 %v4591, %v4587
    %v4688 = vpack.c.bf16 %v4592, %v4588
    %v4689 = vpack.c.bf16 %v4597, %v4593
    %v4690 = vpack.c.bf16 %v4598, %v4594
    %v4691 = vpack.c.bf16 %v4599, %v4595
    %v4692 = vpack.c.bf16 %v4600, %v4596
    %v4693 = vpack.c.bf16 %v4605, %v4601
    %v4694 = vpack.c.bf16 %v4606, %v4602
    %v4695 = vpack.c.bf16 %v4607, %v4603
    %v4696 = vpack.c.bf16 %v4608, %v4604
    %v4697 = vpack.c.bf16 %v4613, %v4609
    %v4698 = vpack.c.bf16 %v4614, %v4610
    %v4699 = vpack.c.bf16 %v4615, %v4611
    %v4700 = vpack.c.bf16 %v4616, %v4612
    %v4701 = vpack.c.bf16 %v4621, %v4617
    %v4702 = vpack.c.bf16 %v4622, %v4618
    %v4703 = vpack.c.bf16 %v4623, %v4619
    %v4704 = vpack.c.bf16 %v4624, %v4620
    %v4705 = vpack.c.bf16 %v4629, %v4625
    %v4706 = vpack.c.bf16 %v4630, %v4626
    %v4707 = vpack.c.bf16 %v4631, %v4627
    %v4708 = vpack.c.bf16 %v4632, %v4628
    %v4709 = vpack.c.bf16 %v4637, %v4633
    %v4710 = vpack.c.bf16 %v4638, %v4634
    %v4711 = vpack.c.bf16 %v4639, %v4635
    %v4712 = vpack.c.bf16 %v4640, %v4636
    %v4713 = vpack.c.bf16 %v4645, %v4641
    %v4714 = vpack.c.bf16 %v4646, %v4642
    %v4715 = vpack.c.bf16 %v4647, %v4643
    %v4716 = vpack.c.bf16 %v4648, %v4644
    %v4717 = vpack.c.bf16 %v4653, %v4649
    %v4718 = vpack.c.bf16 %v4654, %v4650
    %v4719 = vpack.c.bf16 %v4655, %v4651
    %v4720 = vpack.c.bf16 %v4656, %v4652
    %v4785 = vunpack.c.l.b16 %v4657
    %v4786 = vunpack.c.l.b16 %v4658
    %v4787 = vunpack.c.l.b16 %v4659
    %v4788 = vunpack.c.l.b16 %v4660
    %v4789 = vunpack.c.h.b16 %v4657
    %v4790 = vunpack.c.h.b16 %v4658
    %v4791 = vunpack.c.h.b16 %v4659
    %v4792 = vunpack.c.h.b16 %v4660
    %v4793 = vunpack.c.l.b16 %v4661
    %v4794 = vunpack.c.l.b16 %v4662
    %v4795 = vunpack.c.l.b16 %v4663
    %v4796 = vunpack.c.l.b16 %v4664
    %v4797 = vunpack.c.h.b16 %v4661
    %v4798 = vunpack.c.h.b16 %v4662
    %v4799 = vunpack.c.h.b16 %v4663
    %v4800 = vunpack.c.h.b16 %v4664
    %v4801 = vunpack.c.l.b16 %v4665
    %v4802 = vunpack.c.l.b16 %v4666
    %v4803 = vunpack.c.l.b16 %v4667
    %v4804 = vunpack.c.l.b16 %v4668
    %v4805 = vunpack.c.h.b16 %v4665
    %v4806 = vunpack.c.h.b16 %v4666
    %v4807 = vunpack.c.h.b16 %v4667
    %v4808 = vunpack.c.h.b16 %v4668
    %v4809 = vunpack.c.l.b16 %v4669
    %v4810 = vunpack.c.l.b16 %v4670
    %v4811 = vunpack.c.l.b16 %v4671
    %v4812 = vunpack.c.l.b16 %v4672
    %v4813 = vunpack.c.h.b16 %v4669
    %v4814 = vunpack.c.h.b16 %v4670
    %v4815 = vunpack.c.h.b16 %v4671
    %v4816 = vunpack.c.h.b16 %v4672
    %v4817 = vunpack.c.l.b16 %v4673
    %v4818 = vunpack.c.l.b16 %v4674
    %v4819 = vunpack.c.l.b16 %v4675
    %v4820 = vunpack.c.l.b16 %v4676
    %v4821 = vunpack.c.h.b16 %v4673
    %v4822 = vunpack.c.h.b16 %v4674
    %v4823 = vunpack.c.h.b16 %v4675
    %v4824 = vunpack.c.h.b16 %v4676
    %v4825 = vunpack.c.l.b16 %v4677
    %v4826 = vunpack.c.l.b16 %v4678
    %v4827 = vunpack.c.l.b16 %v4679
    %v4828 = vunpack.c.l.b16 %v4680
    %v4829 = vunpack.c.h.b16 %v4677
    %v4830 = vunpack.c.h.b16 %v4678
    %v4831 = vunpack.c.h.b16 %v4679
    %v4832 = vunpack.c.h.b16 %v4680
    %v4833 = vunpack.c.l.b16 %v4681
    %v4834 = vunpack.c.l.b16 %v4682
    %v4835 = vunpack.c.l.b16 %v4683
    %v4836 = vunpack.c.l.b16 %v4684
    %v4837 = vunpack.c.h.b16 %v4681
    %v4838 = vunpack.c.h.b16 %v4682
    %v4839 = vunpack.c.h.b16 %v4683
    %v4840 = vunpack.c.h.b16 %v4684
    %v4841 = vunpack.c.l.b16 %v4685
    %v4842 = vunpack.c.l.b16 %v4686
    %v4843 = vunpack.c.l.b16 %v4687
    %v4844 = vunpack.c.l.b16 %v4688
    %v4845 = vunpack.c.h.b16 %v4685
    %v4846 = vunpack.c.h.b16 %v4686
    %v4847 = vunpack.c.h.b16 %v4687
    %v4848 = vunpack.c.h.b16 %v4688
    %v4849 = vunpack.c.l.b16 %v4689
    %v4850 = vunpack.c.l.b16 %v4690
    %v4851 = vunpack.c.l.b16 %v4691
    %v4852 = vunpack.c.l.b16 %v4692
    %v4853 = vunpack.c.h.b16 %v4689
    %v4854 = vunpack.c.h.b16 %v4690
    %v4855 = vunpack.c.h.b16 %v4691
    %v4856 = vunpack.c.h.b16 %v4692
    %v4857 = vunpack.c.l.b16 %v4693
    %v4858 = vunpack.c.l.b16 %v4694
    %v4859 = vunpack.c.l.b16 %v4695
    %v4860 = vunpack.c.l.b16 %v4696
    %v4861 = vunpack.c.h.b16 %v4693
    %v4862 = vunpack.c.h.b16 %v4694
    %v4863 = vunpack.c.h.b16 %v4695
    %v4864 = vunpack.c.h.b16 %v4696
    %v4865 = vunpack.c.l.b16 %v4697
    %v4866 = vunpack.c.l.b16 %v4698
    %v4867 = vunpack.c.l.b16 %v4699
    %v4868 = vunpack.c.l.b16 %v4700
    %v4869 = vunpack.c.h.b16 %v4697
    %v4870 = vunpack.c.h.b16 %v4698
    %v4871 = vunpack.c.h.b16 %v4699
    %v4872 = vunpack.c.h.b16 %v4700
    %v4873 = vunpack.c.l.b16 %v4701
    %v4874 = vunpack.c.l.b16 %v4702
    %v4875 = vunpack.c.l.b16 %v4703
    %v4876 = vunpack.c.l.b16 %v4704
    %v4877 = vunpack.c.h.b16 %v4701
    %v4878 = vunpack.c.h.b16 %v4702
    %v4879 = vunpack.c.h.b16 %v4703
    %v4880 = vunpack.c.h.b16 %v4704
    %v4881 = vunpack.c.l.b16 %v4705
    %v4882 = vunpack.c.l.b16 %v4706
    %v4883 = vunpack.c.l.b16 %v4707
    %v4884 = vunpack.c.l.b16 %v4708
    %v4885 = vunpack.c.h.b16 %v4705
    %v4886 = vunpack.c.h.b16 %v4706
    %v4887 = vunpack.c.h.b16 %v4707
    %v4888 = vunpack.c.h.b16 %v4708
    %v4889 = vunpack.c.l.b16 %v4709
    %v4890 = vunpack.c.l.b16 %v4710
    %v4891 = vunpack.c.l.b16 %v4711
    %v4892 = vunpack.c.l.b16 %v4712
    %v4893 = vunpack.c.h.b16 %v4709
    %v4894 = vunpack.c.h.b16 %v4710
    %v4895 = vunpack.c.h.b16 %v4711
    %v4896 = vunpack.c.h.b16 %v4712
    %v4897 = vunpack.c.l.b16 %v4713
    %v4898 = vunpack.c.l.b16 %v4714
    %v4899 = vunpack.c.l.b16 %v4715
    %v4900 = vunpack.c.l.b16 %v4716
    %v4901 = vunpack.c.h.b16 %v4713
    %v4902 = vunpack.c.h.b16 %v4714
    %v4903 = vunpack.c.h.b16 %v4715
    %v4904 = vunpack.c.h.b16 %v4716
    %v4905 = vunpack.c.l.b16 %v4717
    %v4906 = vunpack.c.l.b16 %v4718
    %v4907 = vunpack.c.l.b16 %v4719
    %v4908 = vunpack.c.l.b16 %v4720
    %v4909 = vunpack.c.h.b16 %v4717
    %v4910 = vunpack.c.h.b16 %v4718
    %v4911 = vunpack.c.h.b16 %v4719
    %v4912 = vunpack.c.h.b16 %v4720
    %v4913 = vpack.c.b16 %v4786, %v4785
    %v4914 = vpack.c.b16 %v4788, %v4787
    %v4915 = vpack.c.b16 %v4790, %v4789
    %v4916 = vpack.c.b16 %v4792, %v4791
    %v4917 = vpack.c.b16 %v4794, %v4793
    %v4918 = vpack.c.b16 %v4796, %v4795
    %v4919 = vpack.c.b16 %v4798, %v4797
    %v4920 = vpack.c.b16 %v4800, %v4799
    %v4921 = vpack.c.b16 %v4802, %v4801
    %v4922 = vpack.c.b16 %v4804, %v4803
    %v4923 = vpack.c.b16 %v4806, %v4805
    %v4924 = vpack.c.b16 %v4808, %v4807
    %v4925 = vpack.c.b16 %v4810, %v4809
    %v4926 = vpack.c.b16 %v4812, %v4811
    %v4927 = vpack.c.b16 %v4814, %v4813
    %v4928 = vpack.c.b16 %v4816, %v4815
    %v4929 = vpack.c.b16 %v4818, %v4817
    %v4930 = vpack.c.b16 %v4820, %v4819
    %v4931 = vpack.c.b16 %v4822, %v4821
    %v4932 = vpack.c.b16 %v4824, %v4823
    %v4933 = vpack.c.b16 %v4826, %v4825
    %v4934 = vpack.c.b16 %v4828, %v4827
    %v4935 = vpack.c.b16 %v4830, %v4829
    %v4936 = vpack.c.b16 %v4832, %v4831
    %v4937 = vpack.c.b16 %v4834, %v4833
    %v4938 = vpack.c.b16 %v4836, %v4835
    %v4939 = vpack.c.b16 %v4838, %v4837
    %v4940 = vpack.c.b16 %v4840, %v4839
    %v4941 = vpack.c.b16 %v4842, %v4841
    %v4942 = vpack.c.b16 %v4844, %v4843
    %v4943 = vpack.c.b16 %v4846, %v4845
    %v4944 = vpack.c.b16 %v4848, %v4847
    %v4945 = vpack.c.b16 %v4850, %v4849
    %v4946 = vpack.c.b16 %v4852, %v4851
    %v4947 = vpack.c.b16 %v4854, %v4853
    %v4948 = vpack.c.b16 %v4856, %v4855
    %v4949 = vpack.c.b16 %v4858, %v4857
    %v4950 = vpack.c.b16 %v4860, %v4859
    %v4951 = vpack.c.b16 %v4862, %v4861
    %v4952 = vpack.c.b16 %v4864, %v4863
    %v4953 = vpack.c.b16 %v4866, %v4865
    %v4954 = vpack.c.b16 %v4868, %v4867
    %v4955 = vpack.c.b16 %v4870, %v4869
    %v4956 = vpack.c.b16 %v4872, %v4871
    %v4957 = vpack.c.b16 %v4874, %v4873
    %v4958 = vpack.c.b16 %v4876, %v4875
    %v4959 = vpack.c.b16 %v4878, %v4877
    %v4960 = vpack.c.b16 %v4880, %v4879
    %v4961 = vpack.c.b16 %v4882, %v4881
    %v4962 = vpack.c.b16 %v4884, %v4883
    %v4963 = vpack.c.b16 %v4886, %v4885
    %v4964 = vpack.c.b16 %v4888, %v4887
    %v4965 = vpack.c.b16 %v4890, %v4889
    %v4966 = vpack.c.b16 %v4892, %v4891
    %v4967 = vpack.c.b16 %v4894, %v4893
    %v4968 = vpack.c.b16 %v4896, %v4895
    %v4969 = vpack.c.b16 %v4898, %v4897
    %v4970 = vpack.c.b16 %v4900, %v4899
    %v4971 = vpack.c.b16 %v4902, %v4901
    %v4972 = vpack.c.b16 %v4904, %v4903
    %v4973 = vpack.c.b16 %v4906, %v4905
    %v4974 = vpack.c.b16 %v4908, %v4907
    %v4975 = vpack.c.b16 %v4910, %v4909
    %v4976 = vpack.c.b16 %v4912, %v4911
    %5041 = vst [vmem:[#allocation11] sm:$0xff] %v4913
    %5042 = vst [vmem:[#allocation11 + $0x8] sm:$0xff] %v4914
    %5043 = vst [vmem:[#allocation11 + $0x10] sm:$0xff] %v4915
    %5044 = vst [vmem:[#allocation11 + $0x18] sm:$0xff] %v4916
    %5045 = vst [vmem:[#allocation11 + $0x20] sm:$0xff] %v4917
    %5046 = vst [vmem:[#allocation11 + $0x28] sm:$0xff] %v4918
    %5047 = vst [vmem:[#allocation11 + $0x30] sm:$0xff] %v4919
    %5048 = vst [vmem:[#allocation11 + $0x38] sm:$0xff] %v4920
    %5049 = vst [vmem:[#allocation11 + $0x40] sm:$0xff] %v4921
    %5050 = vst [vmem:[#allocation11 + $0x48] sm:$0xff] %v4922
    %5051 = vst [vmem:[#allocation11 + $0x50] sm:$0xff] %v4923
    %5052 = vst [vmem:[#allocation11 + $0x58] sm:$0xff] %v4924
    %5053 = vst [vmem:[#allocation11 + $0x60] sm:$0xff] %v4925
    %5054 = vst [vmem:[#allocation11 + $0x68] sm:$0xff] %v4926
    %5055 = vst [vmem:[#allocation11 + $0x70] sm:$0xff] %v4927
    %5056 = vst [vmem:[#allocation11 + $0x78] sm:$0xff] %v4928
    %5057 = vst [vmem:[#allocation11 + $0x80] sm:$0xff] %v4929
    %5058 = vst [vmem:[#allocation11 + $0x88] sm:$0xff] %v4930
    %5059 = vst [vmem:[#allocation11 + $0x90] sm:$0xff] %v4931
    %5060 = vst [vmem:[#allocation11 + $0x98] sm:$0xff] %v4932
    %5061 = vst [vmem:[#allocation11 + $0xa0] sm:$0xff] %v4933
    %5062 = vst [vmem:[#allocation11 + $0xa8] sm:$0xff] %v4934
    %5063 = vst [vmem:[#allocation11 + $0xb0] sm:$0xff] %v4935
    %5064 = vst [vmem:[#allocation11 + $0xb8] sm:$0xff] %v4936
    %5065 = vst [vmem:[#allocation11 + $0xc0] sm:$0xff] %v4937
    %5066 = vst [vmem:[#allocation11 + $0xc8] sm:$0xff] %v4938
    %5067 = vst [vmem:[#allocation11 + $0xd0] sm:$0xff] %v4939
    %5068 = vst [vmem:[#allocation11 + $0xd8] sm:$0xff] %v4940
    %5069 = vst [vmem:[#allocation11 + $0xe0] sm:$0xff] %v4941
    %5070 = vst [vmem:[#allocation11 + $0xe8] sm:$0xff] %v4942
    %5071 = vst [vmem:[#allocation11 + $0xf0] sm:$0xff] %v4943
    %5072 = vst [vmem:[#allocation11 + $0xf8] sm:$0xff] %v4944
    %5073 = vst [vmem:[#allocation11 + $0x100] sm:$0xff] %v4945
    %5074 = vst [vmem:[#allocation11 + $0x108] sm:$0xff] %v4946
    %5075 = vst [vmem:[#allocation11 + $0x110] sm:$0xff] %v4947
    %5076 = vst [vmem:[#allocation11 + $0x118] sm:$0xff] %v4948
    %5077 = vst [vmem:[#allocation11 + $0x120] sm:$0xff] %v4949
    %5078 = vst [vmem:[#allocation11 + $0x128] sm:$0xff] %v4950
    %5079 = vst [vmem:[#allocation11 + $0x130] sm:$0xff] %v4951
    %5080 = vst [vmem:[#allocation11 + $0x138] sm:$0xff] %v4952
    %5081 = vst [vmem:[#allocation11 + $0x140] sm:$0xff] %v4953
    %5082 = vst [vmem:[#allocation11 + $0x148] sm:$0xff] %v4954
    %5083 = vst [vmem:[#allocation11 + $0x150] sm:$0xff] %v4955
    %5084 = vst [vmem:[#allocation11 + $0x158] sm:$0xff] %v4956
    %5085 = vst [vmem:[#allocation11 + $0x160] sm:$0xff] %v4957
    %5086 = vst [vmem:[#allocation11 + $0x168] sm:$0xff] %v4958
    %5087 = vst [vmem:[#allocation11 + $0x170] sm:$0xff] %v4959
    %5088 = vst [vmem:[#allocation11 + $0x178] sm:$0xff] %v4960
    %5089 = vst [vmem:[#allocation11 + $0x180] sm:$0xff] %v4961
    %5090 = vst [vmem:[#allocation11 + $0x188] sm:$0xff] %v4962
    %5091 = vst [vmem:[#allocation11 + $0x190] sm:$0xff] %v4963
    %5092 = vst [vmem:[#allocation11 + $0x198] sm:$0xff] %v4964
    %5093 = vst [vmem:[#allocation11 + $0x1a0] sm:$0xff] %v4965
    %5094 = vst [vmem:[#allocation11 + $0x1a8] sm:$0xff] %v4966
    %5095 = vst [vmem:[#allocation11 + $0x1b0] sm:$0xff] %v4967
    %5096 = vst [vmem:[#allocation11 + $0x1b8] sm:$0xff] %v4968
    %5097 = vst [vmem:[#allocation11 + $0x1c0] sm:$0xff] %v4969
    %5098 = vst [vmem:[#allocation11 + $0x1c8] sm:$0xff] %v4970
    %5099 = vst [vmem:[#allocation11 + $0x1d0] sm:$0xff] %v4971
    %5100 = vst [vmem:[#allocation11 + $0x1d8] sm:$0xff] %v4972
    %5101 = vst [vmem:[#allocation11 + $0x1e0] sm:$0xff] %v4973
    %5102 = vst [vmem:[#allocation11 + $0x1e8] sm:$0xff] %v4974
    %5103 = vst [vmem:[#allocation11 + $0x1f0] sm:$0xff] %v4975
    %5104 = vst [vmem:[#allocation11 + $0x1f8] sm:$0xff] %v4976
    // Predicated region
    $region58: #{tpu_custom_call.1} parent=1 // pred_check
      _
    $region59: #{tpu_custom_call.1} parent=1 // pred_check_branch
      %5106 = sbr.rel (0) target = $region61
    $region60: #{tpu_custom_call.1} parent=1 // pred_region
      %s5108 = ssub.s32 8192, 8192
      %5109 = vsyncadd [#allocation4], %s5108
      %s5110 = sshll.u32 [#allocation11], 4
      %s5111 = int_to_ptr.vmem [resolvable:$true] %s5110
      %5116 = dma.vmem_to_hbm [thread:$0]  %s5111, 8192, %s9, [#allocation4], 256, 256, 16
    $region61: #{tpu_custom_call.1} parent=1 // pred_fallthru
      _
    // Predicated region
    $region62: #{tpu_custom_call.1} parent=1 // pred_check
      _
    $region63: #{tpu_custom_call.1} parent=1 // pred_check_branch
      %5118 = sbr.rel (0) target = $region65
    $region64: #{tpu_custom_call.1} parent=1 // pred_region
      %5119 = dma.done [#allocation4], 8192
    $region65: #{tpu_custom_call.1} parent=1 // pred_fallthru
      _
    %5120 = vsyncpa [#allocation3], 1
    %5121 = vsyncpa [#allocation6], 1
    %5122 = vsyncpa [#allocation9], 1
    %5123 = vsyncpa [#allocation4], 1

</llo_original>
